<compile_context>
chip_gen: v6e
topology: v6e:2x2x1
jax: 0.10.0
libtpu: 0.0.40
codegen_flags: <defaults>
</compile_context>

<pallas_src>
import functools
import math

import jax
import jax.numpy as jnp
from jax.experimental import pallas as pl
from jax.experimental.pallas import tpu as pltpu


_MXU_BF16 = True  # bf16 matmul operands (full-rate MXU on v5e/v6e/v7x), f32 accumulate


# ---------------------------------------------------------------------------
# Fused forward kernel
# ---------------------------------------------------------------------------

def _dot(a, w):
    if _MXU_BF16:
        a = a.astype(jnp.bfloat16)
        w = w.astype(jnp.bfloat16)
    return jnp.dot(a, w, preferred_element_type=jnp.float32)


def _lin(x, w_ref, b_ref, relu=False):
    y = _dot(x, w_ref[...]) + b_ref[...]          # bias add / ReLU in f32 on the VPU
    if relu:
        y = jnp.maximum(y, 0.0)
    return y


def _paca_fused_kernel(*refs, eps, latent_dim, num_classes):
    (x_ref, t_ref,
     e0w, e0b, e1w, e1b, e2w, e2b,                 # encoder (in -> 256 -> 512 -> 256, ReLU)
     muvar_w, muvar_b,                             # fused fc_mu | fc_logvar  [256, 2L]
     le0w, le0b, le1w, le1b,                       # label_encoder (Q -> 512 -> 256, ReLU)
     lmuvar_w, lmuvar_b,                           # fused label_fc_mu | label_fc_logvar
     ld0w, ld0b, ld1w, ld1b,                       # label_decoder (L -> 256 -> 512, ReLU)
     lcw, lcb,                                     # label_classifier (512 -> Q)
     im0xw, im0zw, im0b, im1w, im1b, im2w, im2b,   # ins_map (first layer split x/z)
     d0w, d0b, d1w, d1b, d2w, d2b, d3w, d3b,       # decoder (L -> 256 -> 512 -> 256 -> in)
     kl_ref, recons_ref, preds_ref, logdens_ref) = refs

    x = x_ref[...]
    t = t_ref[...]
    B = x.shape[0]

    # ---- _encode: encoder MLP + fused mu/logvar head ------------------------
    h = _lin(x, e0w, e0b, relu=True)
    h = _lin(h, e1w, e1b, relu=True)
    h = _lin(h, e2w, e2b, relu=True)
    muvar = _lin(h, muvar_w, muvar_b)
    x_mu, x_logvar = muvar[:, :latent_dim], muvar[:, latent_dim:]

    # ---- _label_encode: label_encoder MLP + fused head ----------------------
    hy = _lin(t, le0w, le0b, relu=True)
    hy = _lin(hy, le1w, le1b, relu=True)
    lmuvar = _lin(hy, lmuvar_w, lmuvar_b)
    y_mu, y_logvar = lmuvar[:, :latent_dim], lmuvar[:, latent_dim:]

    # eval mode: z = mu (no dropout, no reparameterization sampling)
    z_x, z_y = x_mu, y_mu

    # ---- KL divergence (f32 VPU reduction) ----------------------------------
    term = (y_logvar - x_logvar - 1.0
            + jnp.exp(x_logvar - y_logvar)
            + (y_mu - x_mu) ** 2 / (jnp.exp(y_logvar) + eps))
    per_sample = jnp.sum(term, axis=1, keepdims=True)            # [B, 1]
    kl_ref[...] = 0.5 * jnp.sum(per_sample, axis=0, keepdims=True) / B

    # ---- _label_decode: label_classifier(label_decoder(z_y)) ----------------
    hz = _lin(z_y, ld0w, ld0b, relu=True)
    hz = _lin(hz, ld1w, ld1b, relu=True)
    preds_ref[...] = _lin(hz, lcw, lcb)

    # ---- ins_map(cat([x, z_x])) with the concat folded into split weights ----
    hi = jnp.maximum(_dot(x, im0xw[...]) + _dot(z_x, im0zw[...]) + im0b[...], 0.0)
    hi = _lin(hi, im1w, im1b, relu=True)
    z_x = _lin(hi, im2w, im2b, relu=False)

    # ---- _decode -------------------------------------------------------------
    hd = _lin(z_x, d0w, d0b, relu=True)
    hd = _lin(hd, d1w, d1b, relu=True)
    hd = _lin(hd, d2w, d2b, relu=True)
    recons_ref[...] = _lin(hd, d3w, d3b, relu=False)

    # ---- _log_density_proto: N(0, I) base-distribution log prob -------------
    # TODO(synk): CondNAF/CondAF/CondTDist normalizing-flow classes are not defined
    # in the reference source, so only the N(0,I) base log-density is evaluated
    # (pos == neg, matching identity-initialised flows).
    lp = (-0.5 * jnp.sum(z_x * z_x, axis=1, keepdims=True)
          - 0.5 * latent_dim * math.log(2.0 * math.pi))
    logdens_ref[...] = jnp.broadcast_to(lp, (B, num_classes))


# ---------------------------------------------------------------------------
# Parameters (deterministic synthetic init, torch-Linear-like uniform bounds)
# ---------------------------------------------------------------------------

def _init_linear(key, fin, fout):
    kw, kb = jax.random.split(key)
    bound = 1.0 / math.sqrt(fin)
    w = jax.random.uniform(kw, (fin, fout), jnp.float32, -bound, bound)
    b = jax.random.uniform(kb, (1, fout), jnp.float32, -bound, bound)
    return w, b


def _init_mlp(key, dims):
    keys = jax.random.split(key, len(dims) - 1)
    return [_init_linear(k, dims[i], dims[i + 1]) for i, k in enumerate(keys)]


def init_params(key, in_features, num_classes, latent_dim):
    ks = jax.random.split(key, 10)
    params = {
        # MLP(in_features, 256, [256, 512]) -> in -> 256 -> 512 -> 256, ReLU everywhere
        'encoder': _init_mlp(ks[0], [in_features, 256, 512, 256]),
        # fc_mu and fc_logvar fused horizontally: [256, 2*latent]
        'fc_muvar': _init_linear(ks[1], 256, 2 * latent_dim),
        # MLP(num_classes, 256, [512])
        'label_encoder': _init_mlp(ks[3], [num_classes, 512, 256]),
        'label_fc_muvar': _init_linear(ks[4], 256, 2 * latent_dim),
        # MLP(latent, in_features, [256, 512, 256], no output nonlinearity)
        'decoder': _init_mlp(ks[6], [latent_dim, 256, 512, 256, in_features]),
        # MLP(latent, 512, [256])
        'label_decoder': _init_mlp(ks[7], [latent_dim, 256, 512]),
        'label_classifier': _init_linear(ks[8], 512, num_classes),
    }
    # ins_map: MLP(in_features + latent, latent, [256, 256], no output nonlinearity).
    # Split the first-layer weight into the x-part and z-part so the fused kernel
    # computes x@W_x + z@W_z + b (no concat / extra HBM buffer).
    ins = _init_mlp(ks[9], [in_features + latent_dim, 256, 256, latent_dim])
    w0, b0 = ins[0]
    params['ins_map'] = [(w0[:in_features], w0[in_features:], b0)] + ins[1:]
    return params


# ---------------------------------------------------------------------------
# PACA forward (eval mode) — one fused pallas_call + trivial JAX glue
# ---------------------------------------------------------------------------

def paca_forward(params, x, target, eps=1e-8):
    B, in_features = x.shape
    latent_dim = params['fc_muvar'][0].shape[1] // 2
    num_classes = params['label_classifier'][0].shape[1]

    flat = [x, target]
    for w, b in params['encoder']:
        flat += [w, b]
    flat += list(params['fc_muvar'])
    for w, b in params['label_encoder']:
        flat += [w, b]
    flat += list(params['label_fc_muvar'])
    for w, b in params['label_decoder']:
        flat += [w, b]
    flat += list(params['label_classifier'])
    w_x, w_z, b0 = params['ins_map'][0]
    flat += [w_x, w_z, b0]
    for w, b in params['ins_map'][1:]:
        flat += [w, b]
    for w, b in params['decoder']:
        flat += [w, b]

    vmem = pl.BlockSpec(memory_space=pltpu.MemorySpace.VMEM)
    kernel = functools.partial(_paca_fused_kernel, eps=eps,
                               latent_dim=latent_dim, num_classes=num_classes)

    kl, recons, preds_y, pos_ld = pl.pallas_call(
        kernel,
        out_shape=(
            jax.ShapeDtypeStruct((1, 1), jnp.float32),             # KL (scalar)
            jax.ShapeDtypeStruct((B, in_features), jnp.float32),   # recons
            jax.ShapeDtypeStruct((B, num_classes), jnp.float32),   # preds_y
            jax.ShapeDtypeStruct((B, num_classes), jnp.float32),   # base log-density
        ),
        in_specs=[vmem] * len(flat),
        out_specs=(vmem, vmem, vmem, vmem),
    )(*flat)

    kl_div = kl[0, 0]
    neg_ld = pos_ld  # identical under the N(0,I) base distribution (see TODO in kernel)
    dists_x = jnp.stack([neg_ld, pos_ld], axis=1)                  # [B, 2, Q]
    return x, kl_div, recons, preds_y, dists_x


# ---------------------------------------------------------------------------
# main
# ---------------------------------------------------------------------------

if __name__ == "__main__":
    B, in_features, num_classes, latent_dim = 8, 32, 8, 16

    key = jax.random.PRNGKey(0)
    kx, kt, kp = jax.random.split(key, 3)
    x = jax.random.normal(kx, (B, in_features), jnp.float32)
    target = (jax.random.uniform(kt, (B, num_classes)) < 0.5).astype(jnp.float32)

    params = init_params(kp, in_features, num_classes, latent_dim)

    fwd = jax.jit(paca_forward)
    outs = jax.block_until_ready(fwd(params, x, target))

    inp, kl_div, recons, preds_y, dists_x = outs
    assert inp.shape == (B, in_features)
    assert kl_div.shape == ()
    assert recons.shape == (B, in_features)
    assert preds_y.shape == (B, num_classes)
    assert dists_x.shape == (B, 2, num_classes)
    assert bool(jnp.isfinite(kl_div))

    print("KERNEL_OK")
</pallas_src>

<mosaic_0001>
module attributes {stable_mosaic.version = 11 : i64} {
  func.func @_paca_fused_kernel(%arg0: memref<8x32xf32, #tpu.memory_space<vmem>>, %arg1: memref<8x8xf32, #tpu.memory_space<vmem>>, %arg2: memref<32x256xf32, #tpu.memory_space<vmem>>, %arg3: memref<1x256xf32, #tpu.memory_space<vmem>>, %arg4: memref<256x512xf32, #tpu.memory_space<vmem>>, %arg5: memref<1x512xf32, #tpu.memory_space<vmem>>, %arg6: memref<512x256xf32, #tpu.memory_space<vmem>>, %arg7: memref<1x256xf32, #tpu.memory_space<vmem>>, %arg8: memref<256x32xf32, #tpu.memory_space<vmem>>, %arg9: memref<1x32xf32, #tpu.memory_space<vmem>>, %arg10: memref<8x512xf32, #tpu.memory_space<vmem>>, %arg11: memref<1x512xf32, #tpu.memory_space<vmem>>, %arg12: memref<512x256xf32, #tpu.memory_space<vmem>>, %arg13: memref<1x256xf32, #tpu.memory_space<vmem>>, %arg14: memref<256x32xf32, #tpu.memory_space<vmem>>, %arg15: memref<1x32xf32, #tpu.memory_space<vmem>>, %arg16: memref<16x256xf32, #tpu.memory_space<vmem>>, %arg17: memref<1x256xf32, #tpu.memory_space<vmem>>, %arg18: memref<256x512xf32, #tpu.memory_space<vmem>>, %arg19: memref<1x512xf32, #tpu.memory_space<vmem>>, %arg20: memref<512x8xf32, #tpu.memory_space<vmem>>, %arg21: memref<1x8xf32, #tpu.memory_space<vmem>>, %arg22: memref<32x256xf32, #tpu.memory_space<vmem>>, %arg23: memref<16x256xf32, #tpu.memory_space<vmem>>, %arg24: memref<1x256xf32, #tpu.memory_space<vmem>>, %arg25: memref<256x256xf32, #tpu.memory_space<vmem>>, %arg26: memref<1x256xf32, #tpu.memory_space<vmem>>, %arg27: memref<256x16xf32, #tpu.memory_space<vmem>>, %arg28: memref<1x16xf32, #tpu.memory_space<vmem>>, %arg29: memref<16x256xf32, #tpu.memory_space<vmem>>, %arg30: memref<1x256xf32, #tpu.memory_space<vmem>>, %arg31: memref<256x512xf32, #tpu.memory_space<vmem>>, %arg32: memref<1x512xf32, #tpu.memory_space<vmem>>, %arg33: memref<512x256xf32, #tpu.memory_space<vmem>>, %arg34: memref<1x256xf32, #tpu.memory_space<vmem>>, %arg35: memref<256x32xf32, #tpu.memory_space<vmem>>, %arg36: memref<1x32xf32, #tpu.memory_space<vmem>>, %arg37: memref<1x1xf32, #tpu.memory_space<vmem>>, %arg38: memref<8x32xf32, #tpu.memory_space<vmem>>, %arg39: memref<8x8xf32, #tpu.memory_space<vmem>>, %arg40: memref<8x8xf32, #tpu.memory_space<vmem>>) attributes {dimension_semantics = [], scalar_prefetch = 0 : i64, scratch_operands = 0 : i64, tpu.core_type = #tpu.core_type<tc>} {
    %c0 = arith.constant 0 : index
    %c0_0 = arith.constant 0 : index
    %0 = vector.load %arg0[%c0, %c0_0] : memref<8x32xf32, #tpu.memory_space<vmem>>, vector<8x32xf32>
    %c0_1 = arith.constant 0 : index
    %c0_2 = arith.constant 0 : index
    %1 = vector.load %arg1[%c0_1, %c0_2] : memref<8x8xf32, #tpu.memory_space<vmem>>, vector<8x8xf32>
    %c0_3 = arith.constant 0 : index
    %c0_4 = arith.constant 0 : index
    %2 = vector.load %arg2[%c0_3, %c0_4] : memref<32x256xf32, #tpu.memory_space<vmem>>, vector<32x256xf32>
    %3 = arith.truncf %0 : vector<8x32xf32> to vector<8x32xbf16>
    %4 = arith.truncf %2 : vector<32x256xf32> to vector<32x256xbf16>
    %cst = arith.constant dense<0.000000e+00> : vector<8x256xf32>
    %5 = tpu.matmul %3, %4, %cst {dimension_numbers = #tpu.dot_dimension_numbers<[1], [0], [0], [1], [0, 0, 1, 1], [], []>} : vector<8x32xbf16>, vector<32x256xbf16>, vector<8x256xf32> -> vector<8x256xf32>
    %c0_5 = arith.constant 0 : index
    %c0_6 = arith.constant 0 : index
    %6 = vector.load %arg3[%c0_5, %c0_6] : memref<1x256xf32, #tpu.memory_space<vmem>>, vector<1x256xf32>
    %7 = vector.broadcast %6 : vector<1x256xf32> to vector<8x256xf32>
    %8 = arith.addf %5, %7 : vector<8x256xf32>
    %cst_7 = arith.constant 0.000000e+00 : f32
    %9 = vector.broadcast %cst_7 : f32 to vector<8x256xf32>
    %10 = arith.maximumf %8, %9 : vector<8x256xf32>
    %c0_8 = arith.constant 0 : index
    %c0_9 = arith.constant 0 : index
    %11 = vector.load %arg4[%c0_8, %c0_9] : memref<256x512xf32, #tpu.memory_space<vmem>>, vector<256x512xf32>
    %12 = arith.truncf %10 : vector<8x256xf32> to vector<8x256xbf16>
    %13 = arith.truncf %11 : vector<256x512xf32> to vector<256x512xbf16>
    %cst_10 = arith.constant dense<0.000000e+00> : vector<8x512xf32>
    %14 = tpu.matmul %12, %13, %cst_10 {dimension_numbers = #tpu.dot_dimension_numbers<[1], [0], [0], [1], [0, 0, 1, 1], [], []>} : vector<8x256xbf16>, vector<256x512xbf16>, vector<8x512xf32> -> vector<8x512xf32>
    %c0_11 = arith.constant 0 : index
    %c0_12 = arith.constant 0 : index
    %15 = vector.load %arg5[%c0_11, %c0_12] : memref<1x512xf32, #tpu.memory_space<vmem>>, vector<1x512xf32>
    %16 = vector.broadcast %15 : vector<1x512xf32> to vector<8x512xf32>
    %17 = arith.addf %14, %16 : vector<8x512xf32>
    %cst_13 = arith.constant 0.000000e+00 : f32
    %18 = vector.broadcast %cst_13 : f32 to vector<8x512xf32>
    %19 = arith.maximumf %17, %18 : vector<8x512xf32>
    %c0_14 = arith.constant 0 : index
    %c0_15 = arith.constant 0 : index
    %20 = vector.load %arg6[%c0_14, %c0_15] : memref<512x256xf32, #tpu.memory_space<vmem>>, vector<512x256xf32>
    %21 = arith.truncf %19 : vector<8x512xf32> to vector<8x512xbf16>
    %22 = arith.truncf %20 : vector<512x256xf32> to vector<512x256xbf16>
    %cst_16 = arith.constant dense<0.000000e+00> : vector<8x256xf32>
    %23 = tpu.matmul %21, %22, %cst_16 {dimension_numbers = #tpu.dot_dimension_numbers<[1], [0], [0], [1], [0, 0, 1, 1], [], []>} : vector<8x512xbf16>, vector<512x256xbf16>, vector<8x256xf32> -> vector<8x256xf32>
    %c0_17 = arith.constant 0 : index
    %c0_18 = arith.constant 0 : index
    %24 = vector.load %arg7[%c0_17, %c0_18] : memref<1x256xf32, #tpu.memory_space<vmem>>, vector<1x256xf32>
    %25 = vector.broadcast %24 : vector<1x256xf32> to vector<8x256xf32>
    %26 = arith.addf %23, %25 : vector<8x256xf32>
    %cst_19 = arith.constant 0.000000e+00 : f32
    %27 = vector.broadcast %cst_19 : f32 to vector<8x256xf32>
    %28 = arith.maximumf %26, %27 : vector<8x256xf32>
    %c0_20 = arith.constant 0 : index
    %c0_21 = arith.constant 0 : index
    %29 = vector.load %arg8[%c0_20, %c0_21] : memref<256x32xf32, #tpu.memory_space<vmem>>, vector<256x32xf32>
    %30 = arith.truncf %28 : vector<8x256xf32> to vector<8x256xbf16>
    %31 = arith.truncf %29 : vector<256x32xf32> to vector<256x32xbf16>
    %cst_22 = arith.constant dense<0.000000e+00> : vector<8x32xf32>
    %32 = tpu.matmul %30, %31, %cst_22 {dimension_numbers = #tpu.dot_dimension_numbers<[1], [0], [0], [1], [0, 0, 1, 1], [], []>} : vector<8x256xbf16>, vector<256x32xbf16>, vector<8x32xf32> -> vector<8x32xf32>
    %c0_23 = arith.constant 0 : index
    %c0_24 = arith.constant 0 : index
    %33 = vector.load %arg9[%c0_23, %c0_24] : memref<1x32xf32, #tpu.memory_space<vmem>>, vector<1x32xf32>
    %34 = vector.broadcast %33 : vector<1x32xf32> to vector<8x32xf32>
    %35 = arith.addf %32, %34 : vector<8x32xf32>
    %36 = vector.extract_strided_slice %35 {offsets = [0, 0], sizes = [8, 16], strides = [1, 1]} : vector<8x32xf32> to vector<8x16xf32>
    %37 = vector.extract_strided_slice %35 {offsets = [0, 16], sizes = [8, 16], strides = [1, 1]} : vector<8x32xf32> to vector<8x16xf32>
    %c0_25 = arith.constant 0 : index
    %c0_26 = arith.constant 0 : index
    %38 = vector.load %arg10[%c0_25, %c0_26] : memref<8x512xf32, #tpu.memory_space<vmem>>, vector<8x512xf32>
    %39 = arith.truncf %1 : vector<8x8xf32> to vector<8x8xbf16>
    %40 = arith.truncf %38 : vector<8x512xf32> to vector<8x512xbf16>
    %cst_27 = arith.constant dense<0.000000e+00> : vector<8x512xf32>
    %41 = tpu.matmul %39, %40, %cst_27 {dimension_numbers = #tpu.dot_dimension_numbers<[1], [0], [0], [1], [0, 0, 1, 1], [], []>} : vector<8x8xbf16>, vector<8x512xbf16>, vector<8x512xf32> -> vector<8x512xf32>
    %c0_28 = arith.constant 0 : index
    %c0_29 = arith.constant 0 : index
    %42 = vector.load %arg11[%c0_28, %c0_29] : memref<1x512xf32, #tpu.memory_space<vmem>>, vector<1x512xf32>
    %43 = vector.broadcast %42 : vector<1x512xf32> to vector<8x512xf32>
    %44 = arith.addf %41, %43 : vector<8x512xf32>
    %cst_30 = arith.constant 0.000000e+00 : f32
    %45 = vector.broadcast %cst_30 : f32 to vector<8x512xf32>
    %46 = arith.maximumf %44, %45 : vector<8x512xf32>
    %c0_31 = arith.constant 0 : index
    %c0_32 = arith.constant 0 : index
    %47 = vector.load %arg12[%c0_31, %c0_32] : memref<512x256xf32, #tpu.memory_space<vmem>>, vector<512x256xf32>
    %48 = arith.truncf %46 : vector<8x512xf32> to vector<8x512xbf16>
    %49 = arith.truncf %47 : vector<512x256xf32> to vector<512x256xbf16>
    %cst_33 = arith.constant dense<0.000000e+00> : vector<8x256xf32>
    %50 = tpu.matmul %48, %49, %cst_33 {dimension_numbers = #tpu.dot_dimension_numbers<[1], [0], [0], [1], [0, 0, 1, 1], [], []>} : vector<8x512xbf16>, vector<512x256xbf16>, vector<8x256xf32> -> vector<8x256xf32>
    %c0_34 = arith.constant 0 : index
    %c0_35 = arith.constant 0 : index
    %51 = vector.load %arg13[%c0_34, %c0_35] : memref<1x256xf32, #tpu.memory_space<vmem>>, vector<1x256xf32>
    %52 = vector.broadcast %51 : vector<1x256xf32> to vector<8x256xf32>
    %53 = arith.addf %50, %52 : vector<8x256xf32>
    %cst_36 = arith.constant 0.000000e+00 : f32
    %54 = vector.broadcast %cst_36 : f32 to vector<8x256xf32>
    %55 = arith.maximumf %53, %54 : vector<8x256xf32>
    %c0_37 = arith.constant 0 : index
    %c0_38 = arith.constant 0 : index
    %56 = vector.load %arg14[%c0_37, %c0_38] : memref<256x32xf32, #tpu.memory_space<vmem>>, vector<256x32xf32>
    %57 = arith.truncf %55 : vector<8x256xf32> to vector<8x256xbf16>
    %58 = arith.truncf %56 : vector<256x32xf32> to vector<256x32xbf16>
    %cst_39 = arith.constant dense<0.000000e+00> : vector<8x32xf32>
    %59 = tpu.matmul %57, %58, %cst_39 {dimension_numbers = #tpu.dot_dimension_numbers<[1], [0], [0], [1], [0, 0, 1, 1], [], []>} : vector<8x256xbf16>, vector<256x32xbf16>, vector<8x32xf32> -> vector<8x32xf32>
    %c0_40 = arith.constant 0 : index
    %c0_41 = arith.constant 0 : index
    %60 = vector.load %arg15[%c0_40, %c0_41] : memref<1x32xf32, #tpu.memory_space<vmem>>, vector<1x32xf32>
    %61 = vector.broadcast %60 : vector<1x32xf32> to vector<8x32xf32>
    %62 = arith.addf %59, %61 : vector<8x32xf32>
    %63 = vector.extract_strided_slice %62 {offsets = [0, 0], sizes = [8, 16], strides = [1, 1]} : vector<8x32xf32> to vector<8x16xf32>
    %64 = vector.extract_strided_slice %62 {offsets = [0, 16], sizes = [8, 16], strides = [1, 1]} : vector<8x32xf32> to vector<8x16xf32>
    %65 = arith.subf %64, %37 : vector<8x16xf32>
    %cst_42 = arith.constant 1.000000e+00 : f32
    %66 = vector.broadcast %cst_42 : f32 to vector<8x16xf32>
    %67 = arith.subf %65, %66 : vector<8x16xf32>
    %68 = arith.subf %37, %64 : vector<8x16xf32>
    %69 = math.exp %68 : vector<8x16xf32>
    %70 = arith.addf %67, %69 : vector<8x16xf32>
    %71 = arith.subf %63, %36 : vector<8x16xf32>
    %72 = arith.mulf %71, %71 : vector<8x16xf32>
    %73 = math.exp %64 : vector<8x16xf32>
    %cst_43 = arith.constant 9.99999993E-9 : f32
    %74 = vector.broadcast %cst_43 : f32 to vector<8x16xf32>
    %75 = arith.addf %73, %74 : vector<8x16xf32>
    %76 = arith.divf %72, %75 : vector<8x16xf32>
    %77 = arith.addf %70, %76 : vector<8x16xf32>
    %cst_44 = arith.constant dense<0.000000e+00> : vector<8xf32>
    %78 = vector.multi_reduction <add>, %77, %cst_44 [1] : vector<8x16xf32> to vector<8xf32>
    %79 = vector.shape_cast %78 : vector<8xf32> to vector<8x1xf32>
    %cst_45 = arith.constant dense<0.000000e+00> : vector<1xf32>
    %80 = vector.multi_reduction <add>, %79, %cst_45 [0] : vector<8x1xf32> to vector<1xf32>
    %81 = vector.shape_cast %80 : vector<1xf32> to vector<1x1xf32>
    %cst_46 = arith.constant 5.000000e-01 : f32
    %82 = vector.broadcast %cst_46 : f32 to vector<1x1xf32>
    %83 = arith.mulf %82, %81 : vector<1x1xf32>
    %cst_47 = arith.constant 8.000000e+00 : f32
    %84 = vector.broadcast %cst_47 : f32 to vector<1x1xf32>
    %85 = arith.divf %83, %84 : vector<1x1xf32>
    %c0_48 = arith.constant 0 : index
    %c0_49 = arith.constant 0 : index
    %86 = vector.load %arg37[%c0_48, %c0_49] : memref<1x1xf32, #tpu.memory_space<vmem>>, vector<1x1xf32>
    tpu.vector_store %arg37[%c0_48, %c0_49], %85 {strides = array<i32>} : memref<1x1xf32, #tpu.memory_space<vmem>>, vector<1x1xf32>,
    %c0_50 = arith.constant 0 : index
    %c0_51 = arith.constant 0 : index
    %87 = vector.load %arg16[%c0_50, %c0_51] : memref<16x256xf32, #tpu.memory_space<vmem>>, vector<16x256xf32>
    %88 = arith.truncf %63 : vector<8x16xf32> to vector<8x16xbf16>
    %89 = arith.truncf %87 : vector<16x256xf32> to vector<16x256xbf16>
    %cst_52 = arith.constant dense<0.000000e+00> : vector<8x256xf32>
    %90 = tpu.matmul %88, %89, %cst_52 {dimension_numbers = #tpu.dot_dimension_numbers<[1], [0], [0], [1], [0, 0, 1, 1], [], []>} : vector<8x16xbf16>, vector<16x256xbf16>, vector<8x256xf32> -> vector<8x256xf32>
    %c0_53 = arith.constant 0 : index
    %c0_54 = arith.constant 0 : index
    %91 = vector.load %arg17[%c0_53, %c0_54] : memref<1x256xf32, #tpu.memory_space<vmem>>, vector<1x256xf32>
    %92 = vector.broadcast %91 : vector<1x256xf32> to vector<8x256xf32>
    %93 = arith.addf %90, %92 : vector<8x256xf32>
    %cst_55 = arith.constant 0.000000e+00 : f32
    %94 = vector.broadcast %cst_55 : f32 to vector<8x256xf32>
    %95 = arith.maximumf %93, %94 : vector<8x256xf32>
    %c0_56 = arith.constant 0 : index
    %c0_57 = arith.constant 0 : index
    %96 = vector.load %arg18[%c0_56, %c0_57] : memref<256x512xf32, #tpu.memory_space<vmem>>, vector<256x512xf32>
    %97 = arith.truncf %95 : vector<8x256xf32> to vector<8x256xbf16>
    %98 = arith.truncf %96 : vector<256x512xf32> to vector<256x512xbf16>
    %cst_58 = arith.constant dense<0.000000e+00> : vector<8x512xf32>
    %99 = tpu.matmul %97, %98, %cst_58 {dimension_numbers = #tpu.dot_dimension_numbers<[1], [0], [0], [1], [0, 0, 1, 1], [], []>} : vector<8x256xbf16>, vector<256x512xbf16>, vector<8x512xf32> -> vector<8x512xf32>
    %c0_59 = arith.constant 0 : index
    %c0_60 = arith.constant 0 : index
    %100 = vector.load %arg19[%c0_59, %c0_60] : memref<1x512xf32, #tpu.memory_space<vmem>>, vector<1x512xf32>
    %101 = vector.broadcast %100 : vector<1x512xf32> to vector<8x512xf32>
    %102 = arith.addf %99, %101 : vector<8x512xf32>
    %cst_61 = arith.constant 0.000000e+00 : f32
    %103 = vector.broadcast %cst_61 : f32 to vector<8x512xf32>
    %104 = arith.maximumf %102, %103 : vector<8x512xf32>
    %c0_62 = arith.constant 0 : index
    %c0_63 = arith.constant 0 : index
    %105 = vector.load %arg20[%c0_62, %c0_63] : memref<512x8xf32, #tpu.memory_space<vmem>>, vector<512x8xf32>
    %106 = arith.truncf %104 : vector<8x512xf32> to vector<8x512xbf16>
    %107 = arith.truncf %105 : vector<512x8xf32> to vector<512x8xbf16>
    %cst_64 = arith.constant dense<0.000000e+00> : vector<8x8xf32>
    %108 = tpu.matmul %106, %107, %cst_64 {dimension_numbers = #tpu.dot_dimension_numbers<[1], [0], [0], [1], [0, 0, 1, 1], [], []>} : vector<8x512xbf16>, vector<512x8xbf16>, vector<8x8xf32> -> vector<8x8xf32>
    %c0_65 = arith.constant 0 : index
    %c0_66 = arith.constant 0 : index
    %109 = vector.load %arg21[%c0_65, %c0_66] : memref<1x8xf32, #tpu.memory_space<vmem>>, vector<1x8xf32>
    %110 = vector.broadcast %109 : vector<1x8xf32> to vector<8x8xf32>
    %111 = arith.addf %108, %110 : vector<8x8xf32>
    %c0_67 = arith.constant 0 : index
    %c0_68 = arith.constant 0 : index
    %112 = vector.load %arg39[%c0_67, %c0_68] : memref<8x8xf32, #tpu.memory_space<vmem>>, vector<8x8xf32>
    tpu.vector_store %arg39[%c0_67, %c0_68], %111 {strides = array<i32>} : memref<8x8xf32, #tpu.memory_space<vmem>>, vector<8x8xf32>,
    %c0_69 = arith.constant 0 : index
    %c0_70 = arith.constant 0 : index
    %113 = vector.load %arg22[%c0_69, %c0_70] : memref<32x256xf32, #tpu.memory_space<vmem>>, vector<32x256xf32>
    %114 = arith.truncf %0 : vector<8x32xf32> to vector<8x32xbf16>
    %115 = arith.truncf %113 : vector<32x256xf32> to vector<32x256xbf16>
    %cst_71 = arith.constant dense<0.000000e+00> : vector<8x256xf32>
    %116 = tpu.matmul %114, %115, %cst_71 {dimension_numbers = #tpu.dot_dimension_numbers<[1], [0], [0], [1], [0, 0, 1, 1], [], []>} : vector<8x32xbf16>, vector<32x256xbf16>, vector<8x256xf32> -> vector<8x256xf32>
    %c0_72 = arith.constant 0 : index
    %c0_73 = arith.constant 0 : index
    %117 = vector.load %arg23[%c0_72, %c0_73] : memref<16x256xf32, #tpu.memory_space<vmem>>, vector<16x256xf32>
    %118 = arith.truncf %36 : vector<8x16xf32> to vector<8x16xbf16>
    %119 = arith.truncf %117 : vector<16x256xf32> to vector<16x256xbf16>
    %cst_74 = arith.constant dense<0.000000e+00> : vector<8x256xf32>
    %120 = tpu.matmul %118, %119, %cst_74 {dimension_numbers = #tpu.dot_dimension_numbers<[1], [0], [0], [1], [0, 0, 1, 1], [], []>} : vector<8x16xbf16>, vector<16x256xbf16>, vector<8x256xf32> -> vector<8x256xf32>
    %121 = arith.addf %116, %120 : vector<8x256xf32>
    %c0_75 = arith.constant 0 : index
    %c0_76 = arith.constant 0 : index
    %122 = vector.load %arg24[%c0_75, %c0_76] : memref<1x256xf32, #tpu.memory_space<vmem>>, vector<1x256xf32>
    %123 = vector.broadcast %122 : vector<1x256xf32> to vector<8x256xf32>
    %124 = arith.addf %121, %123 : vector<8x256xf32>
    %cst_77 = arith.constant 0.000000e+00 : f32
    %125 = vector.broadcast %cst_77 : f32 to vector<8x256xf32>
    %126 = arith.maximumf %124, %125 : vector<8x256xf32>
    %c0_78 = arith.constant 0 : index
    %c0_79 = arith.constant 0 : index
    %127 = vector.load %arg25[%c0_78, %c0_79] : memref<256x256xf32, #tpu.memory_space<vmem>>, vector<256x256xf32>
    %128 = arith.truncf %126 : vector<8x256xf32> to vector<8x256xbf16>
    %129 = arith.truncf %127 : vector<256x256xf32> to vector<256x256xbf16>
    %cst_80 = arith.constant dense<0.000000e+00> : vector<8x256xf32>
    %130 = tpu.matmul %128, %129, %cst_80 {dimension_numbers = #tpu.dot_dimension_numbers<[1], [0], [0], [1], [0, 0, 1, 1], [], []>} : vector<8x256xbf16>, vector<256x256xbf16>, vector<8x256xf32> -> vector<8x256xf32>
    %c0_81 = arith.constant 0 : index
    %c0_82 = arith.constant 0 : index
    %131 = vector.load %arg26[%c0_81, %c0_82] : memref<1x256xf32, #tpu.memory_space<vmem>>, vector<1x256xf32>
    %132 = vector.broadcast %131 : vector<1x256xf32> to vector<8x256xf32>
    %133 = arith.addf %130, %132 : vector<8x256xf32>
    %cst_83 = arith.constant 0.000000e+00 : f32
    %134 = vector.broadcast %cst_83 : f32 to vector<8x256xf32>
    %135 = arith.maximumf %133, %134 : vector<8x256xf32>
    %c0_84 = arith.constant 0 : index
    %c0_85 = arith.constant 0 : index
    %136 = vector.load %arg27[%c0_84, %c0_85] : memref<256x16xf32, #tpu.memory_space<vmem>>, vector<256x16xf32>
    %137 = arith.truncf %135 : vector<8x256xf32> to vector<8x256xbf16>
    %138 = arith.truncf %136 : vector<256x16xf32> to vector<256x16xbf16>
    %cst_86 = arith.constant dense<0.000000e+00> : vector<8x16xf32>
    %139 = tpu.matmul %137, %138, %cst_86 {dimension_numbers = #tpu.dot_dimension_numbers<[1], [0], [0], [1], [0, 0, 1, 1], [], []>} : vector<8x256xbf16>, vector<256x16xbf16>, vector<8x16xf32> -> vector<8x16xf32>
    %c0_87 = arith.constant 0 : index
    %c0_88 = arith.constant 0 : index
    %140 = vector.load %arg28[%c0_87, %c0_88] : memref<1x16xf32, #tpu.memory_space<vmem>>, vector<1x16xf32>
    %141 = vector.broadcast %140 : vector<1x16xf32> to vector<8x16xf32>
    %142 = arith.addf %139, %141 : vector<8x16xf32>
    %c0_89 = arith.constant 0 : index
    %c0_90 = arith.constant 0 : index
    %143 = vector.load %arg29[%c0_89, %c0_90] : memref<16x256xf32, #tpu.memory_space<vmem>>, vector<16x256xf32>
    %144 = arith.truncf %142 : vector<8x16xf32> to vector<8x16xbf16>
    %145 = arith.truncf %143 : vector<16x256xf32> to vector<16x256xbf16>
    %cst_91 = arith.constant dense<0.000000e+00> : vector<8x256xf32>
    %146 = tpu.matmul %144, %145, %cst_91 {dimension_numbers = #tpu.dot_dimension_numbers<[1], [0], [0], [1], [0, 0, 1, 1], [], []>} : vector<8x16xbf16>, vector<16x256xbf16>, vector<8x256xf32> -> vector<8x256xf32>
    %c0_92 = arith.constant 0 : index
    %c0_93 = arith.constant 0 : index
    %147 = vector.load %arg30[%c0_92, %c0_93] : memref<1x256xf32, #tpu.memory_space<vmem>>, vector<1x256xf32>
    %148 = vector.broadcast %147 : vector<1x256xf32> to vector<8x256xf32>
    %149 = arith.addf %146, %148 : vector<8x256xf32>
    %cst_94 = arith.constant 0.000000e+00 : f32
    %150 = vector.broadcast %cst_94 : f32 to vector<8x256xf32>
    %151 = arith.maximumf %149, %150 : vector<8x256xf32>
    %c0_95 = arith.constant 0 : index
    %c0_96 = arith.constant 0 : index
    %152 = vector.load %arg31[%c0_95, %c0_96] : memref<256x512xf32, #tpu.memory_space<vmem>>, vector<256x512xf32>
    %153 = arith.truncf %151 : vector<8x256xf32> to vector<8x256xbf16>
    %154 = arith.truncf %152 : vector<256x512xf32> to vector<256x512xbf16>
    %cst_97 = arith.constant dense<0.000000e+00> : vector<8x512xf32>
    %155 = tpu.matmul %153, %154, %cst_97 {dimension_numbers = #tpu.dot_dimension_numbers<[1], [0], [0], [1], [0, 0, 1, 1], [], []>} : vector<8x256xbf16>, vector<256x512xbf16>, vector<8x512xf32> -> vector<8x512xf32>
    %c0_98 = arith.constant 0 : index
    %c0_99 = arith.constant 0 : index
    %156 = vector.load %arg32[%c0_98, %c0_99] : memref<1x512xf32, #tpu.memory_space<vmem>>, vector<1x512xf32>
    %157 = vector.broadcast %156 : vector<1x512xf32> to vector<8x512xf32>
    %158 = arith.addf %155, %157 : vector<8x512xf32>
    %cst_100 = arith.constant 0.000000e+00 : f32
    %159 = vector.broadcast %cst_100 : f32 to vector<8x512xf32>
    %160 = arith.maximumf %158, %159 : vector<8x512xf32>
    %c0_101 = arith.constant 0 : index
    %c0_102 = arith.constant 0 : index
    %161 = vector.load %arg33[%c0_101, %c0_102] : memref<512x256xf32, #tpu.memory_space<vmem>>, vector<512x256xf32>
    %162 = arith.truncf %160 : vector<8x512xf32> to vector<8x512xbf16>
    %163 = arith.truncf %161 : vector<512x256xf32> to vector<512x256xbf16>
    %cst_103 = arith.constant dense<0.000000e+00> : vector<8x256xf32>
    %164 = tpu.matmul %162, %163, %cst_103 {dimension_numbers = #tpu.dot_dimension_numbers<[1], [0], [0], [1], [0, 0, 1, 1], [], []>} : vector<8x512xbf16>, vector<512x256xbf16>, vector<8x256xf32> -> vector<8x256xf32>
    %c0_104 = arith.constant 0 : index
    %c0_105 = arith.constant 0 : index
    %165 = vector.load %arg34[%c0_104, %c0_105] : memref<1x256xf32, #tpu.memory_space<vmem>>, vector<1x256xf32>
    %166 = vector.broadcast %165 : vector<1x256xf32> to vector<8x256xf32>
    %167 = arith.addf %164, %166 : vector<8x256xf32>
    %cst_106 = arith.constant 0.000000e+00 : f32
    %168 = vector.broadcast %cst_106 : f32 to vector<8x256xf32>
    %169 = arith.maximumf %167, %168 : vector<8x256xf32>
    %c0_107 = arith.constant 0 : index
    %c0_108 = arith.constant 0 : index
    %170 = vector.load %arg35[%c0_107, %c0_108] : memref<256x32xf32, #tpu.memory_space<vmem>>, vector<256x32xf32>
    %171 = arith.truncf %169 : vector<8x256xf32> to vector<8x256xbf16>
    %172 = arith.truncf %170 : vector<256x32xf32> to vector<256x32xbf16>
    %cst_109 = arith.constant dense<0.000000e+00> : vector<8x32xf32>
    %173 = tpu.matmul %171, %172, %cst_109 {dimension_numbers = #tpu.dot_dimension_numbers<[1], [0], [0], [1], [0, 0, 1, 1], [], []>} : vector<8x256xbf16>, vector<256x32xbf16>, vector<8x32xf32> -> vector<8x32xf32>
    %c0_110 = arith.constant 0 : index
    %c0_111 = arith.constant 0 : index
    %174 = vector.load %arg36[%c0_110, %c0_111] : memref<1x32xf32, #tpu.memory_space<vmem>>, vector<1x32xf32>
    %175 = vector.broadcast %174 : vector<1x32xf32> to vector<8x32xf32>
    %176 = arith.addf %173, %175 : vector<8x32xf32>
    %c0_112 = arith.constant 0 : index
    %c0_113 = arith.constant 0 : index
    %177 = vector.load %arg38[%c0_112, %c0_113] : memref<8x32xf32, #tpu.memory_space<vmem>>, vector<8x32xf32>
    tpu.vector_store %arg38[%c0_112, %c0_113], %176 {strides = array<i32>} : memref<8x32xf32, #tpu.memory_space<vmem>>, vector<8x32xf32>,
    %178 = arith.mulf %142, %142 : vector<8x16xf32>
    %cst_114 = arith.constant dense<0.000000e+00> : vector<8xf32>
    %179 = vector.multi_reduction <add>, %178, %cst_114 [1] : vector<8x16xf32> to vector<8xf32>
    %180 = vector.shape_cast %179 : vector<8xf32> to vector<8x1xf32>
    %cst_115 = arith.constant -5.000000e-01 : f32
    %181 = vector.broadcast %cst_115 : f32 to vector<8x1xf32>
    %182 = arith.mulf %181, %180 : vector<8x1xf32>
    %cst_116 = arith.constant 14.7030163 : f32
    %183 = vector.broadcast %cst_116 : f32 to vector<8x1xf32>
    %184 = arith.subf %182, %183 : vector<8x1xf32>
    %185 = vector.shape_cast %184 : vector<8x1xf32> to vector<8x1xf32>
    %186 = vector.broadcast %185 : vector<8x1xf32> to vector<8x8xf32>
    %c0_117 = arith.constant 0 : index
    %c0_118 = arith.constant 0 : index
    %187 = vector.load %arg40[%c0_117, %c0_118] : memref<8x8xf32, #tpu.memory_space<vmem>>, vector<8x8xf32>
    tpu.vector_store %arg40[%c0_117, %c0_118], %186 {strides = array<i32>} : memref<8x8xf32, #tpu.memory_space<vmem>>, vector<8x8xf32>,
    return
  }
}

</mosaic_0001>

<llo_original>
// kernel: paca_forward.1
$region0: #{paca_forward.1}
  #allocation0 [shape = 'u32[]', space=smem, size = 0x4, offset = 0x4, fixed_abs, tag = 'smem constant byte address 0x4 - core index']
  #allocation1 [shape = 'u32[144,128]{1,0:T(1,128)}', space=vmem, size = 0x12000, scoped, tag = 'internal scratch']
  %s0 = inlined_call_operand.smem [shape: u32[41], index: -1, kind: input, shape index: {}]
  %s1 = sld [smem:[%s0]]
  %s2 = scalar_lea.smem %s0, 1
  %s3 = sld [smem:[%s2]]
  %s4 = scalar_lea.smem %s0, 2
  %s5 = sld [smem:[%s4]]
  %s6 = scalar_lea.smem %s0, 3
  %s7 = sld [smem:[%s6]]
  %s8 = scalar_lea.smem %s0, 4
  %s9 = sld [smem:[%s8]]
  %s10 = scalar_lea.smem %s0, 5
  %s11 = sld [smem:[%s10]]
  %s12 = scalar_lea.smem %s0, 6
  %s13 = sld [smem:[%s12]]
  %s14 = scalar_lea.smem %s0, 7
  %s15 = sld [smem:[%s14]]
  %s16 = scalar_lea.smem %s0, 8
  %s17 = sld [smem:[%s16]]
  %s18 = scalar_lea.smem %s0, 9
  %s19 = sld [smem:[%s18]]
  %s20 = scalar_lea.smem %s0, 10
  %s21 = sld [smem:[%s20]]
  %s22 = scalar_lea.smem %s0, 11
  %s23 = sld [smem:[%s22]]
  %s24 = scalar_lea.smem %s0, 12
  %s25 = sld [smem:[%s24]]
  %s26 = scalar_lea.smem %s0, 13
  %s27 = sld [smem:[%s26]]
  %s28 = scalar_lea.smem %s0, 14
  %s29 = sld [smem:[%s28]]
  %s30 = scalar_lea.smem %s0, 15
  %s31 = sld [smem:[%s30]]
  %s32 = scalar_lea.smem %s0, 16
  %s33 = sld [smem:[%s32]]
  %s34 = scalar_lea.smem %s0, 17
  %s35 = sld [smem:[%s34]]
  %s36 = scalar_lea.smem %s0, 18
  %s37 = sld [smem:[%s36]]
  %s38 = scalar_lea.smem %s0, 19
  %s39 = sld [smem:[%s38]]
  %s40 = scalar_lea.smem %s0, 20
  %s41 = sld [smem:[%s40]]
  %s42 = scalar_lea.smem %s0, 21
  %s43 = sld [smem:[%s42]]
  %s44 = scalar_lea.smem %s0, 22
  %s45 = sld [smem:[%s44]]
  %s46 = scalar_lea.smem %s0, 23
  %s47 = sld [smem:[%s46]]
  %s48 = scalar_lea.smem %s0, 24
  %s49 = sld [smem:[%s48]]
  %s50 = scalar_lea.smem %s0, 25
  %s51 = sld [smem:[%s50]]
  %s52 = scalar_lea.smem %s0, 26
  %s53 = sld [smem:[%s52]]
  %s54 = scalar_lea.smem %s0, 27
  %s55 = sld [smem:[%s54]]
  %s56 = scalar_lea.smem %s0, 28
  %s57 = sld [smem:[%s56]]
  %s58 = scalar_lea.smem %s0, 29
  %s59 = sld [smem:[%s58]]
  %s60 = scalar_lea.smem %s0, 30
  %s61 = sld [smem:[%s60]]
  %s62 = scalar_lea.smem %s0, 31
  %s63 = sld [smem:[%s62]]
  %s64 = scalar_lea.smem %s0, 32
  %s65 = sld [smem:[%s64]]
  %s66 = scalar_lea.smem %s0, 33
  %s67 = sld [smem:[%s66]]
  %s68 = scalar_lea.smem %s0, 34
  %s69 = sld [smem:[%s68]]
  %s70 = scalar_lea.smem %s0, 35
  %s71 = sld [smem:[%s70]]
  %s72 = scalar_lea.smem %s0, 36
  %s73 = sld [smem:[%s72]]
  %s74 = scalar_lea.smem %s0, 37
  %s75 = sld [smem:[%s74]]
  %s76 = scalar_lea.smem %s0, 38
  %s77 = sld [smem:[%s76]]
  %s78 = scalar_lea.smem %s0, 39
  %s79 = sld [smem:[%s78]]
  %s80 = scalar_lea.smem %s0, 40
  %s81 = sld [smem:[%s80]]
  %82 = xla_tuple %s75, %s77, %s79, %s81
  %s83 = sld [smem:[#allocation0]]
  $region278: #{paca_forward.1} parent=0
    _
  %s85 = ssub.s32 1, %s83
  %s86 = scalar_select 0, %s85, %s83
  $region1: #{paca_forward.1} parent=0
    #allocation2 [shape = 'u8[4096]{0}', space=vmem, size = 0x1000, scoped, tag = 'input window, operand 1, single buffered']
    #allocation3 [shape = 's32[1]{0}', space=sflag, size = 0x4, scoped, tag = 'scoped memory for paca_forward.1']
    #allocation4 [shape = 's32[1]{0}', space=sflag, size = 0x4, scoped, tag = 'scoped memory for paca_forward.1']
    #allocation5 [shape = 'u8[2048]{0}', space=vmem, size = 0x800, scoped, tag = 'input window, operand 5, single buffered']
    #allocation6 [shape = 's32[1]{0}', space=sflag, size = 0x4, scoped, tag = 'scoped memory for paca_forward.1']
    #allocation7 [shape = 'u8[524288]{0}', space=vmem, size = 0x80000, scoped, tag = 'input window, operand 6, single buffered']
    #allocation8 [shape = 'u8[1024]{0}', space=vmem, size = 0x400, scoped, tag = 'input window, operand 7, single buffered']
    #allocation9 [shape = 's32[1]{0}', space=sflag, size = 0x4, scoped, tag = 'scoped memory for paca_forward.1']
    #allocation10 [shape = 'u8[2048]{0}', space=vmem, size = 0x800, scoped, tag = 'input window, operand 11, single buffered']
    #allocation11 [shape = 'u8[524288]{0}', space=vmem, size = 0x80000, scoped, tag = 'input window, operand 12, single buffered']
    #allocation12 [shape = 's32[1]{0}', space=sflag, size = 0x4, scoped, tag = 'scoped memory for paca_forward.1']
    #allocation13 [shape = 'u8[1024]{0}', space=vmem, size = 0x400, scoped, tag = 'input window, operand 13, single buffered']
    #allocation14 [shape = 'u8[512]{0}', space=vmem, size = 0x400, scoped, tag = 'input window, operand 15, single buffered']
    #allocation15 [shape = 's32[1]{0}', space=sflag, size = 0x4, scoped, tag = 'scoped memory for paca_forward.1']
    #allocation16 [shape = 'u8[16384]{0}', space=vmem, size = 0x4000, scoped, tag = 'input window, operand 16, single buffered']
    #allocation17 [shape = 'u8[1024]{0}', space=vmem, size = 0x400, scoped, tag = 'input window, operand 17, single buffered']
    #allocation18 [shape = 's32[1]{0}', space=sflag, size = 0x4, scoped, tag = 'scoped memory for paca_forward.1']
    #allocation19 [shape = 'u8[524288]{0}', space=vmem, size = 0x80000, scoped, tag = 'input window, operand 18, single buffered']
    #allocation20 [shape = 'u8[2048]{0}', space=vmem, size = 0x800, scoped, tag = 'input window, operand 19, single buffered']
    #allocation21 [shape = 's32[1]{0}', space=sflag, size = 0x4, scoped, tag = 'scoped memory for paca_forward.1']
    #allocation22 [shape = 'u8[512]{0}', space=vmem, size = 0x400, scoped, tag = 'input window, operand 21, single buffered']
    #allocation23 [shape = 'u8[16384]{0}', space=vmem, size = 0x4000, scoped, tag = 'input window, operand 23, single buffered']
    #allocation24 [shape = 's32[1]{0}', space=sflag, size = 0x4, scoped, tag = 'scoped memory for paca_forward.1']
    #allocation25 [shape = 'u8[1024]{0}', space=vmem, size = 0x400, scoped, tag = 'input window, operand 24, single buffered']
    #allocation26 [shape = 'u8[1024]{0}', space=vmem, size = 0x400, scoped, tag = 'input window, operand 26, single buffered']
    #allocation27 [shape = 's32[1]{0}', space=sflag, size = 0x4, scoped, tag = 'scoped memory for paca_forward.1']
    #allocation28 [shape = 'u8[512]{0}', space=vmem, size = 0x400, scoped, tag = 'input window, operand 28, single buffered']
    #allocation29 [shape = 'u8[16384]{0}', space=vmem, size = 0x4000, scoped, tag = 'input window, operand 29, single buffered']
    #allocation30 [shape = 's32[1]{0}', space=sflag, size = 0x4, scoped, tag = 'scoped memory for paca_forward.1']
    #allocation31 [shape = 'u8[1024]{0}', space=vmem, size = 0x400, scoped, tag = 'input window, operand 30, single buffered']
    #allocation32 [shape = 'u8[524288]{0}', space=vmem, size = 0x80000, scoped, tag = 'input window, operand 31, single buffered']
    #allocation33 [shape = 's32[1]{0}', space=sflag, size = 0x4, scoped, tag = 'scoped memory for paca_forward.1']
    #allocation34 [shape = 'u8[2048]{0}', space=vmem, size = 0x800, scoped, tag = 'input window, operand 32, single buffered']
    #allocation35 [shape = 'u8[524288]{0}', space=vmem, size = 0x80000, scoped, tag = 'input window, operand 33, single buffered']
    #allocation36 [shape = 's32[1]{0}', space=sflag, size = 0x4, scoped, tag = 'scoped memory for paca_forward.1']
    #allocation37 [shape = 'u8[1024]{0}', space=vmem, size = 0x400, scoped, tag = 'input window, operand 34, single buffered']
    #allocation38 [shape = 'u8[512]{0}', space=vmem, size = 0x400, scoped, tag = 'input window, operand 36, single buffered']
    #allocation39 [shape = 's32[1]{0}', space=sflag, size = 0x4, scoped, tag = 'scoped memory for paca_forward.1']
    #allocation40 [shape = 'u8[512]{0}', space=vmem, size = 0x400, scoped, tag = 'output window, operand 0, single buffered']
    #allocation41 [shape = 'u8[4096]{0}', space=vmem, size = 0x1000, scoped, tag = 'output window, operand 1, single buffered']
    #allocation42 [shape = 's32[1]{0}', space=sflag, size = 0x4, scoped, tag = 'scoped memory for paca_forward.1']
    #allocation43 [shape = 'u8[4096]{0}', space=vmem, size = 0x1000, scoped, tag = 'output window, operand 2, single buffered']
    %87 = vsyncpa [#allocation3], 0
    %88 = vsyncpa [#allocation6], 0
    %89 = vsyncpa [#allocation9], 0
    %90 = vsyncpa [#allocation12], 0
    %91 = vsyncpa [#allocation15], 0
    %92 = vsyncpa [#allocation18], 0
    %93 = vsyncpa [#allocation21], 0
    %94 = vsyncpa [#allocation24], 0
    %95 = vsyncpa [#allocation27], 0
    %96 = vsyncpa [#allocation30], 0
    %97 = vsyncpa [#allocation33], 0
    %98 = vsyncpa [#allocation36], 0
    %99 = vsyncpa [#allocation39], 0
    %100 = vsyncpa [#allocation4], 0
    %101 = vsyncpa [#allocation42], 0
    // Predicated region
    $region2: #{paca_forward.1} parent=1 // pred_check
      _
    $region3: #{paca_forward.1} parent=1 // pred_check_branch
      %103 = sbr.rel (0) target = $region5
    $region4: #{paca_forward.1} parent=1 // pred_region
      _
    $region5: #{paca_forward.1} parent=1 // pred_fallthru
      _
    // Predicated region
    $region6: #{paca_forward.1} parent=1 // pred_check
      _
    $region7: #{paca_forward.1} parent=1 // pred_check_branch
      %105 = sbr.rel (0) target = $region9
    $region8: #{paca_forward.1} parent=1 // pred_region
      %s107 = ssub.s32 128, 128
      %108 = vsyncadd [#allocation3], %s107
      %s110 = sshll.u32 [#allocation2], 4
      %s111 = int_to_ptr.vmem [resolvable:$true] %s110
      %113 = dma.hbm_to_vmem [thread:$0]  %s3, 128, %s111, [#allocation3]
    $region9: #{paca_forward.1} parent=1 // pred_fallthru
      _
    // Predicated region
    $region10: #{paca_forward.1} parent=1 // pred_check
      _
    $region11: #{paca_forward.1} parent=1 // pred_check_branch
      %115 = sbr.rel (0) target = $region13
    $region12: #{paca_forward.1} parent=1 // pred_region
      _
    $region13: #{paca_forward.1} parent=1 // pred_fallthru
      _
    // Predicated region
    $region14: #{paca_forward.1} parent=1 // pred_check
      _
    $region15: #{paca_forward.1} parent=1 // pred_check_branch
      %117 = sbr.rel (0) target = $region17
    $region16: #{paca_forward.1} parent=1 // pred_region
      _
    $region17: #{paca_forward.1} parent=1 // pred_fallthru
      _
    // Predicated region
    $region18: #{paca_forward.1} parent=1 // pred_check
      _
    $region19: #{paca_forward.1} parent=1 // pred_check_branch
      %119 = sbr.rel (0) target = $region21
    $region20: #{paca_forward.1} parent=1 // pred_region
      _
    $region21: #{paca_forward.1} parent=1 // pred_fallthru
      _
    // Predicated region
    $region22: #{paca_forward.1} parent=1 // pred_check
      _
    $region23: #{paca_forward.1} parent=1 // pred_check_branch
      %121 = sbr.rel (0) target = $region25
    $region24: #{paca_forward.1} parent=1 // pred_region
      %s123 = ssub.s32 64, 64
      %124 = vsyncadd [#allocation6], %s123
      %s126 = sshll.u32 [#allocation5], 4
      %s127 = int_to_ptr.vmem [resolvable:$true] %s126
      %129 = dma.hbm_to_vmem [thread:$0]  %s11, 64, %s127, [#allocation6]
    $region25: #{paca_forward.1} parent=1 // pred_fallthru
      _
    // Predicated region
    $region26: #{paca_forward.1} parent=1 // pred_check
      _
    $region27: #{paca_forward.1} parent=1 // pred_check_branch
      %131 = sbr.rel (0) target = $region29
    $region28: #{paca_forward.1} parent=1 // pred_region
      %s133 = ssub.s32 16384, 16384
      %134 = vsyncadd [#allocation6], %s133
      %s135 = sshll.u32 [#allocation7], 4
      %s136 = int_to_ptr.vmem [resolvable:$true] %s135
      %141 = dma.hbm_to_vmem [thread:$0]  %s13, 16384, %s136, [#allocation6], 256, 256, 16
    $region29: #{paca_forward.1} parent=1 // pred_fallthru
      _
    // Predicated region
    $region30: #{paca_forward.1} parent=1 // pred_check
      _
    $region31: #{paca_forward.1} parent=1 // pred_check_branch
      %143 = sbr.rel (0) target = $region33
    $region32: #{paca_forward.1} parent=1 // pred_region
      %s145 = ssub.s32 32, 32
      %146 = vsyncadd [#allocation9], %s145
      %s148 = sshll.u32 [#allocation8], 4
      %s149 = int_to_ptr.vmem [resolvable:$true] %s148
      %151 = dma.hbm_to_vmem [thread:$0]  %s15, 32, %s149, [#allocation9]
    $region33: #{paca_forward.1} parent=1 // pred_fallthru
      _
    // Predicated region
    $region34: #{paca_forward.1} parent=1 // pred_check
      _
    $region35: #{paca_forward.1} parent=1 // pred_check_branch
      %153 = sbr.rel (0) target = $region37
    $region36: #{paca_forward.1} parent=1 // pred_region
      _
    $region37: #{paca_forward.1} parent=1 // pred_fallthru
      _
    // Predicated region
    $region38: #{paca_forward.1} parent=1 // pred_check
      _
    $region39: #{paca_forward.1} parent=1 // pred_check_branch
      %155 = sbr.rel (0) target = $region41
    $region40: #{paca_forward.1} parent=1 // pred_region
      _
    $region41: #{paca_forward.1} parent=1 // pred_fallthru
      _
    // Predicated region
    $region42: #{paca_forward.1} parent=1 // pred_check
      _
    $region43: #{paca_forward.1} parent=1 // pred_check_branch
      %157 = sbr.rel (0) target = $region45
    $region44: #{paca_forward.1} parent=1 // pred_region
      _
    $region45: #{paca_forward.1} parent=1 // pred_fallthru
      _
    // Predicated region
    $region46: #{paca_forward.1} parent=1 // pred_check
      _
    $region47: #{paca_forward.1} parent=1 // pred_check_branch
      %159 = sbr.rel (0) target = $region49
    $region48: #{paca_forward.1} parent=1 // pred_region
      %s161 = ssub.s32 64, 64
      %162 = vsyncadd [#allocation9], %s161
      %s164 = sshll.u32 [#allocation10], 4
      %s165 = int_to_ptr.vmem [resolvable:$true] %s164
      %167 = dma.hbm_to_vmem [thread:$0]  %s23, 64, %s165, [#allocation9]
    $region49: #{paca_forward.1} parent=1 // pred_fallthru
      _
    // Predicated region
    $region50: #{paca_forward.1} parent=1 // pred_check
      _
    $region51: #{paca_forward.1} parent=1 // pred_check_branch
      %169 = sbr.rel (0) target = $region53
    $region52: #{paca_forward.1} parent=1 // pred_region
      %s171 = ssub.s32 16384, 16384
      %172 = vsyncadd [#allocation12], %s171
      %s173 = sshll.u32 [#allocation11], 4
      %s174 = int_to_ptr.vmem [resolvable:$true] %s173
      %179 = dma.hbm_to_vmem [thread:$0]  %s25, 16384, %s174, [#allocation12], 256, 256, 16
    $region53: #{paca_forward.1} parent=1 // pred_fallthru
      _
    // Predicated region
    $region54: #{paca_forward.1} parent=1 // pred_check
      _
    $region55: #{paca_forward.1} parent=1 // pred_check_branch
      %181 = sbr.rel (0) target = $region57
    $region56: #{paca_forward.1} parent=1 // pred_region
      %s183 = ssub.s32 32, 32
      %184 = vsyncadd [#allocation12], %s183
      %s186 = sshll.u32 [#allocation13], 4
      %s187 = int_to_ptr.vmem [resolvable:$true] %s186
      %189 = dma.hbm_to_vmem [thread:$0]  %s27, 32, %s187, [#allocation12]
    $region57: #{paca_forward.1} parent=1 // pred_fallthru
      _
    // Predicated region
    $region58: #{paca_forward.1} parent=1 // pred_check
      _
    $region59: #{paca_forward.1} parent=1 // pred_check_branch
      %191 = sbr.rel (0) target = $region61
    $region60: #{paca_forward.1} parent=1 // pred_region
      _
    $region61: #{paca_forward.1} parent=1 // pred_fallthru
      _
    // Predicated region
    $region62: #{paca_forward.1} parent=1 // pred_check
      _
    $region63: #{paca_forward.1} parent=1 // pred_check_branch
      %193 = sbr.rel (0) target = $region65
    $region64: #{paca_forward.1} parent=1 // pred_region
      %s195 = ssub.s32 16, 16
      %196 = vsyncadd [#allocation15], %s195
      %s198 = sshll.u32 [#allocation14], 4
      %s199 = int_to_ptr.vmem [resolvable:$true] %s198
      %201 = dma.hbm_to_vmem [thread:$0]  %s31, 16, %s199, [#allocation15]
    $region65: #{paca_forward.1} parent=1 // pred_fallthru
      _
    // Predicated region
    $region66: #{paca_forward.1} parent=1 // pred_check
      _
    $region67: #{paca_forward.1} parent=1 // pred_check_branch
      %203 = sbr.rel (0) target = $region69
    $region68: #{paca_forward.1} parent=1 // pred_region
      %s205 = ssub.s32 512, 512
      %206 = vsyncadd [#allocation15], %s205
      %s207 = sshll.u32 [#allocation16], 4
      %s208 = int_to_ptr.vmem [resolvable:$true] %s207
      %213 = dma.hbm_to_vmem [thread:$0]  %s33, 512, %s208, [#allocation15], 256, 256, 16
    $region69: #{paca_forward.1} parent=1 // pred_fallthru
      _
    // Predicated region
    $region70: #{paca_forward.1} parent=1 // pred_check
      _
    $region71: #{paca_forward.1} parent=1 // pred_check_branch
      %215 = sbr.rel (0) target = $region73
    $region72: #{paca_forward.1} parent=1 // pred_region
      %s217 = ssub.s32 32, 32
      %218 = vsyncadd [#allocation18], %s217
      %s220 = sshll.u32 [#allocation17], 4
      %s221 = int_to_ptr.vmem [resolvable:$true] %s220
      %223 = dma.hbm_to_vmem [thread:$0]  %s35, 32, %s221, [#allocation18]
    $region73: #{paca_forward.1} parent=1 // pred_fallthru
      _
    // Predicated region
    $region74: #{paca_forward.1} parent=1 // pred_check
      _
    $region75: #{paca_forward.1} parent=1 // pred_check_branch
      %225 = sbr.rel (0) target = $region77
    $region76: #{paca_forward.1} parent=1 // pred_region
      %s227 = ssub.s32 16384, 16384
      %228 = vsyncadd [#allocation18], %s227
      %s229 = sshll.u32 [#allocation19], 4
      %s230 = int_to_ptr.vmem [resolvable:$true] %s229
      %235 = dma.hbm_to_vmem [thread:$0]  %s37, 16384, %s230, [#allocation18], 512, 512, 32
    $region77: #{paca_forward.1} parent=1 // pred_fallthru
      _
    // Predicated region
    $region78: #{paca_forward.1} parent=1 // pred_check
      _
    $region79: #{paca_forward.1} parent=1 // pred_check_branch
      %237 = sbr.rel (0) target = $region81
    $region80: #{paca_forward.1} parent=1 // pred_region
      %s239 = ssub.s32 64, 64
      %240 = vsyncadd [#allocation21], %s239
      %s242 = sshll.u32 [#allocation20], 4
      %s243 = int_to_ptr.vmem [resolvable:$true] %s242
      %245 = dma.hbm_to_vmem [thread:$0]  %s39, 64, %s243, [#allocation21]
    $region81: #{paca_forward.1} parent=1 // pred_fallthru
      _
    // Predicated region
    $region82: #{paca_forward.1} parent=1 // pred_check
      _
    $region83: #{paca_forward.1} parent=1 // pred_check_branch
      %247 = sbr.rel (0) target = $region85
    $region84: #{paca_forward.1} parent=1 // pred_region
      _
    $region85: #{paca_forward.1} parent=1 // pred_fallthru
      _
    // Predicated region
    $region86: #{paca_forward.1} parent=1 // pred_check
      _
    $region87: #{paca_forward.1} parent=1 // pred_check_branch
      %249 = sbr.rel (0) target = $region89
    $region88: #{paca_forward.1} parent=1 // pred_region
      %s251 = ssub.s32 16, 16
      %252 = vsyncadd [#allocation21], %s251
      %s254 = sshll.u32 [#allocation22], 4
      %s255 = int_to_ptr.vmem [resolvable:$true] %s254
      %257 = dma.hbm_to_vmem [thread:$0]  %s43, 16, %s255, [#allocation21]
    $region89: #{paca_forward.1} parent=1 // pred_fallthru
      _
    // Predicated region
    $region90: #{paca_forward.1} parent=1 // pred_check
      _
    $region91: #{paca_forward.1} parent=1 // pred_check_branch
      %259 = sbr.rel (0) target = $region93
    $region92: #{paca_forward.1} parent=1 // pred_region
      _
    $region93: #{paca_forward.1} parent=1 // pred_fallthru
      _
    // Predicated region
    $region94: #{paca_forward.1} parent=1 // pred_check
      _
    $region95: #{paca_forward.1} parent=1 // pred_check_branch
      %261 = sbr.rel (0) target = $region97
    $region96: #{paca_forward.1} parent=1 // pred_region
      %s263 = ssub.s32 512, 512
      %264 = vsyncadd [#allocation24], %s263
      %s265 = sshll.u32 [#allocation23], 4
      %s266 = int_to_ptr.vmem [resolvable:$true] %s265
      %271 = dma.hbm_to_vmem [thread:$0]  %s47, 512, %s266, [#allocation24], 256, 256, 16
    $region97: #{paca_forward.1} parent=1 // pred_fallthru
      _
    // Predicated region
    $region98: #{paca_forward.1} parent=1 // pred_check
      _
    $region99: #{paca_forward.1} parent=1 // pred_check_branch
      %273 = sbr.rel (0) target = $region101
    $region100: #{paca_forward.1} parent=1 // pred_region
      %s275 = ssub.s32 32, 32
      %276 = vsyncadd [#allocation24], %s275
      %s278 = sshll.u32 [#allocation25], 4
      %s279 = int_to_ptr.vmem [resolvable:$true] %s278
      %281 = dma.hbm_to_vmem [thread:$0]  %s49, 32, %s279, [#allocation24]
    $region101: #{paca_forward.1} parent=1 // pred_fallthru
      _
    // Predicated region
    $region102: #{paca_forward.1} parent=1 // pred_check
      _
    $region103: #{paca_forward.1} parent=1 // pred_check_branch
      %283 = sbr.rel (0) target = $region105
    $region104: #{paca_forward.1} parent=1 // pred_region
      _
    $region105: #{paca_forward.1} parent=1 // pred_fallthru
      _
    // Predicated region
    $region106: #{paca_forward.1} parent=1 // pred_check
      _
    $region107: #{paca_forward.1} parent=1 // pred_check_branch
      %285 = sbr.rel (0) target = $region109
    $region108: #{paca_forward.1} parent=1 // pred_region
      %s287 = ssub.s32 32, 32
      %288 = vsyncadd [#allocation27], %s287
      %s290 = sshll.u32 [#allocation26], 4
      %s291 = int_to_ptr.vmem [resolvable:$true] %s290
      %293 = dma.hbm_to_vmem [thread:$0]  %s53, 32, %s291, [#allocation27]
    $region109: #{paca_forward.1} parent=1 // pred_fallthru
      _
    // Predicated region
    $region110: #{paca_forward.1} parent=1 // pred_check
      _
    $region111: #{paca_forward.1} parent=1 // pred_check_branch
      %295 = sbr.rel (0) target = $region113
    $region112: #{paca_forward.1} parent=1 // pred_region
      _
    $region113: #{paca_forward.1} parent=1 // pred_fallthru
      _
    // Predicated region
    $region114: #{paca_forward.1} parent=1 // pred_check
      _
    $region115: #{paca_forward.1} parent=1 // pred_check_branch
      %297 = sbr.rel (0) target = $region117
    $region116: #{paca_forward.1} parent=1 // pred_region
      %s299 = ssub.s32 16, 16
      %300 = vsyncadd [#allocation27], %s299
      %s302 = sshll.u32 [#allocation28], 4
      %s303 = int_to_ptr.vmem [resolvable:$true] %s302
      %305 = dma.hbm_to_vmem [thread:$0]  %s57, 16, %s303, [#allocation27]
    $region117: #{paca_forward.1} parent=1 // pred_fallthru
      _
    // Predicated region
    $region118: #{paca_forward.1} parent=1 // pred_check
      _
    $region119: #{paca_forward.1} parent=1 // pred_check_branch
      %307 = sbr.rel (0) target = $region121
    $region120: #{paca_forward.1} parent=1 // pred_region
      %s309 = ssub.s32 512, 512
      %310 = vsyncadd [#allocation30], %s309
      %s311 = sshll.u32 [#allocation29], 4
      %s312 = int_to_ptr.vmem [resolvable:$true] %s311
      %317 = dma.hbm_to_vmem [thread:$0]  %s59, 512, %s312, [#allocation30], 256, 256, 16
    $region121: #{paca_forward.1} parent=1 // pred_fallthru
      _
    // Predicated region
    $region122: #{paca_forward.1} parent=1 // pred_check
      _
    $region123: #{paca_forward.1} parent=1 // pred_check_branch
      %319 = sbr.rel (0) target = $region125
    $region124: #{paca_forward.1} parent=1 // pred_region
      %s321 = ssub.s32 32, 32
      %322 = vsyncadd [#allocation30], %s321
      %s324 = sshll.u32 [#allocation31], 4
      %s325 = int_to_ptr.vmem [resolvable:$true] %s324
      %327 = dma.hbm_to_vmem [thread:$0]  %s61, 32, %s325, [#allocation30]
    $region125: #{paca_forward.1} parent=1 // pred_fallthru
      _
    // Predicated region
    $region126: #{paca_forward.1} parent=1 // pred_check
      _
    $region127: #{paca_forward.1} parent=1 // pred_check_branch
      %329 = sbr.rel (0) target = $region129
    $region128: #{paca_forward.1} parent=1 // pred_region
      %s331 = ssub.s32 16384, 16384
      %332 = vsyncadd [#allocation33], %s331
      %s333 = sshll.u32 [#allocation32], 4
      %s334 = int_to_ptr.vmem [resolvable:$true] %s333
      %339 = dma.hbm_to_vmem [thread:$0]  %s63, 16384, %s334, [#allocation33], 512, 512, 32
    $region129: #{paca_forward.1} parent=1 // pred_fallthru
      _
    // Predicated region
    $region130: #{paca_forward.1} parent=1 // pred_check
      _
    $region131: #{paca_forward.1} parent=1 // pred_check_branch
      %341 = sbr.rel (0) target = $region133
    $region132: #{paca_forward.1} parent=1 // pred_region
      %s343 = ssub.s32 64, 64
      %344 = vsyncadd [#allocation33], %s343
      %s346 = sshll.u32 [#allocation34], 4
      %s347 = int_to_ptr.vmem [resolvable:$true] %s346
      %349 = dma.hbm_to_vmem [thread:$0]  %s65, 64, %s347, [#allocation33]
    $region133: #{paca_forward.1} parent=1 // pred_fallthru
      _
    // Predicated region
    $region134: #{paca_forward.1} parent=1 // pred_check
      _
    $region135: #{paca_forward.1} parent=1 // pred_check_branch
      %351 = sbr.rel (0) target = $region137
    $region136: #{paca_forward.1} parent=1 // pred_region
      %s353 = ssub.s32 16384, 16384
      %354 = vsyncadd [#allocation36], %s353
      %s355 = sshll.u32 [#allocation35], 4
      %s356 = int_to_ptr.vmem [resolvable:$true] %s355
      %361 = dma.hbm_to_vmem [thread:$0]  %s67, 16384, %s356, [#allocation36], 256, 256, 16
    $region137: #{paca_forward.1} parent=1 // pred_fallthru
      _
    // Predicated region
    $region138: #{paca_forward.1} parent=1 // pred_check
      _
    $region139: #{paca_forward.1} parent=1 // pred_check_branch
      %363 = sbr.rel (0) target = $region141
    $region140: #{paca_forward.1} parent=1 // pred_region
      %s365 = ssub.s32 32, 32
      %366 = vsyncadd [#allocation36], %s365
      %s368 = sshll.u32 [#allocation37], 4
      %s369 = int_to_ptr.vmem [resolvable:$true] %s368
      %371 = dma.hbm_to_vmem [thread:$0]  %s69, 32, %s369, [#allocation36]
    $region141: #{paca_forward.1} parent=1 // pred_fallthru
      _
    // Predicated region
    $region142: #{paca_forward.1} parent=1 // pred_check
      _
    $region143: #{paca_forward.1} parent=1 // pred_check_branch
      %373 = sbr.rel (0) target = $region145
    $region144: #{paca_forward.1} parent=1 // pred_region
      _
    $region145: #{paca_forward.1} parent=1 // pred_fallthru
      _
    // Predicated region
    $region146: #{paca_forward.1} parent=1 // pred_check
      _
    $region147: #{paca_forward.1} parent=1 // pred_check_branch
      %375 = sbr.rel (0) target = $region149
    $region148: #{paca_forward.1} parent=1 // pred_region
      %s377 = ssub.s32 16, 16
      %378 = vsyncadd [#allocation39], %s377
      %s380 = sshll.u32 [#allocation38], 4
      %s381 = int_to_ptr.vmem [resolvable:$true] %s380
      %383 = dma.hbm_to_vmem [thread:$0]  %s73, 16, %s381, [#allocation39]
    $region149: #{paca_forward.1} parent=1 // pred_fallthru
      _
    // Predicated region
    $region150: #{paca_forward.1} parent=1 // pred_check
      _
    $region151: #{paca_forward.1} parent=1 // pred_check_branch
      %385 = sbr.rel (0) target = $region153
    $region152: #{paca_forward.1} parent=1 // pred_region
      %386 = dma.done [#allocation3], 128
    $region153: #{paca_forward.1} parent=1 // pred_fallthru
      _
    // Predicated region
    $region154: #{paca_forward.1} parent=1 // pred_check
      _
    $region155: #{paca_forward.1} parent=1 // pred_check_branch
      %388 = sbr.rel (0) target = $region157
    $region156: #{paca_forward.1} parent=1 // pred_region
      %389 = dma.done [#allocation6], 64
    $region157: #{paca_forward.1} parent=1 // pred_fallthru
      _
    // Predicated region
    $region158: #{paca_forward.1} parent=1 // pred_check
      _
    $region159: #{paca_forward.1} parent=1 // pred_check_branch
      %391 = sbr.rel (0) target = $region161
    $region160: #{paca_forward.1} parent=1 // pred_region
      %392 = dma.done [#allocation6], 16384
    $region161: #{paca_forward.1} parent=1 // pred_fallthru
      _
    // Predicated region
    $region162: #{paca_forward.1} parent=1 // pred_check
      _
    $region163: #{paca_forward.1} parent=1 // pred_check_branch
      %394 = sbr.rel (0) target = $region165
    $region164: #{paca_forward.1} parent=1 // pred_region
      %395 = dma.done [#allocation9], 32
    $region165: #{paca_forward.1} parent=1 // pred_fallthru
      _
    // Predicated region
    $region166: #{paca_forward.1} parent=1 // pred_check
      _
    $region167: #{paca_forward.1} parent=1 // pred_check_branch
      %397 = sbr.rel (0) target = $region169
    $region168: #{paca_forward.1} parent=1 // pred_region
      %398 = dma.done [#allocation9], 64
    $region169: #{paca_forward.1} parent=1 // pred_fallthru
      _
    // Predicated region
    $region170: #{paca_forward.1} parent=1 // pred_check
      _
    $region171: #{paca_forward.1} parent=1 // pred_check_branch
      %400 = sbr.rel (0) target = $region173
    $region172: #{paca_forward.1} parent=1 // pred_region
      %401 = dma.done [#allocation12], 16384
    $region173: #{paca_forward.1} parent=1 // pred_fallthru
      _
    // Predicated region
    $region174: #{paca_forward.1} parent=1 // pred_check
      _
    $region175: #{paca_forward.1} parent=1 // pred_check_branch
      %403 = sbr.rel (0) target = $region177
    $region176: #{paca_forward.1} parent=1 // pred_region
      %404 = dma.done [#allocation12], 32
    $region177: #{paca_forward.1} parent=1 // pred_fallthru
      _
    // Predicated region
    $region178: #{paca_forward.1} parent=1 // pred_check
      _
    $region179: #{paca_forward.1} parent=1 // pred_check_branch
      %406 = sbr.rel (0) target = $region181
    $region180: #{paca_forward.1} parent=1 // pred_region
      %407 = dma.done [#allocation15], 16
    $region181: #{paca_forward.1} parent=1 // pred_fallthru
      _
    // Predicated region
    $region182: #{paca_forward.1} parent=1 // pred_check
      _
    $region183: #{paca_forward.1} parent=1 // pred_check_branch
      %409 = sbr.rel (0) target = $region185
    $region184: #{paca_forward.1} parent=1 // pred_region
      %410 = dma.done [#allocation15], 512
    $region185: #{paca_forward.1} parent=1 // pred_fallthru
      _
    // Predicated region
    $region186: #{paca_forward.1} parent=1 // pred_check
      _
    $region187: #{paca_forward.1} parent=1 // pred_check_branch
      %412 = sbr.rel (0) target = $region189
    $region188: #{paca_forward.1} parent=1 // pred_region
      %413 = dma.done [#allocation18], 32
    $region189: #{paca_forward.1} parent=1 // pred_fallthru
      _
    // Predicated region
    $region190: #{paca_forward.1} parent=1 // pred_check
      _
    $region191: #{paca_forward.1} parent=1 // pred_check_branch
      %415 = sbr.rel (0) target = $region193
    $region192: #{paca_forward.1} parent=1 // pred_region
      %416 = dma.done [#allocation18], 16384
    $region193: #{paca_forward.1} parent=1 // pred_fallthru
      _
    // Predicated region
    $region194: #{paca_forward.1} parent=1 // pred_check
      _
    $region195: #{paca_forward.1} parent=1 // pred_check_branch
      %418 = sbr.rel (0) target = $region197
    $region196: #{paca_forward.1} parent=1 // pred_region
      %419 = dma.done [#allocation21], 64
    $region197: #{paca_forward.1} parent=1 // pred_fallthru
      _
    // Predicated region
    $region198: #{paca_forward.1} parent=1 // pred_check
      _
    $region199: #{paca_forward.1} parent=1 // pred_check_branch
      %421 = sbr.rel (0) target = $region201
    $region200: #{paca_forward.1} parent=1 // pred_region
      %422 = dma.done [#allocation21], 16
    $region201: #{paca_forward.1} parent=1 // pred_fallthru
      _
    // Predicated region
    $region202: #{paca_forward.1} parent=1 // pred_check
      _
    $region203: #{paca_forward.1} parent=1 // pred_check_branch
      %424 = sbr.rel (0) target = $region205
    $region204: #{paca_forward.1} parent=1 // pred_region
      %425 = dma.done [#allocation24], 512
    $region205: #{paca_forward.1} parent=1 // pred_fallthru
      _
    // Predicated region
    $region206: #{paca_forward.1} parent=1 // pred_check
      _
    $region207: #{paca_forward.1} parent=1 // pred_check_branch
      %427 = sbr.rel (0) target = $region209
    $region208: #{paca_forward.1} parent=1 // pred_region
      %428 = dma.done [#allocation24], 32
    $region209: #{paca_forward.1} parent=1 // pred_fallthru
      _
    // Predicated region
    $region210: #{paca_forward.1} parent=1 // pred_check
      _
    $region211: #{paca_forward.1} parent=1 // pred_check_branch
      %430 = sbr.rel (0) target = $region213
    $region212: #{paca_forward.1} parent=1 // pred_region
      %431 = dma.done [#allocation27], 32
    $region213: #{paca_forward.1} parent=1 // pred_fallthru
      _
    // Predicated region
    $region214: #{paca_forward.1} parent=1 // pred_check
      _
    $region215: #{paca_forward.1} parent=1 // pred_check_branch
      %433 = sbr.rel (0) target = $region217
    $region216: #{paca_forward.1} parent=1 // pred_region
      %434 = dma.done [#allocation27], 16
    $region217: #{paca_forward.1} parent=1 // pred_fallthru
      _
    // Predicated region
    $region218: #{paca_forward.1} parent=1 // pred_check
      _
    $region219: #{paca_forward.1} parent=1 // pred_check_branch
      %436 = sbr.rel (0) target = $region221
    $region220: #{paca_forward.1} parent=1 // pred_region
      %437 = dma.done [#allocation30], 512
    $region221: #{paca_forward.1} parent=1 // pred_fallthru
      _
    // Predicated region
    $region222: #{paca_forward.1} parent=1 // pred_check
      _
    $region223: #{paca_forward.1} parent=1 // pred_check_branch
      %439 = sbr.rel (0) target = $region225
    $region224: #{paca_forward.1} parent=1 // pred_region
      %440 = dma.done [#allocation30], 32
    $region225: #{paca_forward.1} parent=1 // pred_fallthru
      _
    // Predicated region
    $region226: #{paca_forward.1} parent=1 // pred_check
      _
    $region227: #{paca_forward.1} parent=1 // pred_check_branch
      %442 = sbr.rel (0) target = $region229
    $region228: #{paca_forward.1} parent=1 // pred_region
      %443 = dma.done [#allocation33], 16384
    $region229: #{paca_forward.1} parent=1 // pred_fallthru
      _
    // Predicated region
    $region230: #{paca_forward.1} parent=1 // pred_check
      _
    $region231: #{paca_forward.1} parent=1 // pred_check_branch
      %445 = sbr.rel (0) target = $region233
    $region232: #{paca_forward.1} parent=1 // pred_region
      %446 = dma.done [#allocation33], 64
    $region233: #{paca_forward.1} parent=1 // pred_fallthru
      _
    // Predicated region
    $region234: #{paca_forward.1} parent=1 // pred_check
      _
    $region235: #{paca_forward.1} parent=1 // pred_check_branch
      %448 = sbr.rel (0) target = $region237
    $region236: #{paca_forward.1} parent=1 // pred_region
      %449 = dma.done [#allocation36], 16384
    $region237: #{paca_forward.1} parent=1 // pred_fallthru
      _
    // Predicated region
    $region238: #{paca_forward.1} parent=1 // pred_check
      _
    $region239: #{paca_forward.1} parent=1 // pred_check_branch
      %451 = sbr.rel (0) target = $region241
    $region240: #{paca_forward.1} parent=1 // pred_region
      %452 = dma.done [#allocation36], 32
    $region241: #{paca_forward.1} parent=1 // pred_fallthru
      _
    // Predicated region
    $region242: #{paca_forward.1} parent=1 // pred_check
      _
    $region243: #{paca_forward.1} parent=1 // pred_check_branch
      %454 = sbr.rel (0) target = $region245
    $region244: #{paca_forward.1} parent=1 // pred_region
      %455 = dma.done [#allocation39], 16
    $region245: #{paca_forward.1} parent=1 // pred_fallthru
      _
    %v457 = vld [vmem:[%s1] sm:$0xff]
    %v458 = vld [vmem:[#allocation2] sm:$0xff]
    %v459 = vld [vmem:[%s5] sm:$0xff]
    %v460 = vld [vmem:[%s5 + $0x8] sm:$0xff]
    %v461 = vld [vmem:[%s5 + $0x10] sm:$0xff]
    %v462 = vld [vmem:[%s5 + $0x18] sm:$0xff]
    %v463 = vld [vmem:[%s5 + $0x20] sm:$0xff]
    %v464 = vld [vmem:[%s5 + $0x28] sm:$0xff]
    %v465 = vld [vmem:[%s5 + $0x30] sm:$0xff]
    %v466 = vld [vmem:[%s5 + $0x38] sm:$0xff]
    %v467 = vpack.c.bf16 %v457, %v457
    %v468 = vpack.c.bf16 %v461, %v459
    %v469 = vpack.c.bf16 %v462, %v460
    %v470 = vpack.c.bf16 %v465, %v463
    %v471 = vpack.c.bf16 %v466, %v464
    %v472 = vld [vmem:[%s7] sm:$0x3]
    %v474 = vlaneseq
    %v475 = vshrl.u32 %v474, 7
    %v476 = vsub.s32 0, %v475
    %v477 = vrot.slane %v472, %v476
    %v478 = vlaneseq
    %v479 = vshrl.u32 %v478, 7
    %v480 = vsub.s32 1, %v479
    %v481 = vrot.slane %v472, %v480
    %vm484 = vcmask 261120
    %v486 = vsel %vm484, %v467, 0
    %488 = vmatprep.subr.bf16.mxu0 0
    %489 = vmatpush1.bf16.msra.mxu0 0
    %490 = vmatprep.subr.bf16.mxu0 0
    %491 = vmatpush1.bf16.msra.mxu0 0
    %492 = vmatprep.subr.bf16.mxu0 0
    %493 = vmatpush1.bf16.msra.mxu0 0
    %494 = vmatprep.subr.bf16.mxu0 0
    %495 = vmatpush1.bf16.msra.mxu0 0
    %496 = vmatprep.subr.bf16.mxu0 0
    %497 = vmatpush1.bf16.msra.mxu0 0
    %498 = vmatprep.subr.bf16.mxu0 0
    %499 = vmatpush1.bf16.msra.mxu0 0
    %500 = vmatprep.subr.bf16.mxu0 %v471
    %501 = vmatpush1.bf16.msra.mxu0 %v470
    %502 = vmatprep.subr.bf16.mxu0 %v469
    %503 = vmatpush1.bf16.msra.mxu0 %v468
    %504 = vmatprep.subr.bf16.mxu0 0
    %505 = vmatpush2.bf16.msra.mxu0 0
    %506 = vmatprep.subr.bf16.mxu0 0
    %507 = vmatpush2.bf16.msra.mxu0 0
    %508 = vmatprep.subr.bf16.mxu0 0
    %509 = vmatpush2.bf16.msra.mxu0 0
    %510 = vmatprep.subr.bf16.mxu0 0
    %511 = vmatpush2.bf16.msra.mxu0 0
    %512 = vmatprep.subr.bf16.mxu0 0
    %513 = vmatpush2.bf16.msra.mxu0 0
    %514 = vmatprep.subr.bf16.mxu0 0
    %515 = vmatpush2.bf16.msra.mxu0 0
    %516 = vmatprep.subr.bf16.mxu0 0
    %517 = vmatpush2.bf16.msra.mxu0 0
    %518 = vmatprep.subr.bf16.mxu0 0
    %519 = vmatpush2.bf16.msra.mxu0 0
    %520 = vmatprep.mubr.bf16.mxu0 0
    %521 = vmatmul.mubr.bf16.gmra.mxu0 %v486
    %v522 = vpop.f32.mrf.mxu0
    %v523 = vadd.f32 %v477, %v522
    %v524 = vpop.f32.mrf.mxu0
    %v525 = vadd.f32 %v481, %v524
    %v526 = vpop.f32.mrf.mxu0
    %v527 = vpop.f32.mrf.mxu0
    %528 = vdwg.mxu0
    %v529 = vmax.f32 %v523, 0.0
    %v530 = vmax.f32 %v525, 0.0
    %v531 = vld [vmem:[%s9] sm:$0xff]
    %v532 = vld [vmem:[%s9 + $0x8] sm:$0xff]
    %v533 = vld [vmem:[%s9 + $0x10] sm:$0xff]
    %v534 = vld [vmem:[%s9 + $0x18] sm:$0xff]
    %v535 = vld [vmem:[%s9 + $0x20] sm:$0xff]
    %v536 = vld [vmem:[%s9 + $0x28] sm:$0xff]
    %v537 = vld [vmem:[%s9 + $0x30] sm:$0xff]
    %v538 = vld [vmem:[%s9 + $0x38] sm:$0xff]
    %v539 = vld [vmem:[%s9 + $0x40] sm:$0xff]
    %v540 = vld [vmem:[%s9 + $0x48] sm:$0xff]
    %v541 = vld [vmem:[%s9 + $0x50] sm:$0xff]
    %v542 = vld [vmem:[%s9 + $0x58] sm:$0xff]
    %v543 = vld [vmem:[%s9 + $0x60] sm:$0xff]
    %v544 = vld [vmem:[%s9 + $0x68] sm:$0xff]
    %v545 = vld [vmem:[%s9 + $0x70] sm:$0xff]
    %v546 = vld [vmem:[%s9 + $0x78] sm:$0xff]
    %v547 = vld [vmem:[%s9 + $0x80] sm:$0xff]
    %v548 = vld [vmem:[%s9 + $0x88] sm:$0xff]
    %v549 = vld [vmem:[%s9 + $0x90] sm:$0xff]
    %v550 = vld [vmem:[%s9 + $0x98] sm:$0xff]
    %v551 = vld [vmem:[%s9 + $0xa0] sm:$0xff]
    %v552 = vld [vmem:[%s9 + $0xa8] sm:$0xff]
    %v553 = vld [vmem:[%s9 + $0xb0] sm:$0xff]
    %v554 = vld [vmem:[%s9 + $0xb8] sm:$0xff]
    %v555 = vld [vmem:[%s9 + $0xc0] sm:$0xff]
    %v556 = vld [vmem:[%s9 + $0xc8] sm:$0xff]
    %v557 = vld [vmem:[%s9 + $0xd0] sm:$0xff]
    %v558 = vld [vmem:[%s9 + $0xd8] sm:$0xff]
    %v559 = vld [vmem:[%s9 + $0xe0] sm:$0xff]
    %v560 = vld [vmem:[%s9 + $0xe8] sm:$0xff]
    %v561 = vld [vmem:[%s9 + $0xf0] sm:$0xff]
    %v562 = vld [vmem:[%s9 + $0xf8] sm:$0xff]
    %v563 = vld [vmem:[%s9 + $0x100] sm:$0xff]
    %v564 = vld [vmem:[%s9 + $0x108] sm:$0xff]
    %v565 = vld [vmem:[%s9 + $0x110] sm:$0xff]
    %v566 = vld [vmem:[%s9 + $0x118] sm:$0xff]
    %v567 = vld [vmem:[%s9 + $0x120] sm:$0xff]
    %v568 = vld [vmem:[%s9 + $0x128] sm:$0xff]
    %v569 = vld [vmem:[%s9 + $0x130] sm:$0xff]
    %v570 = vld [vmem:[%s9 + $0x138] sm:$0xff]
    %v571 = vld [vmem:[%s9 + $0x140] sm:$0xff]
    %v572 = vld [vmem:[%s9 + $0x148] sm:$0xff]
    %v573 = vld [vmem:[%s9 + $0x150] sm:$0xff]
    %v574 = vld [vmem:[%s9 + $0x158] sm:$0xff]
    %v575 = vld [vmem:[%s9 + $0x160] sm:$0xff]
    %v576 = vld [vmem:[%s9 + $0x168] sm:$0xff]
    %v577 = vld [vmem:[%s9 + $0x170] sm:$0xff]
    %v578 = vld [vmem:[%s9 + $0x178] sm:$0xff]
    %v579 = vld [vmem:[%s9 + $0x180] sm:$0xff]
    %v580 = vld [vmem:[%s9 + $0x188] sm:$0xff]
    %v581 = vld [vmem:[%s9 + $0x190] sm:$0xff]
    %v582 = vld [vmem:[%s9 + $0x198] sm:$0xff]
    %v583 = vld [vmem:[%s9 + $0x1a0] sm:$0xff]
    %v584 = vld [vmem:[%s9 + $0x1a8] sm:$0xff]
    %v585 = vld [vmem:[%s9 + $0x1b0] sm:$0xff]
    %v586 = vld [vmem:[%s9 + $0x1b8] sm:$0xff]
    %v587 = vld [vmem:[%s9 + $0x1c0] sm:$0xff]
    %v588 = vld [vmem:[%s9 + $0x1c8] sm:$0xff]
    %v589 = vld [vmem:[%s9 + $0x1d0] sm:$0xff]
    %v590 = vld [vmem:[%s9 + $0x1d8] sm:$0xff]
    %v591 = vld [vmem:[%s9 + $0x1e0] sm:$0xff]
    %v592 = vld [vmem:[%s9 + $0x1e8] sm:$0xff]
    %v593 = vld [vmem:[%s9 + $0x1f0] sm:$0xff]
    %v594 = vld [vmem:[%s9 + $0x1f8] sm:$0xff]
    %v595 = vld [vmem:[%s9 + $0x200] sm:$0xff]
    %v596 = vld [vmem:[%s9 + $0x208] sm:$0xff]
    %v597 = vld [vmem:[%s9 + $0x210] sm:$0xff]
    %v598 = vld [vmem:[%s9 + $0x218] sm:$0xff]
    %v599 = vld [vmem:[%s9 + $0x220] sm:$0xff]
    %v600 = vld [vmem:[%s9 + $0x228] sm:$0xff]
    %v601 = vld [vmem:[%s9 + $0x230] sm:$0xff]
    %v602 = vld [vmem:[%s9 + $0x238] sm:$0xff]
    %v603 = vld [vmem:[%s9 + $0x240] sm:$0xff]
    %v604 = vld [vmem:[%s9 + $0x248] sm:$0xff]
    %v605 = vld [vmem:[%s9 + $0x250] sm:$0xff]
    %v606 = vld [vmem:[%s9 + $0x258] sm:$0xff]
    %v607 = vld [vmem:[%s9 + $0x260] sm:$0xff]
    %v608 = vld [vmem:[%s9 + $0x268] sm:$0xff]
    %v609 = vld [vmem:[%s9 + $0x270] sm:$0xff]
    %v610 = vld [vmem:[%s9 + $0x278] sm:$0xff]
    %v611 = vld [vmem:[%s9 + $0x280] sm:$0xff]
    %v612 = vld [vmem:[%s9 + $0x288] sm:$0xff]
    %v613 = vld [vmem:[%s9 + $0x290] sm:$0xff]
    %v614 = vld [vmem:[%s9 + $0x298] sm:$0xff]
    %v615 = vld [vmem:[%s9 + $0x2a0] sm:$0xff]
    %v616 = vld [vmem:[%s9 + $0x2a8] sm:$0xff]
    %v617 = vld [vmem:[%s9 + $0x2b0] sm:$0xff]
    %v618 = vld [vmem:[%s9 + $0x2b8] sm:$0xff]
    %v619 = vld [vmem:[%s9 + $0x2c0] sm:$0xff]
    %v620 = vld [vmem:[%s9 + $0x2c8] sm:$0xff]
    %v621 = vld [vmem:[%s9 + $0x2d0] sm:$0xff]
    %v622 = vld [vmem:[%s9 + $0x2d8] sm:$0xff]
    %v623 = vld [vmem:[%s9 + $0x2e0] sm:$0xff]
    %v624 = vld [vmem:[%s9 + $0x2e8] sm:$0xff]
    %v625 = vld [vmem:[%s9 + $0x2f0] sm:$0xff]
    %v626 = vld [vmem:[%s9 + $0x2f8] sm:$0xff]
    %v627 = vld [vmem:[%s9 + $0x300] sm:$0xff]
    %v628 = vld [vmem:[%s9 + $0x308] sm:$0xff]
    %v629 = vld [vmem:[%s9 + $0x310] sm:$0xff]
    %v630 = vld [vmem:[%s9 + $0x318] sm:$0xff]
    %v631 = vld [vmem:[%s9 + $0x320] sm:$0xff]
    %v632 = vld [vmem:[%s9 + $0x328] sm:$0xff]
    %v633 = vld [vmem:[%s9 + $0x330] sm:$0xff]
    %v634 = vld [vmem:[%s9 + $0x338] sm:$0xff]
    %v635 = vld [vmem:[%s9 + $0x340] sm:$0xff]
    %v636 = vld [vmem:[%s9 + $0x348] sm:$0xff]
    %v637 = vld [vmem:[%s9 + $0x350] sm:$0xff]
    %v638 = vld [vmem:[%s9 + $0x358] sm:$0xff]
    %v639 = vld [vmem:[%s9 + $0x360] sm:$0xff]
    %v640 = vld [vmem:[%s9 + $0x368] sm:$0xff]
    %v641 = vld [vmem:[%s9 + $0x370] sm:$0xff]
    %v642 = vld [vmem:[%s9 + $0x378] sm:$0xff]
    %v643 = vld [vmem:[%s9 + $0x380] sm:$0xff]
    %v644 = vld [vmem:[%s9 + $0x388] sm:$0xff]
    %v645 = vld [vmem:[%s9 + $0x390] sm:$0xff]
    %v646 = vld [vmem:[%s9 + $0x398] sm:$0xff]
    %v647 = vld [vmem:[%s9 + $0x3a0] sm:$0xff]
    %v648 = vld [vmem:[%s9 + $0x3a8] sm:$0xff]
    %v649 = vld [vmem:[%s9 + $0x3b0] sm:$0xff]
    %v650 = vld [vmem:[%s9 + $0x3b8] sm:$0xff]
    %v651 = vld [vmem:[%s9 + $0x3c0] sm:$0xff]
    %v652 = vld [vmem:[%s9 + $0x3c8] sm:$0xff]
    %v653 = vld [vmem:[%s9 + $0x3d0] sm:$0xff]
    %v654 = vld [vmem:[%s9 + $0x3d8] sm:$0xff]
    %v655 = vld [vmem:[%s9 + $0x3e0] sm:$0xff]
    %v656 = vld [vmem:[%s9 + $0x3e8] sm:$0xff]
    %v657 = vld [vmem:[%s9 + $0x3f0] sm:$0xff]
    %v658 = vld [vmem:[%s9 + $0x3f8] sm:$0xff]
    %v659 = vpack.c.bf16 %v529, %v529
    %v660 = vpack.c.bf16 %v530, %v530
    %v661 = vpack.c.bf16 %v535, %v531
    %v662 = vpack.c.bf16 %v536, %v532
    %v663 = vpack.c.bf16 %v537, %v533
    %v664 = vpack.c.bf16 %v538, %v534
    %v665 = vpack.c.bf16 %v543, %v539
    %v666 = vpack.c.bf16 %v544, %v540
    %v667 = vpack.c.bf16 %v545, %v541
    %v668 = vpack.c.bf16 %v546, %v542
    %v669 = vpack.c.bf16 %v551, %v547
    %v670 = vpack.c.bf16 %v552, %v548
    %v671 = vpack.c.bf16 %v553, %v549
    %v672 = vpack.c.bf16 %v554, %v550
    %v673 = vpack.c.bf16 %v559, %v555
    %v674 = vpack.c.bf16 %v560, %v556
    %v675 = vpack.c.bf16 %v561, %v557
    %v676 = vpack.c.bf16 %v562, %v558
    %v677 = vpack.c.bf16 %v567, %v563
    %v678 = vpack.c.bf16 %v568, %v564
    %v679 = vpack.c.bf16 %v569, %v565
    %v680 = vpack.c.bf16 %v570, %v566
    %v681 = vpack.c.bf16 %v575, %v571
    %v682 = vpack.c.bf16 %v576, %v572
    %v683 = vpack.c.bf16 %v577, %v573
    %v684 = vpack.c.bf16 %v578, %v574
    %v685 = vpack.c.bf16 %v583, %v579
    %v686 = vpack.c.bf16 %v584, %v580
    %v687 = vpack.c.bf16 %v585, %v581
    %v688 = vpack.c.bf16 %v586, %v582
    %v689 = vpack.c.bf16 %v591, %v587
    %v690 = vpack.c.bf16 %v592, %v588
    %v691 = vpack.c.bf16 %v593, %v589
    %v692 = vpack.c.bf16 %v594, %v590
    %v693 = vpack.c.bf16 %v599, %v595
    %v694 = vpack.c.bf16 %v600, %v596
    %v695 = vpack.c.bf16 %v601, %v597
    %v696 = vpack.c.bf16 %v602, %v598
    %v697 = vpack.c.bf16 %v607, %v603
    %v698 = vpack.c.bf16 %v608, %v604
    %v699 = vpack.c.bf16 %v609, %v605
    %v700 = vpack.c.bf16 %v610, %v606
    %v701 = vpack.c.bf16 %v615, %v611
    %v702 = vpack.c.bf16 %v616, %v612
    %v703 = vpack.c.bf16 %v617, %v613
    %v704 = vpack.c.bf16 %v618, %v614
    %v705 = vpack.c.bf16 %v623, %v619
    %v706 = vpack.c.bf16 %v624, %v620
    %v707 = vpack.c.bf16 %v625, %v621
    %v708 = vpack.c.bf16 %v626, %v622
    %v709 = vpack.c.bf16 %v631, %v627
    %v710 = vpack.c.bf16 %v632, %v628
    %v711 = vpack.c.bf16 %v633, %v629
    %v712 = vpack.c.bf16 %v634, %v630
    %v713 = vpack.c.bf16 %v639, %v635
    %v714 = vpack.c.bf16 %v640, %v636
    %v715 = vpack.c.bf16 %v641, %v637
    %v716 = vpack.c.bf16 %v642, %v638
    %v717 = vpack.c.bf16 %v647, %v643
    %v718 = vpack.c.bf16 %v648, %v644
    %v719 = vpack.c.bf16 %v649, %v645
    %v720 = vpack.c.bf16 %v650, %v646
    %v721 = vpack.c.bf16 %v655, %v651
    %v722 = vpack.c.bf16 %v656, %v652
    %v723 = vpack.c.bf16 %v657, %v653
    %v724 = vpack.c.bf16 %v658, %v654
    %v725 = vld [vmem:[#allocation5] sm:$0xf]
    %v727 = vlaneseq
    %v728 = vshrl.u32 %v727, 7
    %v729 = vsub.s32 0, %v728
    %v730 = vrot.slane %v725, %v729
    %v731 = vlaneseq
    %v732 = vshrl.u32 %v731, 7
    %v733 = vsub.s32 1, %v732
    %v734 = vrot.slane %v725, %v733
    %v735 = vlaneseq
    %v736 = vshrl.u32 %v735, 7
    %v737 = vsub.s32 2, %v736
    %v738 = vrot.slane %v725, %v737
    %v739 = vlaneseq
    %v740 = vshrl.u32 %v739, 7
    %v741 = vsub.s32 3, %v740
    %v742 = vrot.slane %v725, %v741
    %747 = vmatprep.subr.bf16.mxu0 %v690
    %748 = vmatpush1.bf16.msra.mxu0 %v689
    %749 = vmatprep.subr.bf16.mxu0 %v686
    %750 = vmatpush1.bf16.msra.mxu0 %v685
    %751 = vmatprep.subr.bf16.mxu0 %v682
    %752 = vmatpush1.bf16.msra.mxu0 %v681
    %753 = vmatprep.subr.bf16.mxu0 %v678
    %754 = vmatpush1.bf16.msra.mxu0 %v677
    %755 = vmatprep.subr.bf16.mxu0 %v674
    %756 = vmatpush1.bf16.msra.mxu0 %v673
    %757 = vmatprep.subr.bf16.mxu0 %v670
    %758 = vmatpush1.bf16.msra.mxu0 %v669
    %759 = vmatprep.subr.bf16.mxu0 %v666
    %760 = vmatpush1.bf16.msra.mxu0 %v665
    %761 = vmatprep.subr.bf16.mxu0 %v662
    %762 = vmatpush1.bf16.msra.mxu0 %v661
    %763 = vmatprep.subr.bf16.mxu0 %v722
    %764 = vmatpush2.bf16.msra.mxu0 %v721
    %765 = vmatprep.subr.bf16.mxu0 %v718
    %766 = vmatpush2.bf16.msra.mxu0 %v717
    %767 = vmatprep.subr.bf16.mxu0 %v714
    %768 = vmatpush2.bf16.msra.mxu0 %v713
    %769 = vmatprep.subr.bf16.mxu0 %v710
    %770 = vmatpush2.bf16.msra.mxu0 %v709
    %771 = vmatprep.subr.bf16.mxu0 %v706
    %772 = vmatpush2.bf16.msra.mxu0 %v705
    %773 = vmatprep.subr.bf16.mxu0 %v702
    %774 = vmatpush2.bf16.msra.mxu0 %v701
    %775 = vmatprep.subr.bf16.mxu0 %v698
    %776 = vmatpush2.bf16.msra.mxu0 %v697
    %777 = vmatprep.subr.bf16.mxu0 %v694
    %778 = vmatpush2.bf16.msra.mxu0 %v693
    %779 = vmatprep.mubr.bf16.mxu0 %v660
    %780 = vmatmul.mubr.bf16.gmra.mxu0 %v659
    %v781 = vpop.f32.mrf.mxu0
    %v782 = vadd.f32 %v730, %v781
    %v783 = vpop.f32.mrf.mxu0
    %v784 = vadd.f32 %v734, %v783
    %v785 = vpop.f32.mrf.mxu0
    %v786 = vpop.f32.mrf.mxu0
    %787 = vdwg.mxu0
    %788 = vmatprep.subr.bf16.mxu0 %v692
    %789 = vmatpush1.bf16.msra.mxu0 %v691
    %790 = vmatprep.subr.bf16.mxu0 %v688
    %791 = vmatpush1.bf16.msra.mxu0 %v687
    %792 = vmatprep.subr.bf16.mxu0 %v684
    %793 = vmatpush1.bf16.msra.mxu0 %v683
    %794 = vmatprep.subr.bf16.mxu0 %v680
    %795 = vmatpush1.bf16.msra.mxu0 %v679
    %796 = vmatprep.subr.bf16.mxu0 %v676
    %797 = vmatpush1.bf16.msra.mxu0 %v675
    %798 = vmatprep.subr.bf16.mxu0 %v672
    %799 = vmatpush1.bf16.msra.mxu0 %v671
    %800 = vmatprep.subr.bf16.mxu0 %v668
    %801 = vmatpush1.bf16.msra.mxu0 %v667
    %802 = vmatprep.subr.bf16.mxu0 %v664
    %803 = vmatpush1.bf16.msra.mxu0 %v663
    %804 = vmatprep.subr.bf16.mxu0 %v724
    %805 = vmatpush2.bf16.msra.mxu0 %v723
    %806 = vmatprep.subr.bf16.mxu0 %v720
    %807 = vmatpush2.bf16.msra.mxu0 %v719
    %808 = vmatprep.subr.bf16.mxu0 %v716
    %809 = vmatpush2.bf16.msra.mxu0 %v715
    %810 = vmatprep.subr.bf16.mxu0 %v712
    %811 = vmatpush2.bf16.msra.mxu0 %v711
    %812 = vmatprep.subr.bf16.mxu0 %v708
    %813 = vmatpush2.bf16.msra.mxu0 %v707
    %814 = vmatprep.subr.bf16.mxu0 %v704
    %815 = vmatpush2.bf16.msra.mxu0 %v703
    %816 = vmatprep.subr.bf16.mxu0 %v700
    %817 = vmatpush2.bf16.msra.mxu0 %v699
    %818 = vmatprep.subr.bf16.mxu0 %v696
    %819 = vmatpush2.bf16.msra.mxu0 %v695
    %820 = vmatprep.mubr.bf16.mxu0 %v660
    %821 = vmatmul.mubr.bf16.gmra.mxu0 %v659
    %v822 = vpop.f32.mrf.mxu0
    %v823 = vadd.f32 %v738, %v822
    %v824 = vpop.f32.mrf.mxu0
    %v825 = vadd.f32 %v742, %v824
    %v826 = vpop.f32.mrf.mxu0
    %v827 = vpop.f32.mrf.mxu0
    %828 = vdwg.mxu0
    %v829 = vmax.f32 %v782, 0.0
    %v830 = vmax.f32 %v784, 0.0
    %v831 = vmax.f32 %v823, 0.0
    %v832 = vmax.f32 %v825, 0.0
    %v833 = vld [vmem:[#allocation7] sm:$0xff]
    %v834 = vld [vmem:[#allocation7 + $0x8] sm:$0xff]
    %v835 = vld [vmem:[#allocation7 + $0x10] sm:$0xff]
    %v836 = vld [vmem:[#allocation7 + $0x18] sm:$0xff]
    %v837 = vld [vmem:[#allocation7 + $0x20] sm:$0xff]
    %v838 = vld [vmem:[#allocation7 + $0x28] sm:$0xff]
    %v839 = vld [vmem:[#allocation7 + $0x30] sm:$0xff]
    %v840 = vld [vmem:[#allocation7 + $0x38] sm:$0xff]
    %v841 = vld [vmem:[#allocation7 + $0x40] sm:$0xff]
    %v842 = vld [vmem:[#allocation7 + $0x48] sm:$0xff]
    %v843 = vld [vmem:[#allocation7 + $0x50] sm:$0xff]
    %v844 = vld [vmem:[#allocation7 + $0x58] sm:$0xff]
    %v845 = vld [vmem:[#allocation7 + $0x60] sm:$0xff]
    %v846 = vld [vmem:[#allocation7 + $0x68] sm:$0xff]
    %v847 = vld [vmem:[#allocation7 + $0x70] sm:$0xff]
    %v848 = vld [vmem:[#allocation7 + $0x78] sm:$0xff]
    %v849 = vld [vmem:[#allocation7 + $0x80] sm:$0xff]
    %v850 = vld [vmem:[#allocation7 + $0x88] sm:$0xff]
    %v851 = vld [vmem:[#allocation7 + $0x90] sm:$0xff]
    %v852 = vld [vmem:[#allocation7 + $0x98] sm:$0xff]
    %v853 = vld [vmem:[#allocation7 + $0xa0] sm:$0xff]
    %v854 = vld [vmem:[#allocation7 + $0xa8] sm:$0xff]
    %v855 = vld [vmem:[#allocation7 + $0xb0] sm:$0xff]
    %v856 = vld [vmem:[#allocation7 + $0xb8] sm:$0xff]
    %v857 = vld [vmem:[#allocation7 + $0xc0] sm:$0xff]
    %v858 = vld [vmem:[#allocation7 + $0xc8] sm:$0xff]
    %v859 = vld [vmem:[#allocation7 + $0xd0] sm:$0xff]
    %v860 = vld [vmem:[#allocation7 + $0xd8] sm:$0xff]
    %v861 = vld [vmem:[#allocation7 + $0xe0] sm:$0xff]
    %v862 = vld [vmem:[#allocation7 + $0xe8] sm:$0xff]
    %v863 = vld [vmem:[#allocation7 + $0xf0] sm:$0xff]
    %v864 = vld [vmem:[#allocation7 + $0xf8] sm:$0xff]
    %v865 = vld [vmem:[#allocation7 + $0x100] sm:$0xff]
    %v866 = vld [vmem:[#allocation7 + $0x108] sm:$0xff]
    %v867 = vld [vmem:[#allocation7 + $0x110] sm:$0xff]
    %v868 = vld [vmem:[#allocation7 + $0x118] sm:$0xff]
    %v869 = vld [vmem:[#allocation7 + $0x120] sm:$0xff]
    %v870 = vld [vmem:[#allocation7 + $0x128] sm:$0xff]
    %v871 = vld [vmem:[#allocation7 + $0x130] sm:$0xff]
    %v872 = vld [vmem:[#allocation7 + $0x138] sm:$0xff]
    %v873 = vld [vmem:[#allocation7 + $0x140] sm:$0xff]
    %v874 = vld [vmem:[#allocation7 + $0x148] sm:$0xff]
    %v875 = vld [vmem:[#allocation7 + $0x150] sm:$0xff]
    %v876 = vld [vmem:[#allocation7 + $0x158] sm:$0xff]
    %v877 = vld [vmem:[#allocation7 + $0x160] sm:$0xff]
    %v878 = vld [vmem:[#allocation7 + $0x168] sm:$0xff]
    %v879 = vld [vmem:[#allocation7 + $0x170] sm:$0xff]
    %v880 = vld [vmem:[#allocation7 + $0x178] sm:$0xff]
    %v881 = vld [vmem:[#allocation7 + $0x180] sm:$0xff]
    %v882 = vld [vmem:[#allocation7 + $0x188] sm:$0xff]
    %v883 = vld [vmem:[#allocation7 + $0x190] sm:$0xff]
    %v884 = vld [vmem:[#allocation7 + $0x198] sm:$0xff]
    %v885 = vld [vmem:[#allocation7 + $0x1a0] sm:$0xff]
    %v886 = vld [vmem:[#allocation7 + $0x1a8] sm:$0xff]
    %v887 = vld [vmem:[#allocation7 + $0x1b0] sm:$0xff]
    %v888 = vld [vmem:[#allocation7 + $0x1b8] sm:$0xff]
    %v889 = vld [vmem:[#allocation7 + $0x1c0] sm:$0xff]
    %v890 = vld [vmem:[#allocation7 + $0x1c8] sm:$0xff]
    %v891 = vld [vmem:[#allocation7 + $0x1d0] sm:$0xff]
    %v892 = vld [vmem:[#allocation7 + $0x1d8] sm:$0xff]
    %v893 = vld [vmem:[#allocation7 + $0x1e0] sm:$0xff]
    %v894 = vld [vmem:[#allocation7 + $0x1e8] sm:$0xff]
    %v895 = vld [vmem:[#allocation7 + $0x1f0] sm:$0xff]
    %v896 = vld [vmem:[#allocation7 + $0x1f8] sm:$0xff]
    %v897 = vld [vmem:[#allocation7 + $0x200] sm:$0xff]
    %v898 = vld [vmem:[#allocation7 + $0x208] sm:$0xff]
    %v899 = vld [vmem:[#allocation7 + $0x210] sm:$0xff]
    %v900 = vld [vmem:[#allocation7 + $0x218] sm:$0xff]
    %v901 = vld [vmem:[#allocation7 + $0x220] sm:$0xff]
    %v902 = vld [vmem:[#allocation7 + $0x228] sm:$0xff]
    %v903 = vld [vmem:[#allocation7 + $0x230] sm:$0xff]
    %v904 = vld [vmem:[#allocation7 + $0x238] sm:$0xff]
    %v905 = vld [vmem:[#allocation7 + $0x240] sm:$0xff]
    %v906 = vld [vmem:[#allocation7 + $0x248] sm:$0xff]
    %v907 = vld [vmem:[#allocation7 + $0x250] sm:$0xff]
    %v908 = vld [vmem:[#allocation7 + $0x258] sm:$0xff]
    %v909 = vld [vmem:[#allocation7 + $0x260] sm:$0xff]
    %v910 = vld [vmem:[#allocation7 + $0x268] sm:$0xff]
    %v911 = vld [vmem:[#allocation7 + $0x270] sm:$0xff]
    %v912 = vld [vmem:[#allocation7 + $0x278] sm:$0xff]
    %v913 = vld [vmem:[#allocation7 + $0x280] sm:$0xff]
    %v914 = vld [vmem:[#allocation7 + $0x288] sm:$0xff]
    %v915 = vld [vmem:[#allocation7 + $0x290] sm:$0xff]
    %v916 = vld [vmem:[#allocation7 + $0x298] sm:$0xff]
    %v917 = vld [vmem:[#allocation7 + $0x2a0] sm:$0xff]
    %v918 = vld [vmem:[#allocation7 + $0x2a8] sm:$0xff]
    %v919 = vld [vmem:[#allocation7 + $0x2b0] sm:$0xff]
    %v920 = vld [vmem:[#allocation7 + $0x2b8] sm:$0xff]
    %v921 = vld [vmem:[#allocation7 + $0x2c0] sm:$0xff]
    %v922 = vld [vmem:[#allocation7 + $0x2c8] sm:$0xff]
    %v923 = vld [vmem:[#allocation7 + $0x2d0] sm:$0xff]
    %v924 = vld [vmem:[#allocation7 + $0x2d8] sm:$0xff]
    %v925 = vld [vmem:[#allocation7 + $0x2e0] sm:$0xff]
    %v926 = vld [vmem:[#allocation7 + $0x2e8] sm:$0xff]
    %v927 = vld [vmem:[#allocation7 + $0x2f0] sm:$0xff]
    %v928 = vld [vmem:[#allocation7 + $0x2f8] sm:$0xff]
    %v929 = vld [vmem:[#allocation7 + $0x300] sm:$0xff]
    %v930 = vld [vmem:[#allocation7 + $0x308] sm:$0xff]
    %v931 = vld [vmem:[#allocation7 + $0x310] sm:$0xff]
    %v932 = vld [vmem:[#allocation7 + $0x318] sm:$0xff]
    %v933 = vld [vmem:[#allocation7 + $0x320] sm:$0xff]
    %v934 = vld [vmem:[#allocation7 + $0x328] sm:$0xff]
    %v935 = vld [vmem:[#allocation7 + $0x330] sm:$0xff]
    %v936 = vld [vmem:[#allocation7 + $0x338] sm:$0xff]
    %v937 = vld [vmem:[#allocation7 + $0x340] sm:$0xff]
    %v938 = vld [vmem:[#allocation7 + $0x348] sm:$0xff]
    %v939 = vld [vmem:[#allocation7 + $0x350] sm:$0xff]
    %v940 = vld [vmem:[#allocation7 + $0x358] sm:$0xff]
    %v941 = vld [vmem:[#allocation7 + $0x360] sm:$0xff]
    %v942 = vld [vmem:[#allocation7 + $0x368] sm:$0xff]
    %v943 = vld [vmem:[#allocation7 + $0x370] sm:$0xff]
    %v944 = vld [vmem:[#allocation7 + $0x378] sm:$0xff]
    %v945 = vld [vmem:[#allocation7 + $0x380] sm:$0xff]
    %v946 = vld [vmem:[#allocation7 + $0x388] sm:$0xff]
    %v947 = vld [vmem:[#allocation7 + $0x390] sm:$0xff]
    %v948 = vld [vmem:[#allocation7 + $0x398] sm:$0xff]
    %v949 = vld [vmem:[#allocation7 + $0x3a0] sm:$0xff]
    %v950 = vld [vmem:[#allocation7 + $0x3a8] sm:$0xff]
    %v951 = vld [vmem:[#allocation7 + $0x3b0] sm:$0xff]
    %v952 = vld [vmem:[#allocation7 + $0x3b8] sm:$0xff]
    %v953 = vld [vmem:[#allocation7 + $0x3c0] sm:$0xff]
    %v954 = vld [vmem:[#allocation7 + $0x3c8] sm:$0xff]
    %v955 = vld [vmem:[#allocation7 + $0x3d0] sm:$0xff]
    %v956 = vld [vmem:[#allocation7 + $0x3d8] sm:$0xff]
    %v957 = vld [vmem:[#allocation7 + $0x3e0] sm:$0xff]
    %v958 = vld [vmem:[#allocation7 + $0x3e8] sm:$0xff]
    %v959 = vld [vmem:[#allocation7 + $0x3f0] sm:$0xff]
    %v960 = vld [vmem:[#allocation7 + $0x3f8] sm:$0xff]
    %v961 = vpack.c.bf16 %v829, %v829
    %v962 = vpack.c.bf16 %v830, %v830
    %v963 = vpack.c.bf16 %v831, %v831
    %v964 = vpack.c.bf16 %v832, %v832
    %v965 = vpack.c.bf16 %v835, %v833
    %v966 = vpack.c.bf16 %v836, %v834
    %v967 = vpack.c.bf16 %v839, %v837
    %v968 = vpack.c.bf16 %v840, %v838
    %v969 = vpack.c.bf16 %v843, %v841
    %v970 = vpack.c.bf16 %v844, %v842
    %v971 = vpack.c.bf16 %v847, %v845
    %v972 = vpack.c.bf16 %v848, %v846
    %v973 = vpack.c.bf16 %v851, %v849
    %v974 = vpack.c.bf16 %v852, %v850
    %v975 = vpack.c.bf16 %v855, %v853
    %v976 = vpack.c.bf16 %v856, %v854
    %v977 = vpack.c.bf16 %v859, %v857
    %v978 = vpack.c.bf16 %v860, %v858
    %v979 = vpack.c.bf16 %v863, %v861
    %v980 = vpack.c.bf16 %v864, %v862
    %v981 = vpack.c.bf16 %v867, %v865
    %v982 = vpack.c.bf16 %v868, %v866
    %v983 = vpack.c.bf16 %v871, %v869
    %v984 = vpack.c.bf16 %v872, %v870
    %v985 = vpack.c.bf16 %v875, %v873
    %v986 = vpack.c.bf16 %v876, %v874
    %v987 = vpack.c.bf16 %v879, %v877
    %v988 = vpack.c.bf16 %v880, %v878
    %v989 = vpack.c.bf16 %v883, %v881
    %v990 = vpack.c.bf16 %v884, %v882
    %v991 = vpack.c.bf16 %v887, %v885
    %v992 = vpack.c.bf16 %v888, %v886
    %v993 = vpack.c.bf16 %v891, %v889
    %v994 = vpack.c.bf16 %v892, %v890
    %v995 = vpack.c.bf16 %v895, %v893
    %v996 = vpack.c.bf16 %v896, %v894
    %v997 = vpack.c.bf16 %v899, %v897
    %v998 = vpack.c.bf16 %v900, %v898
    %v999 = vpack.c.bf16 %v903, %v901
    %v1000 = vpack.c.bf16 %v904, %v902
    %v1001 = vpack.c.bf16 %v907, %v905
    %v1002 = vpack.c.bf16 %v908, %v906
    %v1003 = vpack.c.bf16 %v911, %v909
    %v1004 = vpack.c.bf16 %v912, %v910
    %v1005 = vpack.c.bf16 %v915, %v913
    %v1006 = vpack.c.bf16 %v916, %v914
    %v1007 = vpack.c.bf16 %v919, %v917
    %v1008 = vpack.c.bf16 %v920, %v918
    %v1009 = vpack.c.bf16 %v923, %v921
    %v1010 = vpack.c.bf16 %v924, %v922
    %v1011 = vpack.c.bf16 %v927, %v925
    %v1012 = vpack.c.bf16 %v928, %v926
    %v1013 = vpack.c.bf16 %v931, %v929
    %v1014 = vpack.c.bf16 %v932, %v930
    %v1015 = vpack.c.bf16 %v935, %v933
    %v1016 = vpack.c.bf16 %v936, %v934
    %v1017 = vpack.c.bf16 %v939, %v937
    %v1018 = vpack.c.bf16 %v940, %v938
    %v1019 = vpack.c.bf16 %v943, %v941
    %v1020 = vpack.c.bf16 %v944, %v942
    %v1021 = vpack.c.bf16 %v947, %v945
    %v1022 = vpack.c.bf16 %v948, %v946
    %v1023 = vpack.c.bf16 %v951, %v949
    %v1024 = vpack.c.bf16 %v952, %v950
    %v1025 = vpack.c.bf16 %v955, %v953
    %v1026 = vpack.c.bf16 %v956, %v954
    %v1027 = vpack.c.bf16 %v959, %v957
    %v1028 = vpack.c.bf16 %v960, %v958
    %v1029 = vld [vmem:[#allocation8] sm:$0x3]
    %v1031 = vlaneseq
    %v1032 = vshrl.u32 %v1031, 7
    %v1033 = vsub.s32 0, %v1032
    %v1034 = vrot.slane %v1029, %v1033
    %v1035 = vlaneseq
    %v1036 = vshrl.u32 %v1035, 7
    %v1037 = vsub.s32 1, %v1036
    %v1038 = vrot.slane %v1029, %v1037
    %1041 = vmatprep.subr.bf16.mxu0 %v980
    %1042 = vmatpush1.bf16.msra.mxu0 %v979
    %1043 = vmatprep.subr.bf16.mxu0 %v978
    %1044 = vmatpush1.bf16.msra.mxu0 %v977
    %1045 = vmatprep.subr.bf16.mxu0 %v976
    %1046 = vmatpush1.bf16.msra.mxu0 %v975
    %1047 = vmatprep.subr.bf16.mxu0 %v974
    %1048 = vmatpush1.bf16.msra.mxu0 %v973
    %1049 = vmatprep.subr.bf16.mxu0 %v972
    %1050 = vmatpush1.bf16.msra.mxu0 %v971
    %1051 = vmatprep.subr.bf16.mxu0 %v970
    %1052 = vmatpush1.bf16.msra.mxu0 %v969
    %1053 = vmatprep.subr.bf16.mxu0 %v968
    %1054 = vmatpush1.bf16.msra.mxu0 %v967
    %1055 = vmatprep.subr.bf16.mxu0 %v966
    %1056 = vmatpush1.bf16.msra.mxu0 %v965
    %1057 = vmatprep.subr.bf16.mxu0 %v996
    %1058 = vmatpush2.bf16.msra.mxu0 %v995
    %1059 = vmatprep.subr.bf16.mxu0 %v994
    %1060 = vmatpush2.bf16.msra.mxu0 %v993
    %1061 = vmatprep.subr.bf16.mxu0 %v992
    %1062 = vmatpush2.bf16.msra.mxu0 %v991
    %1063 = vmatprep.subr.bf16.mxu0 %v990
    %1064 = vmatpush2.bf16.msra.mxu0 %v989
    %1065 = vmatprep.subr.bf16.mxu0 %v988
    %1066 = vmatpush2.bf16.msra.mxu0 %v987
    %1067 = vmatprep.subr.bf16.mxu0 %v986
    %1068 = vmatpush2.bf16.msra.mxu0 %v985
    %1069 = vmatprep.subr.bf16.mxu0 %v984
    %1070 = vmatpush2.bf16.msra.mxu0 %v983
    %1071 = vmatprep.subr.bf16.mxu0 %v982
    %1072 = vmatpush2.bf16.msra.mxu0 %v981
    %1073 = vmatprep.mubr.bf16.mxu0 %v962
    %1074 = vmatmul.mubr.bf16.gmra.mxu0 %v961
    %v1075 = vpop.f32.mrf.mxu0
    %v1076 = vadd.f32 %v1034, %v1075
    %v1077 = vpop.f32.mrf.mxu0
    %v1078 = vadd.f32 %v1038, %v1077
    %v1079 = vpop.f32.mrf.mxu0
    %v1080 = vpop.f32.mrf.mxu0
    %1081 = vdwg.mxu0
    %1082 = vmatprep.subr.bf16.mxu0 %v1012
    %1083 = vmatpush1.bf16.msra.mxu0 %v1011
    %1084 = vmatprep.subr.bf16.mxu0 %v1010
    %1085 = vmatpush1.bf16.msra.mxu0 %v1009
    %1086 = vmatprep.subr.bf16.mxu0 %v1008
    %1087 = vmatpush1.bf16.msra.mxu0 %v1007
    %1088 = vmatprep.subr.bf16.mxu0 %v1006
    %1089 = vmatpush1.bf16.msra.mxu0 %v1005
    %1090 = vmatprep.subr.bf16.mxu0 %v1004
    %1091 = vmatpush1.bf16.msra.mxu0 %v1003
    %1092 = vmatprep.subr.bf16.mxu0 %v1002
    %1093 = vmatpush1.bf16.msra.mxu0 %v1001
    %1094 = vmatprep.subr.bf16.mxu0 %v1000
    %1095 = vmatpush1.bf16.msra.mxu0 %v999
    %1096 = vmatprep.subr.bf16.mxu0 %v998
    %1097 = vmatpush1.bf16.msra.mxu0 %v997
    %1098 = vmatprep.subr.bf16.mxu0 %v1028
    %1099 = vmatpush2.bf16.msra.mxu0 %v1027
    %1100 = vmatprep.subr.bf16.mxu0 %v1026
    %1101 = vmatpush2.bf16.msra.mxu0 %v1025
    %1102 = vmatprep.subr.bf16.mxu0 %v1024
    %1103 = vmatpush2.bf16.msra.mxu0 %v1023
    %1104 = vmatprep.subr.bf16.mxu0 %v1022
    %1105 = vmatpush2.bf16.msra.mxu0 %v1021
    %1106 = vmatprep.subr.bf16.mxu0 %v1020
    %1107 = vmatpush2.bf16.msra.mxu0 %v1019
    %1108 = vmatprep.subr.bf16.mxu0 %v1018
    %1109 = vmatpush2.bf16.msra.mxu0 %v1017
    %1110 = vmatprep.subr.bf16.mxu0 %v1016
    %1111 = vmatpush2.bf16.msra.mxu0 %v1015
    %1112 = vmatprep.subr.bf16.mxu0 %v1014
    %1113 = vmatpush2.bf16.msra.mxu0 %v1013
    %1114 = vmatprep.mubr.bf16.mxu0 %v964
    %1115 = vmatmul.mubr.bf16.gmra.mxu0 %v963
    %v1116 = vpop.f32.mrf.mxu0
    %v1117 = vadd.f32 %v1076, %v1116
    %v1118 = vpop.f32.mrf.mxu0
    %v1119 = vadd.f32 %v1078, %v1118
    %v1120 = vpop.f32.mrf.mxu0
    %v1121 = vpop.f32.mrf.mxu0
    %1122 = vdwg.mxu0
    %v1123 = vmax.f32 %v1117, 0.0
    %v1124 = vmax.f32 %v1119, 0.0
    %v1125 = vld [vmem:[%s17] sm:$0xff]
    %v1126 = vld [vmem:[%s17 + $0x8] sm:$0xff]
    %v1127 = vld [vmem:[%s17 + $0x10] sm:$0xff]
    %v1128 = vld [vmem:[%s17 + $0x18] sm:$0xff]
    %v1129 = vld [vmem:[%s17 + $0x20] sm:$0xff]
    %v1130 = vld [vmem:[%s17 + $0x28] sm:$0xff]
    %v1131 = vld [vmem:[%s17 + $0x30] sm:$0xff]
    %v1132 = vld [vmem:[%s17 + $0x38] sm:$0xff]
    %v1133 = vld [vmem:[%s17 + $0x40] sm:$0xff]
    %v1134 = vld [vmem:[%s17 + $0x48] sm:$0xff]
    %v1135 = vld [vmem:[%s17 + $0x50] sm:$0xff]
    %v1136 = vld [vmem:[%s17 + $0x58] sm:$0xff]
    %v1137 = vld [vmem:[%s17 + $0x60] sm:$0xff]
    %v1138 = vld [vmem:[%s17 + $0x68] sm:$0xff]
    %v1139 = vld [vmem:[%s17 + $0x70] sm:$0xff]
    %v1140 = vld [vmem:[%s17 + $0x78] sm:$0xff]
    %v1141 = vld [vmem:[%s17 + $0x80] sm:$0xff]
    %v1142 = vld [vmem:[%s17 + $0x88] sm:$0xff]
    %v1143 = vld [vmem:[%s17 + $0x90] sm:$0xff]
    %v1144 = vld [vmem:[%s17 + $0x98] sm:$0xff]
    %v1145 = vld [vmem:[%s17 + $0xa0] sm:$0xff]
    %v1146 = vld [vmem:[%s17 + $0xa8] sm:$0xff]
    %v1147 = vld [vmem:[%s17 + $0xb0] sm:$0xff]
    %v1148 = vld [vmem:[%s17 + $0xb8] sm:$0xff]
    %v1149 = vld [vmem:[%s17 + $0xc0] sm:$0xff]
    %v1150 = vld [vmem:[%s17 + $0xc8] sm:$0xff]
    %v1151 = vld [vmem:[%s17 + $0xd0] sm:$0xff]
    %v1152 = vld [vmem:[%s17 + $0xd8] sm:$0xff]
    %v1153 = vld [vmem:[%s17 + $0xe0] sm:$0xff]
    %v1154 = vld [vmem:[%s17 + $0xe8] sm:$0xff]
    %v1155 = vld [vmem:[%s17 + $0xf0] sm:$0xff]
    %v1156 = vld [vmem:[%s17 + $0xf8] sm:$0xff]
    %v1157 = vpack.c.bf16 %v1123, %v1123
    %v1158 = vpack.c.bf16 %v1124, %v1124
    %v1159 = vpack.c.bf16 %v1126, %v1125
    %v1160 = vpack.c.bf16 %v1128, %v1127
    %v1161 = vpack.c.bf16 %v1130, %v1129
    %v1162 = vpack.c.bf16 %v1132, %v1131
    %v1163 = vpack.c.bf16 %v1134, %v1133
    %v1164 = vpack.c.bf16 %v1136, %v1135
    %v1165 = vpack.c.bf16 %v1138, %v1137
    %v1166 = vpack.c.bf16 %v1140, %v1139
    %v1167 = vpack.c.bf16 %v1142, %v1141
    %v1168 = vpack.c.bf16 %v1144, %v1143
    %v1169 = vpack.c.bf16 %v1146, %v1145
    %v1170 = vpack.c.bf16 %v1148, %v1147
    %v1171 = vpack.c.bf16 %v1150, %v1149
    %v1172 = vpack.c.bf16 %v1152, %v1151
    %v1173 = vpack.c.bf16 %v1154, %v1153
    %v1174 = vpack.c.bf16 %v1156, %v1155
    %v1175 = vld [vmem:[%s19] sm:$0x1]
    %v1177 = vlaneseq
    %v1178 = vshrl.u32 %v1177, 7
    %v1179 = vsub.s32 0, %v1178
    %v1180 = vrot.slane %v1175, %v1179
    %1182 = vmatprep.subr.bf16.mxu0 0
    %1183 = vmatpush1.bf16.msra.mxu0 %v1166
    %1184 = vmatprep.subr.bf16.mxu0 0
    %1185 = vmatpush1.bf16.msra.mxu0 %v1165
    %1186 = vmatprep.subr.bf16.mxu0 0
    %1187 = vmatpush1.bf16.msra.mxu0 %v1164
    %1188 = vmatprep.subr.bf16.mxu0 0
    %1189 = vmatpush1.bf16.msra.mxu0 %v1163
    %1190 = vmatprep.subr.bf16.mxu0 0
    %1191 = vmatpush1.bf16.msra.mxu0 %v1162
    %1192 = vmatprep.subr.bf16.mxu0 0
    %1193 = vmatpush1.bf16.msra.mxu0 %v1161
    %1194 = vmatprep.subr.bf16.mxu0 0
    %1195 = vmatpush1.bf16.msra.mxu0 %v1160
    %1196 = vmatprep.subr.bf16.mxu0 0
    %1197 = vmatpush1.bf16.msra.mxu0 %v1159
    %1198 = vmatprep.subr.bf16.mxu0 0
    %1199 = vmatpush2.bf16.msra.mxu0 %v1174
    %1200 = vmatprep.subr.bf16.mxu0 0
    %1201 = vmatpush2.bf16.msra.mxu0 %v1173
    %1202 = vmatprep.subr.bf16.mxu0 0
    %1203 = vmatpush2.bf16.msra.mxu0 %v1172
    %1204 = vmatprep.subr.bf16.mxu0 0
    %1205 = vmatpush2.bf16.msra.mxu0 %v1171
    %1206 = vmatprep.subr.bf16.mxu0 0
    %1207 = vmatpush2.bf16.msra.mxu0 %v1170
    %1208 = vmatprep.subr.bf16.mxu0 0
    %1209 = vmatpush2.bf16.msra.mxu0 %v1169
    %1210 = vmatprep.subr.bf16.mxu0 0
    %1211 = vmatpush2.bf16.msra.mxu0 %v1168
    %1212 = vmatprep.subr.bf16.mxu0 0
    %1213 = vmatpush2.bf16.msra.mxu0 %v1167
    %1214 = vmatprep.mubr.bf16.mxu0 %v1158
    %1215 = vmatmul.mubr.bf16.gmra.mxu0 %v1157
    %v1216 = vpop.f32.mrf.mxu0
    %v1217 = vadd.f32 %v1180, %v1216
    %v1218 = vpop.f32.mrf.mxu0
    %v1219 = vpop.f32.mrf.mxu0
    %v1220 = vpop.f32.mrf.mxu0
    %1221 = vdwg.mxu0
    %v1222 = vld [vmem:[%s21] sm:$0xff]
    %v1223 = vld [vmem:[%s21 + $0x8] sm:$0xff]
    %v1224 = vld [vmem:[%s21 + $0x10] sm:$0xff]
    %v1225 = vld [vmem:[%s21 + $0x18] sm:$0xff]
    %v1226 = vpack.c.bf16 %v458, %v458
    %v1227 = vpack.c.bf16 %v1222, %v1222
    %v1228 = vpack.c.bf16 %v1223, %v1223
    %v1229 = vpack.c.bf16 %v1224, %v1224
    %v1230 = vpack.c.bf16 %v1225, %v1225
    %v1231 = vld [vmem:[#allocation10] sm:$0xf]
    %v1233 = vlaneseq
    %v1234 = vshrl.u32 %v1233, 7
    %v1235 = vsub.s32 0, %v1234
    %v1236 = vrot.slane %v1231, %v1235
    %v1237 = vlaneseq
    %v1238 = vshrl.u32 %v1237, 7
    %v1239 = vsub.s32 1, %v1238
    %v1240 = vrot.slane %v1231, %v1239
    %v1241 = vlaneseq
    %v1242 = vshrl.u32 %v1241, 7
    %v1243 = vsub.s32 2, %v1242
    %v1244 = vrot.slane %v1231, %v1243
    %v1245 = vlaneseq
    %v1246 = vshrl.u32 %v1245, 7
    %v1247 = vsub.s32 3, %v1246
    %v1248 = vrot.slane %v1231, %v1247
    %vm1253 = vcmask 64512
    %v1255 = vsel %vm1253, %v1226, 0
    %vm1257 = vcmask 1043456
    %v1259 = vsel %vm1257, %v1227, 0
    %v1262 = vsel %vm1257, %v1228, 0
    %v1265 = vsel %vm1257, %v1229, 0
    %v1268 = vsel %vm1257, %v1230, 0
    %1270 = vmatprep.subr.bf16.mxu0 0
    %1271 = vmatpush1.bf16.msra.mxu0 0
    %1272 = vmatprep.subr.bf16.mxu0 0
    %1273 = vmatpush1.bf16.msra.mxu0 0
    %1274 = vmatprep.subr.bf16.mxu0 0
    %1275 = vmatpush1.bf16.msra.mxu0 0
    %1276 = vmatprep.subr.bf16.mxu0 0
    %1277 = vmatpush1.bf16.msra.mxu0 0
    %1278 = vmatprep.subr.bf16.mxu0 0
    %1279 = vmatpush1.bf16.msra.mxu0 0
    %1280 = vmatprep.subr.bf16.mxu0 0
    %1281 = vmatpush1.bf16.msra.mxu0 0
    %1282 = vmatprep.subr.bf16.mxu0 0
    %1283 = vmatpush1.bf16.msra.mxu0 0
    %1284 = vmatprep.subr.bf16.mxu0 %v1262
    %1285 = vmatpush1.bf16.msra.mxu0 %v1259
    %1286 = vmatprep.subr.bf16.mxu0 0
    %1287 = vmatpush2.bf16.msra.mxu0 0
    %1288 = vmatprep.subr.bf16.mxu0 0
    %1289 = vmatpush2.bf16.msra.mxu0 0
    %1290 = vmatprep.subr.bf16.mxu0 0
    %1291 = vmatpush2.bf16.msra.mxu0 0
    %1292 = vmatprep.subr.bf16.mxu0 0
    %1293 = vmatpush2.bf16.msra.mxu0 0
    %1294 = vmatprep.subr.bf16.mxu0 0
    %1295 = vmatpush2.bf16.msra.mxu0 0
    %1296 = vmatprep.subr.bf16.mxu0 0
    %1297 = vmatpush2.bf16.msra.mxu0 0
    %1298 = vmatprep.subr.bf16.mxu0 0
    %1299 = vmatpush2.bf16.msra.mxu0 0
    %1300 = vmatprep.subr.bf16.mxu0 0
    %1301 = vmatpush2.bf16.msra.mxu0 0
    %1302 = vmatprep.mubr.bf16.mxu0 0
    %1303 = vmatmul.mubr.bf16.gmra.mxu0 %v1255
    %v1304 = vpop.f32.mrf.mxu0
    %v1305 = vadd.f32 %v1236, %v1304
    %v1306 = vpop.f32.mrf.mxu0
    %v1307 = vadd.f32 %v1240, %v1306
    %v1308 = vpop.f32.mrf.mxu0
    %v1309 = vpop.f32.mrf.mxu0
    %1310 = vdwg.mxu0
    %1311 = vmatprep.subr.bf16.mxu0 0
    %1312 = vmatpush1.bf16.msra.mxu0 0
    %1313 = vmatprep.subr.bf16.mxu0 0
    %1314 = vmatpush1.bf16.msra.mxu0 0
    %1315 = vmatprep.subr.bf16.mxu0 0
    %1316 = vmatpush1.bf16.msra.mxu0 0
    %1317 = vmatprep.subr.bf16.mxu0 0
    %1318 = vmatpush1.bf16.msra.mxu0 0
    %1319 = vmatprep.subr.bf16.mxu0 0
    %1320 = vmatpush1.bf16.msra.mxu0 0
    %1321 = vmatprep.subr.bf16.mxu0 0
    %1322 = vmatpush1.bf16.msra.mxu0 0
    %1323 = vmatprep.subr.bf16.mxu0 0
    %1324 = vmatpush1.bf16.msra.mxu0 0
    %1325 = vmatprep.subr.bf16.mxu0 %v1268
    %1326 = vmatpush1.bf16.msra.mxu0 %v1265
    %1327 = vmatprep.subr.bf16.mxu0 0
    %1328 = vmatpush2.bf16.msra.mxu0 0
    %1329 = vmatprep.subr.bf16.mxu0 0
    %1330 = vmatpush2.bf16.msra.mxu0 0
    %1331 = vmatprep.subr.bf16.mxu0 0
    %1332 = vmatpush2.bf16.msra.mxu0 0
    %1333 = vmatprep.subr.bf16.mxu0 0
    %1334 = vmatpush2.bf16.msra.mxu0 0
    %1335 = vmatprep.subr.bf16.mxu0 0
    %1336 = vmatpush2.bf16.msra.mxu0 0
    %1337 = vmatprep.subr.bf16.mxu0 0
    %1338 = vmatpush2.bf16.msra.mxu0 0
    %1339 = vmatprep.subr.bf16.mxu0 0
    %1340 = vmatpush2.bf16.msra.mxu0 0
    %1341 = vmatprep.subr.bf16.mxu0 0
    %1342 = vmatpush2.bf16.msra.mxu0 0
    %1343 = vmatprep.mubr.bf16.mxu0 0
    %1344 = vmatmul.mubr.bf16.gmra.mxu0 %v1255
    %v1345 = vpop.f32.mrf.mxu0
    %v1346 = vadd.f32 %v1244, %v1345
    %v1347 = vpop.f32.mrf.mxu0
    %v1348 = vadd.f32 %v1248, %v1347
    %v1349 = vpop.f32.mrf.mxu0
    %v1350 = vpop.f32.mrf.mxu0
    %1351 = vdwg.mxu0
    %v1352 = vmax.f32 %v1305, 0.0
    %v1353 = vmax.f32 %v1307, 0.0
    %v1354 = vmax.f32 %v1346, 0.0
    %v1355 = vmax.f32 %v1348, 0.0
    %v1356 = vld [vmem:[#allocation11] sm:$0xff]
    %v1357 = vld [vmem:[#allocation11 + $0x8] sm:$0xff]
    %v1358 = vld [vmem:[#allocation11 + $0x10] sm:$0xff]
    %v1359 = vld [vmem:[#allocation11 + $0x18] sm:$0xff]
    %v1360 = vld [vmem:[#allocation11 + $0x20] sm:$0xff]
    %v1361 = vld [vmem:[#allocation11 + $0x28] sm:$0xff]
    %v1362 = vld [vmem:[#allocation11 + $0x30] sm:$0xff]
    %v1363 = vld [vmem:[#allocation11 + $0x38] sm:$0xff]
    %v1364 = vld [vmem:[#allocation11 + $0x40] sm:$0xff]
    %v1365 = vld [vmem:[#allocation11 + $0x48] sm:$0xff]
    %v1366 = vld [vmem:[#allocation11 + $0x50] sm:$0xff]
    %v1367 = vld [vmem:[#allocation11 + $0x58] sm:$0xff]
    %v1368 = vld [vmem:[#allocation11 + $0x60] sm:$0xff]
    %v1369 = vld [vmem:[#allocation11 + $0x68] sm:$0xff]
    %v1370 = vld [vmem:[#allocation11 + $0x70] sm:$0xff]
    %v1371 = vld [vmem:[#allocation11 + $0x78] sm:$0xff]
    %v1372 = vld [vmem:[#allocation11 + $0x80] sm:$0xff]
    %v1373 = vld [vmem:[#allocation11 + $0x88] sm:$0xff]
    %v1374 = vld [vmem:[#allocation11 + $0x90] sm:$0xff]
    %v1375 = vld [vmem:[#allocation11 + $0x98] sm:$0xff]
    %v1376 = vld [vmem:[#allocation11 + $0xa0] sm:$0xff]
    %v1377 = vld [vmem:[#allocation11 + $0xa8] sm:$0xff]
    %v1378 = vld [vmem:[#allocation11 + $0xb0] sm:$0xff]
    %v1379 = vld [vmem:[#allocation11 + $0xb8] sm:$0xff]
    %v1380 = vld [vmem:[#allocation11 + $0xc0] sm:$0xff]
    %v1381 = vld [vmem:[#allocation11 + $0xc8] sm:$0xff]
    %v1382 = vld [vmem:[#allocation11 + $0xd0] sm:$0xff]
    %v1383 = vld [vmem:[#allocation11 + $0xd8] sm:$0xff]
    %v1384 = vld [vmem:[#allocation11 + $0xe0] sm:$0xff]
    %v1385 = vld [vmem:[#allocation11 + $0xe8] sm:$0xff]
    %v1386 = vld [vmem:[#allocation11 + $0xf0] sm:$0xff]
    %v1387 = vld [vmem:[#allocation11 + $0xf8] sm:$0xff]
    %v1388 = vld [vmem:[#allocation11 + $0x100] sm:$0xff]
    %v1389 = vld [vmem:[#allocation11 + $0x108] sm:$0xff]
    %v1390 = vld [vmem:[#allocation11 + $0x110] sm:$0xff]
    %v1391 = vld [vmem:[#allocation11 + $0x118] sm:$0xff]
    %v1392 = vld [vmem:[#allocation11 + $0x120] sm:$0xff]
    %v1393 = vld [vmem:[#allocation11 + $0x128] sm:$0xff]
    %v1394 = vld [vmem:[#allocation11 + $0x130] sm:$0xff]
    %v1395 = vld [vmem:[#allocation11 + $0x138] sm:$0xff]
    %v1396 = vld [vmem:[#allocation11 + $0x140] sm:$0xff]
    %v1397 = vld [vmem:[#allocation11 + $0x148] sm:$0xff]
    %v1398 = vld [vmem:[#allocation11 + $0x150] sm:$0xff]
    %v1399 = vld [vmem:[#allocation11 + $0x158] sm:$0xff]
    %v1400 = vld [vmem:[#allocation11 + $0x160] sm:$0xff]
    %v1401 = vld [vmem:[#allocation11 + $0x168] sm:$0xff]
    %v1402 = vld [vmem:[#allocation11 + $0x170] sm:$0xff]
    %v1403 = vld [vmem:[#allocation11 + $0x178] sm:$0xff]
    %v1404 = vld [vmem:[#allocation11 + $0x180] sm:$0xff]
    %v1405 = vld [vmem:[#allocation11 + $0x188] sm:$0xff]
    %v1406 = vld [vmem:[#allocation11 + $0x190] sm:$0xff]
    %v1407 = vld [vmem:[#allocation11 + $0x198] sm:$0xff]
    %v1408 = vld [vmem:[#allocation11 + $0x1a0] sm:$0xff]
    %v1409 = vld [vmem:[#allocation11 + $0x1a8] sm:$0xff]
    %v1410 = vld [vmem:[#allocation11 + $0x1b0] sm:$0xff]
    %v1411 = vld [vmem:[#allocation11 + $0x1b8] sm:$0xff]
    %v1412 = vld [vmem:[#allocation11 + $0x1c0] sm:$0xff]
    %v1413 = vld [vmem:[#allocation11 + $0x1c8] sm:$0xff]
    %v1414 = vld [vmem:[#allocation11 + $0x1d0] sm:$0xff]
    %v1415 = vld [vmem:[#allocation11 + $0x1d8] sm:$0xff]
    %v1416 = vld [vmem:[#allocation11 + $0x1e0] sm:$0xff]
    %v1417 = vld [vmem:[#allocation11 + $0x1e8] sm:$0xff]
    %v1418 = vld [vmem:[#allocation11 + $0x1f0] sm:$0xff]
    %v1419 = vld [vmem:[#allocation11 + $0x1f8] sm:$0xff]
    %v1420 = vld [vmem:[#allocation11 + $0x200] sm:$0xff]
    %v1421 = vld [vmem:[#allocation11 + $0x208] sm:$0xff]
    %v1422 = vld [vmem:[#allocation11 + $0x210] sm:$0xff]
    %v1423 = vld [vmem:[#allocation11 + $0x218] sm:$0xff]
    %v1424 = vld [vmem:[#allocation11 + $0x220] sm:$0xff]
    %v1425 = vld [vmem:[#allocation11 + $0x228] sm:$0xff]
    %v1426 = vld [vmem:[#allocation11 + $0x230] sm:$0xff]
    %v1427 = vld [vmem:[#allocation11 + $0x238] sm:$0xff]
    %v1428 = vld [vmem:[#allocation11 + $0x240] sm:$0xff]
    %v1429 = vld [vmem:[#allocation11 + $0x248] sm:$0xff]
    %v1430 = vld [vmem:[#allocation11 + $0x250] sm:$0xff]
    %v1431 = vld [vmem:[#allocation11 + $0x258] sm:$0xff]
    %v1432 = vld [vmem:[#allocation11 + $0x260] sm:$0xff]
    %v1433 = vld [vmem:[#allocation11 + $0x268] sm:$0xff]
    %v1434 = vld [vmem:[#allocation11 + $0x270] sm:$0xff]
    %v1435 = vld [vmem:[#allocation11 + $0x278] sm:$0xff]
    %v1436 = vld [vmem:[#allocation11 + $0x280] sm:$0xff]
    %v1437 = vld [vmem:[#allocation11 + $0x288] sm:$0xff]
    %v1438 = vld [vmem:[#allocation11 + $0x290] sm:$0xff]
    %v1439 = vld [vmem:[#allocation11 + $0x298] sm:$0xff]
    %v1440 = vld [vmem:[#allocation11 + $0x2a0] sm:$0xff]
    %v1441 = vld [vmem:[#allocation11 + $0x2a8] sm:$0xff]
    %v1442 = vld [vmem:[#allocation11 + $0x2b0] sm:$0xff]
    %v1443 = vld [vmem:[#allocation11 + $0x2b8] sm:$0xff]
    %v1444 = vld [vmem:[#allocation11 + $0x2c0] sm:$0xff]
    %v1445 = vld [vmem:[#allocation11 + $0x2c8] sm:$0xff]
    %v1446 = vld [vmem:[#allocation11 + $0x2d0] sm:$0xff]
    %v1447 = vld [vmem:[#allocation11 + $0x2d8] sm:$0xff]
    %v1448 = vld [vmem:[#allocation11 + $0x2e0] sm:$0xff]
    %v1449 = vld [vmem:[#allocation11 + $0x2e8] sm:$0xff]
    %v1450 = vld [vmem:[#allocation11 + $0x2f0] sm:$0xff]
    %v1451 = vld [vmem:[#allocation11 + $0x2f8] sm:$0xff]
    %v1452 = vld [vmem:[#allocation11 + $0x300] sm:$0xff]
    %v1453 = vld [vmem:[#allocation11 + $0x308] sm:$0xff]
    %v1454 = vld [vmem:[#allocation11 + $0x310] sm:$0xff]
    %v1455 = vld [vmem:[#allocation11 + $0x318] sm:$0xff]
    %v1456 = vld [vmem:[#allocation11 + $0x320] sm:$0xff]
    %v1457 = vld [vmem:[#allocation11 + $0x328] sm:$0xff]
    %v1458 = vld [vmem:[#allocation11 + $0x330] sm:$0xff]
    %v1459 = vld [vmem:[#allocation11 + $0x338] sm:$0xff]
    %v1460 = vld [vmem:[#allocation11 + $0x340] sm:$0xff]
    %v1461 = vld [vmem:[#allocation11 + $0x348] sm:$0xff]
    %v1462 = vld [vmem:[#allocation11 + $0x350] sm:$0xff]
    %v1463 = vld [vmem:[#allocation11 + $0x358] sm:$0xff]
    %v1464 = vld [vmem:[#allocation11 + $0x360] sm:$0xff]
    %v1465 = vld [vmem:[#allocation11 + $0x368] sm:$0xff]
    %v1466 = vld [vmem:[#allocation11 + $0x370] sm:$0xff]
    %v1467 = vld [vmem:[#allocation11 + $0x378] sm:$0xff]
    %v1468 = vld [vmem:[#allocation11 + $0x380] sm:$0xff]
    %v1469 = vld [vmem:[#allocation11 + $0x388] sm:$0xff]
    %v1470 = vld [vmem:[#allocation11 + $0x390] sm:$0xff]
    %v1471 = vld [vmem:[#allocation11 + $0x398] sm:$0xff]
    %v1472 = vld [vmem:[#allocation11 + $0x3a0] sm:$0xff]
    %v1473 = vld [vmem:[#allocation11 + $0x3a8] sm:$0xff]
    %v1474 = vld [vmem:[#allocation11 + $0x3b0] sm:$0xff]
    %v1475 = vld [vmem:[#allocation11 + $0x3b8] sm:$0xff]
    %v1476 = vld [vmem:[#allocation11 + $0x3c0] sm:$0xff]
    %v1477 = vld [vmem:[#allocation11 + $0x3c8] sm:$0xff]
    %v1478 = vld [vmem:[#allocation11 + $0x3d0] sm:$0xff]
    %v1479 = vld [vmem:[#allocation11 + $0x3d8] sm:$0xff]
    %v1480 = vld [vmem:[#allocation11 + $0x3e0] sm:$0xff]
    %v1481 = vld [vmem:[#allocation11 + $0x3e8] sm:$0xff]
    %v1482 = vld [vmem:[#allocation11 + $0x3f0] sm:$0xff]
    %v1483 = vld [vmem:[#allocation11 + $0x3f8] sm:$0xff]
    %v1484 = vpack.c.bf16 %v1352, %v1352
    %v1485 = vpack.c.bf16 %v1353, %v1353
    %v1486 = vpack.c.bf16 %v1354, %v1354
    %v1487 = vpack.c.bf16 %v1355, %v1355
    %v1488 = vpack.c.bf16 %v1358, %v1356
    %v1489 = vpack.c.bf16 %v1359, %v1357
    %v1490 = vpack.c.bf16 %v1362, %v1360
    %v1491 = vpack.c.bf16 %v1363, %v1361
    %v1492 = vpack.c.bf16 %v1366, %v1364
    %v1493 = vpack.c.bf16 %v1367, %v1365
    %v1494 = vpack.c.bf16 %v1370, %v1368
    %v1495 = vpack.c.bf16 %v1371, %v1369
    %v1496 = vpack.c.bf16 %v1374, %v1372
    %v1497 = vpack.c.bf16 %v1375, %v1373
    %v1498 = vpack.c.bf16 %v1378, %v1376
    %v1499 = vpack.c.bf16 %v1379, %v1377
    %v1500 = vpack.c.bf16 %v1382, %v1380
    %v1501 = vpack.c.bf16 %v1383, %v1381
    %v1502 = vpack.c.bf16 %v1386, %v1384
    %v1503 = vpack.c.bf16 %v1387, %v1385
    %v1504 = vpack.c.bf16 %v1390, %v1388
    %v1505 = vpack.c.bf16 %v1391, %v1389
    %v1506 = vpack.c.bf16 %v1394, %v1392
    %v1507 = vpack.c.bf16 %v1395, %v1393
    %v1508 = vpack.c.bf16 %v1398, %v1396
    %v1509 = vpack.c.bf16 %v1399, %v1397
    %v1510 = vpack.c.bf16 %v1402, %v1400
    %v1511 = vpack.c.bf16 %v1403, %v1401
    %v1512 = vpack.c.bf16 %v1406, %v1404
    %v1513 = vpack.c.bf16 %v1407, %v1405
    %v1514 = vpack.c.bf16 %v1410, %v1408
    %v1515 = vpack.c.bf16 %v1411, %v1409
    %v1516 = vpack.c.bf16 %v1414, %v1412
    %v1517 = vpack.c.bf16 %v1415, %v1413
    %v1518 = vpack.c.bf16 %v1418, %v1416
    %v1519 = vpack.c.bf16 %v1419, %v1417
    %v1520 = vpack.c.bf16 %v1422, %v1420
    %v1521 = vpack.c.bf16 %v1423, %v1421
    %v1522 = vpack.c.bf16 %v1426, %v1424
    %v1523 = vpack.c.bf16 %v1427, %v1425
    %v1524 = vpack.c.bf16 %v1430, %v1428
    %v1525 = vpack.c.bf16 %v1431, %v1429
    %v1526 = vpack.c.bf16 %v1434, %v1432
    %v1527 = vpack.c.bf16 %v1435, %v1433
    %v1528 = vpack.c.bf16 %v1438, %v1436
    %v1529 = vpack.c.bf16 %v1439, %v1437
    %v1530 = vpack.c.bf16 %v1442, %v1440
    %v1531 = vpack.c.bf16 %v1443, %v1441
    %v1532 = vpack.c.bf16 %v1446, %v1444
    %v1533 = vpack.c.bf16 %v1447, %v1445
    %v1534 = vpack.c.bf16 %v1450, %v1448
    %v1535 = vpack.c.bf16 %v1451, %v1449
    %v1536 = vpack.c.bf16 %v1454, %v1452
    %v1537 = vpack.c.bf16 %v1455, %v1453
    %v1538 = vpack.c.bf16 %v1458, %v1456
    %v1539 = vpack.c.bf16 %v1459, %v1457
    %v1540 = vpack.c.bf16 %v1462, %v1460
    %v1541 = vpack.c.bf16 %v1463, %v1461
    %v1542 = vpack.c.bf16 %v1466, %v1464
    %v1543 = vpack.c.bf16 %v1467, %v1465
    %v1544 = vpack.c.bf16 %v1470, %v1468
    %v1545 = vpack.c.bf16 %v1471, %v1469
    %v1546 = vpack.c.bf16 %v1474, %v1472
    %v1547 = vpack.c.bf16 %v1475, %v1473
    %v1548 = vpack.c.bf16 %v1478, %v1476
    %v1549 = vpack.c.bf16 %v1479, %v1477
    %v1550 = vpack.c.bf16 %v1482, %v1480
    %v1551 = vpack.c.bf16 %v1483, %v1481
    %v1552 = vld [vmem:[#allocation13] sm:$0x3]
    %v1554 = vlaneseq
    %v1555 = vshrl.u32 %v1554, 7
    %v1556 = vsub.s32 0, %v1555
    %v1557 = vrot.slane %v1552, %v1556
    %v1558 = vlaneseq
    %v1559 = vshrl.u32 %v1558, 7
    %v1560 = vsub.s32 1, %v1559
    %v1561 = vrot.slane %v1552, %v1560
    %1564 = vmatprep.subr.bf16.mxu0 %v1503
    %1565 = vmatpush1.bf16.msra.mxu0 %v1502
    %1566 = vmatprep.subr.bf16.mxu0 %v1501
    %1567 = vmatpush1.bf16.msra.mxu0 %v1500
    %1568 = vmatprep.subr.bf16.mxu0 %v1499
    %1569 = vmatpush1.bf16.msra.mxu0 %v1498
    %1570 = vmatprep.subr.bf16.mxu0 %v1497
    %1571 = vmatpush1.bf16.msra.mxu0 %v1496
    %1572 = vmatprep.subr.bf16.mxu0 %v1495
    %1573 = vmatpush1.bf16.msra.mxu0 %v1494
    %1574 = vmatprep.subr.bf16.mxu0 %v1493
    %1575 = vmatpush1.bf16.msra.mxu0 %v1492
    %1576 = vmatprep.subr.bf16.mxu0 %v1491
    %1577 = vmatpush1.bf16.msra.mxu0 %v1490
    %1578 = vmatprep.subr.bf16.mxu0 %v1489
    %1579 = vmatpush1.bf16.msra.mxu0 %v1488
    %1580 = vmatprep.subr.bf16.mxu0 %v1519
    %1581 = vmatpush2.bf16.msra.mxu0 %v1518
    %1582 = vmatprep.subr.bf16.mxu0 %v1517
    %1583 = vmatpush2.bf16.msra.mxu0 %v1516
    %1584 = vmatprep.subr.bf16.mxu0 %v1515
    %1585 = vmatpush2.bf16.msra.mxu0 %v1514
    %1586 = vmatprep.subr.bf16.mxu0 %v1513
    %1587 = vmatpush2.bf16.msra.mxu0 %v1512
    %1588 = vmatprep.subr.bf16.mxu0 %v1511
    %1589 = vmatpush2.bf16.msra.mxu0 %v1510
    %1590 = vmatprep.subr.bf16.mxu0 %v1509
    %1591 = vmatpush2.bf16.msra.mxu0 %v1508
    %1592 = vmatprep.subr.bf16.mxu0 %v1507
    %1593 = vmatpush2.bf16.msra.mxu0 %v1506
    %1594 = vmatprep.subr.bf16.mxu0 %v1505
    %1595 = vmatpush2.bf16.msra.mxu0 %v1504
    %1596 = vmatprep.mubr.bf16.mxu0 %v1485
    %1597 = vmatmul.mubr.bf16.gmra.mxu0 %v1484
    %v1598 = vpop.f32.mrf.mxu0
    %v1599 = vadd.f32 %v1557, %v1598
    %v1600 = vpop.f32.mrf.mxu0
    %v1601 = vadd.f32 %v1561, %v1600
    %v1602 = vpop.f32.mrf.mxu0
    %v1603 = vpop.f32.mrf.mxu0
    %1604 = vdwg.mxu0
    %1605 = vmatprep.subr.bf16.mxu0 %v1535
    %1606 = vmatpush1.bf16.msra.mxu0 %v1534
    %1607 = vmatprep.subr.bf16.mxu0 %v1533
    %1608 = vmatpush1.bf16.msra.mxu0 %v1532
    %1609 = vmatprep.subr.bf16.mxu0 %v1531
    %1610 = vmatpush1.bf16.msra.mxu0 %v1530
    %1611 = vmatprep.subr.bf16.mxu0 %v1529
    %1612 = vmatpush1.bf16.msra.mxu0 %v1528
    %1613 = vmatprep.subr.bf16.mxu0 %v1527
    %1614 = vmatpush1.bf16.msra.mxu0 %v1526
    %1615 = vmatprep.subr.bf16.mxu0 %v1525
    %1616 = vmatpush1.bf16.msra.mxu0 %v1524
    %1617 = vmatprep.subr.bf16.mxu0 %v1523
    %1618 = vmatpush1.bf16.msra.mxu0 %v1522
    %1619 = vmatprep.subr.bf16.mxu0 %v1521
    %1620 = vmatpush1.bf16.msra.mxu0 %v1520
    %1621 = vmatprep.subr.bf16.mxu0 %v1551
    %1622 = vmatpush2.bf16.msra.mxu0 %v1550
    %1623 = vmatprep.subr.bf16.mxu0 %v1549
    %1624 = vmatpush2.bf16.msra.mxu0 %v1548
    %1625 = vmatprep.subr.bf16.mxu0 %v1547
    %1626 = vmatpush2.bf16.msra.mxu0 %v1546
    %1627 = vmatprep.subr.bf16.mxu0 %v1545
    %1628 = vmatpush2.bf16.msra.mxu0 %v1544
    %1629 = vmatprep.subr.bf16.mxu0 %v1543
    %1630 = vmatpush2.bf16.msra.mxu0 %v1542
    %1631 = vmatprep.subr.bf16.mxu0 %v1541
    %1632 = vmatpush2.bf16.msra.mxu0 %v1540
    %1633 = vmatprep.subr.bf16.mxu0 %v1539
    %1634 = vmatpush2.bf16.msra.mxu0 %v1538
    %1635 = vmatprep.subr.bf16.mxu0 %v1537
    %1636 = vmatpush2.bf16.msra.mxu0 %v1536
    %1637 = vmatprep.mubr.bf16.mxu0 %v1487
    %1638 = vmatmul.mubr.bf16.gmra.mxu0 %v1486
    %v1639 = vpop.f32.mrf.mxu0
    %v1640 = vadd.f32 %v1599, %v1639
    %v1641 = vpop.f32.mrf.mxu0
    %v1642 = vadd.f32 %v1601, %v1641
    %v1643 = vpop.f32.mrf.mxu0
    %v1644 = vpop.f32.mrf.mxu0
    %1645 = vdwg.mxu0
    %v1646 = vmax.f32 %v1640, 0.0
    %v1647 = vmax.f32 %v1642, 0.0
    %v1648 = vld [vmem:[%s29] sm:$0xff]
    %v1649 = vld [vmem:[%s29 + $0x8] sm:$0xff]
    %v1650 = vld [vmem:[%s29 + $0x10] sm:$0xff]
    %v1651 = vld [vmem:[%s29 + $0x18] sm:$0xff]
    %v1652 = vld [vmem:[%s29 + $0x20] sm:$0xff]
    %v1653 = vld [vmem:[%s29 + $0x28] sm:$0xff]
    %v1654 = vld [vmem:[%s29 + $0x30] sm:$0xff]
    %v1655 = vld [vmem:[%s29 + $0x38] sm:$0xff]
    %v1656 = vld [vmem:[%s29 + $0x40] sm:$0xff]
    %v1657 = vld [vmem:[%s29 + $0x48] sm:$0xff]
    %v1658 = vld [vmem:[%s29 + $0x50] sm:$0xff]
    %v1659 = vld [vmem:[%s29 + $0x58] sm:$0xff]
    %v1660 = vld [vmem:[%s29 + $0x60] sm:$0xff]
    %v1661 = vld [vmem:[%s29 + $0x68] sm:$0xff]
    %v1662 = vld [vmem:[%s29 + $0x70] sm:$0xff]
    %v1663 = vld [vmem:[%s29 + $0x78] sm:$0xff]
    %v1664 = vld [vmem:[%s29 + $0x80] sm:$0xff]
    %v1665 = vld [vmem:[%s29 + $0x88] sm:$0xff]
    %v1666 = vld [vmem:[%s29 + $0x90] sm:$0xff]
    %v1667 = vld [vmem:[%s29 + $0x98] sm:$0xff]
    %v1668 = vld [vmem:[%s29 + $0xa0] sm:$0xff]
    %v1669 = vld [vmem:[%s29 + $0xa8] sm:$0xff]
    %v1670 = vld [vmem:[%s29 + $0xb0] sm:$0xff]
    %v1671 = vld [vmem:[%s29 + $0xb8] sm:$0xff]
    %v1672 = vld [vmem:[%s29 + $0xc0] sm:$0xff]
    %v1673 = vld [vmem:[%s29 + $0xc8] sm:$0xff]
    %v1674 = vld [vmem:[%s29 + $0xd0] sm:$0xff]
    %v1675 = vld [vmem:[%s29 + $0xd8] sm:$0xff]
    %v1676 = vld [vmem:[%s29 + $0xe0] sm:$0xff]
    %v1677 = vld [vmem:[%s29 + $0xe8] sm:$0xff]
    %v1678 = vld [vmem:[%s29 + $0xf0] sm:$0xff]
    %v1679 = vld [vmem:[%s29 + $0xf8] sm:$0xff]
    %v1680 = vpack.c.bf16 %v1646, %v1646
    %v1681 = vpack.c.bf16 %v1647, %v1647
    %v1682 = vpack.c.bf16 %v1649, %v1648
    %v1683 = vpack.c.bf16 %v1651, %v1650
    %v1684 = vpack.c.bf16 %v1653, %v1652
    %v1685 = vpack.c.bf16 %v1655, %v1654
    %v1686 = vpack.c.bf16 %v1657, %v1656
    %v1687 = vpack.c.bf16 %v1659, %v1658
    %v1688 = vpack.c.bf16 %v1661, %v1660
    %v1689 = vpack.c.bf16 %v1663, %v1662
    %v1690 = vpack.c.bf16 %v1665, %v1664
    %v1691 = vpack.c.bf16 %v1667, %v1666
    %v1692 = vpack.c.bf16 %v1669, %v1668
    %v1693 = vpack.c.bf16 %v1671, %v1670
    %v1694 = vpack.c.bf16 %v1673, %v1672
    %v1695 = vpack.c.bf16 %v1675, %v1674
    %v1696 = vpack.c.bf16 %v1677, %v1676
    %v1697 = vpack.c.bf16 %v1679, %v1678
    %v1698 = vld [vmem:[#allocation14] sm:$0x1]
    %v1700 = vlaneseq
    %v1701 = vshrl.u32 %v1700, 7
    %v1702 = vsub.s32 0, %v1701
    %v1703 = vrot.slane %v1698, %v1702
    %1705 = vmatprep.subr.bf16.mxu0 0
    %1706 = vmatpush1.bf16.msra.mxu0 %v1689
    %1707 = vmatprep.subr.bf16.mxu0 0
    %1708 = vmatpush1.bf16.msra.mxu0 %v1688
    %1709 = vmatprep.subr.bf16.mxu0 0
    %1710 = vmatpush1.bf16.msra.mxu0 %v1687
    %1711 = vmatprep.subr.bf16.mxu0 0
    %1712 = vmatpush1.bf16.msra.mxu0 %v1686
    %1713 = vmatprep.subr.bf16.mxu0 0
    %1714 = vmatpush1.bf16.msra.mxu0 %v1685
    %1715 = vmatprep.subr.bf16.mxu0 0
    %1716 = vmatpush1.bf16.msra.mxu0 %v1684
    %1717 = vmatprep.subr.bf16.mxu0 0
    %1718 = vmatpush1.bf16.msra.mxu0 %v1683
    %1719 = vmatprep.subr.bf16.mxu0 0
    %1720 = vmatpush1.bf16.msra.mxu0 %v1682
    %1721 = vmatprep.subr.bf16.mxu0 0
    %1722 = vmatpush2.bf16.msra.mxu0 %v1697
    %1723 = vmatprep.subr.bf16.mxu0 0
    %1724 = vmatpush2.bf16.msra.mxu0 %v1696
    %1725 = vmatprep.subr.bf16.mxu0 0
    %1726 = vmatpush2.bf16.msra.mxu0 %v1695
    %1727 = vmatprep.subr.bf16.mxu0 0
    %1728 = vmatpush2.bf16.msra.mxu0 %v1694
    %1729 = vmatprep.subr.bf16.mxu0 0
    %1730 = vmatpush2.bf16.msra.mxu0 %v1693
    %1731 = vmatprep.subr.bf16.mxu0 0
    %1732 = vmatpush2.bf16.msra.mxu0 %v1692
    %1733 = vmatprep.subr.bf16.mxu0 0
    %1734 = vmatpush2.bf16.msra.mxu0 %v1691
    %1735 = vmatprep.subr.bf16.mxu0 0
    %1736 = vmatpush2.bf16.msra.mxu0 %v1690
    %1737 = vmatprep.mubr.bf16.mxu0 %v1681
    %1738 = vmatmul.mubr.bf16.gmra.mxu0 %v1680
    %v1739 = vpop.f32.mrf.mxu0
    %v1740 = vadd.f32 %v1703, %v1739
    %v1741 = vpop.f32.mrf.mxu0
    %v1742 = vpop.f32.mrf.mxu0
    %v1743 = vpop.f32.mrf.mxu0
    %1744 = vdwg.mxu0
    %v1745 = vsub.f32 %v1740, %v1217
    %v1746 = vsub.f32 %v1745, 1.0
    %v1747 = vsub.f32 %v1217, %v1740
    %v1748 = vmul.f32 %v1747, 1.442695
    %v1749 = vpow.pop %v1748
    %v1750 = vadd.f32 %v1746, %v1749
    %v1751 = vmul.f32 %v1745, %v1745
    %v1752 = vmul.f32 %v1740, 1.442695
    %v1753 = vpow.pop %v1752
    %v1754 = vadd.f32 %v1753, 1e-08
    %1756 = vrot.lane.b32.xlu0 %v1754, 112
    %v1757 = vpop.permute.xlu0 %1756
    %v1759 = vrcp.pop %v1757
    %v1760 = vmul.f32 %v1751, %v1759
    %1762 = vrot.lane.b32.xlu0 %v1760, 16
    %v1763 = vpop.permute.xlu0 %1762
    %v1765 = vadd.f32 %v1750, %v1763
    %1767 = vrot.lane.b32.xlu0 %v1765, 112
    %v1768 = vpop.permute.xlu0 %1767
    %vm1770 = vcmask 130048
    %v1771 = vsel %vm1770, %v1768, 0.0
    %1772 = vadd.xlane.f32.xlu0 %v1771
    %v1773 = vpop.xlane.xlu0 %1772
    %v1774 = vrot.slane %v1773, 4
    %v1775 = vadd.f32 %v1773, %v1774
    %v1776 = vrot.slane %v1775, 2
    %v1777 = vadd.f32 %v1775, %v1776
    %v1778 = vrot.slane %v1777, 1
    %v1779 = vadd.f32 %v1777, %v1778
    %v1780 = vmul.f32 %v1779, 0.5
    %v1781 = vrcp.pop 8.0
    %v1782 = vmul.f32 %v1780, %v1781
    %vm1783 = vcmask 0
    %1784 = vst.msk [vmem:[#allocation40] sm:$0x1] %vm1783, %v1782
    %v1785 = vld [vmem:[#allocation16] sm:$0xff]
    %v1786 = vld [vmem:[#allocation16 + $0x8] sm:$0xff]
    %v1787 = vld [vmem:[#allocation16 + $0x10] sm:$0xff]
    %v1788 = vld [vmem:[#allocation16 + $0x18] sm:$0xff]
    %v1789 = vpack.c.bf16 %v1740, %v1740
    %v1790 = vpack.c.bf16 %v1787, %v1785
    %v1791 = vpack.c.bf16 %v1788, %v1786
    %v1792 = vld [vmem:[#allocation17] sm:$0x3]
    %v1794 = vlaneseq
    %v1795 = vshrl.u32 %v1794, 7
    %v1796 = vsub.s32 0, %v1795
    %v1797 = vrot.slane %v1792, %v1796
    %v1798 = vlaneseq
    %v1799 = vshrl.u32 %v1798, 7
    %v1800 = vsub.s32 1, %v1799
    %v1801 = vrot.slane %v1792, %v1800
    %v1805 = vsel %vm1770, %v1789, 0
    %1807 = vmatprep.subr.bf16.mxu0 0
    %1808 = vmatpush1.bf16.msra.mxu0 0
    %1809 = vmatprep.subr.bf16.mxu0 0
    %1810 = vmatpush1.bf16.msra.mxu0 0
    %1811 = vmatprep.subr.bf16.mxu0 0
    %1812 = vmatpush1.bf16.msra.mxu0 0
    %1813 = vmatprep.subr.bf16.mxu0 0
    %1814 = vmatpush1.bf16.msra.mxu0 0
    %1815 = vmatprep.subr.bf16.mxu0 0
    %1816 = vmatpush1.bf16.msra.mxu0 0
    %1817 = vmatprep.subr.bf16.mxu0 0
    %1818 = vmatpush1.bf16.msra.mxu0 0
    %1819 = vmatprep.subr.bf16.mxu0 0
    %1820 = vmatpush1.bf16.msra.mxu0 0
    %1821 = vmatprep.subr.bf16.mxu0 %v1791
    %1822 = vmatpush1.bf16.msra.mxu0 %v1790
    %1823 = vmatprep.subr.bf16.mxu0 0
    %1824 = vmatpush2.bf16.msra.mxu0 0
    %1825 = vmatprep.subr.bf16.mxu0 0
    %1826 = vmatpush2.bf16.msra.mxu0 0
    %1827 = vmatprep.subr.bf16.mxu0 0
    %1828 = vmatpush2.bf16.msra.mxu0 0
    %1829 = vmatprep.subr.bf16.mxu0 0
    %1830 = vmatpush2.bf16.msra.mxu0 0
    %1831 = vmatprep.subr.bf16.mxu0 0
    %1832 = vmatpush2.bf16.msra.mxu0 0
    %1833 = vmatprep.subr.bf16.mxu0 0
    %1834 = vmatpush2.bf16.msra.mxu0 0
    %1835 = vmatprep.subr.bf16.mxu0 0
    %1836 = vmatpush2.bf16.msra.mxu0 0
    %1837 = vmatprep.subr.bf16.mxu0 0
    %1838 = vmatpush2.bf16.msra.mxu0 0
    %1839 = vmatprep.mubr.bf16.mxu0 0
    %1840 = vmatmul.mubr.bf16.gmra.mxu0 %v1805
    %v1841 = vpop.f32.mrf.mxu0
    %v1842 = vadd.f32 %v1797, %v1841
    %v1843 = vpop.f32.mrf.mxu0
    %v1844 = vadd.f32 %v1801, %v1843
    %v1845 = vpop.f32.mrf.mxu0
    %v1846 = vpop.f32.mrf.mxu0
    %1847 = vdwg.mxu0
    %v1848 = vmax.f32 %v1842, 0.0
    %v1849 = vmax.f32 %v1844, 0.0
    %v1850 = vld [vmem:[#allocation19] sm:$0xff]
    %v1851 = vld [vmem:[#allocation19 + $0x8] sm:$0xff]
    %v1852 = vld [vmem:[#allocation19 + $0x10] sm:$0xff]
    %v1853 = vld [vmem:[#allocation19 + $0x18] sm:$0xff]
    %v1854 = vld [vmem:[#allocation19 + $0x20] sm:$0xff]
    %v1855 = vld [vmem:[#allocation19 + $0x28] sm:$0xff]
    %v1856 = vld [vmem:[#allocation19 + $0x30] sm:$0xff]
    %v1857 = vld [vmem:[#allocation19 + $0x38] sm:$0xff]
    %v1858 = vld [vmem:[#allocation19 + $0x40] sm:$0xff]
    %v1859 = vld [vmem:[#allocation19 + $0x48] sm:$0xff]
    %v1860 = vld [vmem:[#allocation19 + $0x50] sm:$0xff]
    %v1861 = vld [vmem:[#allocation19 + $0x58] sm:$0xff]
    %v1862 = vld [vmem:[#allocation19 + $0x60] sm:$0xff]
    %v1863 = vld [vmem:[#allocation19 + $0x68] sm:$0xff]
    %v1864 = vld [vmem:[#allocation19 + $0x70] sm:$0xff]
    %v1865 = vld [vmem:[#allocation19 + $0x78] sm:$0xff]
    %v1866 = vld [vmem:[#allocation19 + $0x80] sm:$0xff]
    %v1867 = vld [vmem:[#allocation19 + $0x88] sm:$0xff]
    %v1868 = vld [vmem:[#allocation19 + $0x90] sm:$0xff]
    %v1869 = vld [vmem:[#allocation19 + $0x98] sm:$0xff]
    %v1870 = vld [vmem:[#allocation19 + $0xa0] sm:$0xff]
    %v1871 = vld [vmem:[#allocation19 + $0xa8] sm:$0xff]
    %v1872 = vld [vmem:[#allocation19 + $0xb0] sm:$0xff]
    %v1873 = vld [vmem:[#allocation19 + $0xb8] sm:$0xff]
    %v1874 = vld [vmem:[#allocation19 + $0xc0] sm:$0xff]
    %v1875 = vld [vmem:[#allocation19 + $0xc8] sm:$0xff]
    %v1876 = vld [vmem:[#allocation19 + $0xd0] sm:$0xff]
    %v1877 = vld [vmem:[#allocation19 + $0xd8] sm:$0xff]
    %v1878 = vld [vmem:[#allocation19 + $0xe0] sm:$0xff]
    %v1879 = vld [vmem:[#allocation19 + $0xe8] sm:$0xff]
    %v1880 = vld [vmem:[#allocation19 + $0xf0] sm:$0xff]
    %v1881 = vld [vmem:[#allocation19 + $0xf8] sm:$0xff]
    %v1882 = vld [vmem:[#allocation19 + $0x100] sm:$0xff]
    %v1883 = vld [vmem:[#allocation19 + $0x108] sm:$0xff]
    %v1884 = vld [vmem:[#allocation19 + $0x110] sm:$0xff]
    %v1885 = vld [vmem:[#allocation19 + $0x118] sm:$0xff]
    %v1886 = vld [vmem:[#allocation19 + $0x120] sm:$0xff]
    %v1887 = vld [vmem:[#allocation19 + $0x128] sm:$0xff]
    %v1888 = vld [vmem:[#allocation19 + $0x130] sm:$0xff]
    %v1889 = vld [vmem:[#allocation19 + $0x138] sm:$0xff]
    %v1890 = vld [vmem:[#allocation19 + $0x140] sm:$0xff]
    %v1891 = vld [vmem:[#allocation19 + $0x148] sm:$0xff]
    %v1892 = vld [vmem:[#allocation19 + $0x150] sm:$0xff]
    %v1893 = vld [vmem:[#allocation19 + $0x158] sm:$0xff]
    %v1894 = vld [vmem:[#allocation19 + $0x160] sm:$0xff]
    %v1895 = vld [vmem:[#allocation19 + $0x168] sm:$0xff]
    %v1896 = vld [vmem:[#allocation19 + $0x170] sm:$0xff]
    %v1897 = vld [vmem:[#allocation19 + $0x178] sm:$0xff]
    %v1898 = vld [vmem:[#allocation19 + $0x180] sm:$0xff]
    %v1899 = vld [vmem:[#allocation19 + $0x188] sm:$0xff]
    %v1900 = vld [vmem:[#allocation19 + $0x190] sm:$0xff]
    %v1901 = vld [vmem:[#allocation19 + $0x198] sm:$0xff]
    %v1902 = vld [vmem:[#allocation19 + $0x1a0] sm:$0xff]
    %v1903 = vld [vmem:[#allocation19 + $0x1a8] sm:$0xff]
    %v1904 = vld [vmem:[#allocation19 + $0x1b0] sm:$0xff]
    %v1905 = vld [vmem:[#allocation19 + $0x1b8] sm:$0xff]
    %v1906 = vld [vmem:[#allocation19 + $0x1c0] sm:$0xff]
    %v1907 = vld [vmem:[#allocation19 + $0x1c8] sm:$0xff]
    %v1908 = vld [vmem:[#allocation19 + $0x1d0] sm:$0xff]
    %v1909 = vld [vmem:[#allocation19 + $0x1d8] sm:$0xff]
    %v1910 = vld [vmem:[#allocation19 + $0x1e0] sm:$0xff]
    %v1911 = vld [vmem:[#allocation19 + $0x1e8] sm:$0xff]
    %v1912 = vld [vmem:[#allocation19 + $0x1f0] sm:$0xff]
    %v1913 = vld [vmem:[#allocation19 + $0x1f8] sm:$0xff]
    %v1914 = vld [vmem:[#allocation19 + $0x200] sm:$0xff]
    %v1915 = vld [vmem:[#allocation19 + $0x208] sm:$0xff]
    %v1916 = vld [vmem:[#allocation19 + $0x210] sm:$0xff]
    %v1917 = vld [vmem:[#allocation19 + $0x218] sm:$0xff]
    %v1918 = vld [vmem:[#allocation19 + $0x220] sm:$0xff]
    %v1919 = vld [vmem:[#allocation19 + $0x228] sm:$0xff]
    %v1920 = vld [vmem:[#allocation19 + $0x230] sm:$0xff]
    %v1921 = vld [vmem:[#allocation19 + $0x238] sm:$0xff]
    %v1922 = vld [vmem:[#allocation19 + $0x240] sm:$0xff]
    %v1923 = vld [vmem:[#allocation19 + $0x248] sm:$0xff]
    %v1924 = vld [vmem:[#allocation19 + $0x250] sm:$0xff]
    %v1925 = vld [vmem:[#allocation19 + $0x258] sm:$0xff]
    %v1926 = vld [vmem:[#allocation19 + $0x260] sm:$0xff]
    %v1927 = vld [vmem:[#allocation19 + $0x268] sm:$0xff]
    %v1928 = vld [vmem:[#allocation19 + $0x270] sm:$0xff]
    %v1929 = vld [vmem:[#allocation19 + $0x278] sm:$0xff]
    %v1930 = vld [vmem:[#allocation19 + $0x280] sm:$0xff]
    %v1931 = vld [vmem:[#allocation19 + $0x288] sm:$0xff]
    %v1932 = vld [vmem:[#allocation19 + $0x290] sm:$0xff]
    %v1933 = vld [vmem:[#allocation19 + $0x298] sm:$0xff]
    %v1934 = vld [vmem:[#allocation19 + $0x2a0] sm:$0xff]
    %v1935 = vld [vmem:[#allocation19 + $0x2a8] sm:$0xff]
    %v1936 = vld [vmem:[#allocation19 + $0x2b0] sm:$0xff]
    %v1937 = vld [vmem:[#allocation19 + $0x2b8] sm:$0xff]
    %v1938 = vld [vmem:[#allocation19 + $0x2c0] sm:$0xff]
    %v1939 = vld [vmem:[#allocation19 + $0x2c8] sm:$0xff]
    %v1940 = vld [vmem:[#allocation19 + $0x2d0] sm:$0xff]
    %v1941 = vld [vmem:[#allocation19 + $0x2d8] sm:$0xff]
    %v1942 = vld [vmem:[#allocation19 + $0x2e0] sm:$0xff]
    %v1943 = vld [vmem:[#allocation19 + $0x2e8] sm:$0xff]
    %v1944 = vld [vmem:[#allocation19 + $0x2f0] sm:$0xff]
    %v1945 = vld [vmem:[#allocation19 + $0x2f8] sm:$0xff]
    %v1946 = vld [vmem:[#allocation19 + $0x300] sm:$0xff]
    %v1947 = vld [vmem:[#allocation19 + $0x308] sm:$0xff]
    %v1948 = vld [vmem:[#allocation19 + $0x310] sm:$0xff]
    %v1949 = vld [vmem:[#allocation19 + $0x318] sm:$0xff]
    %v1950 = vld [vmem:[#allocation19 + $0x320] sm:$0xff]
    %v1951 = vld [vmem:[#allocation19 + $0x328] sm:$0xff]
    %v1952 = vld [vmem:[#allocation19 + $0x330] sm:$0xff]
    %v1953 = vld [vmem:[#allocation19 + $0x338] sm:$0xff]
    %v1954 = vld [vmem:[#allocation19 + $0x340] sm:$0xff]
    %v1955 = vld [vmem:[#allocation19 + $0x348] sm:$0xff]
    %v1956 = vld [vmem:[#allocation19 + $0x350] sm:$0xff]
    %v1957 = vld [vmem:[#allocation19 + $0x358] sm:$0xff]
    %v1958 = vld [vmem:[#allocation19 + $0x360] sm:$0xff]
    %v1959 = vld [vmem:[#allocation19 + $0x368] sm:$0xff]
    %v1960 = vld [vmem:[#allocation19 + $0x370] sm:$0xff]
    %v1961 = vld [vmem:[#allocation19 + $0x378] sm:$0xff]
    %v1962 = vld [vmem:[#allocation19 + $0x380] sm:$0xff]
    %v1963 = vld [vmem:[#allocation19 + $0x388] sm:$0xff]
    %v1964 = vld [vmem:[#allocation19 + $0x390] sm:$0xff]
    %v1965 = vld [vmem:[#allocation19 + $0x398] sm:$0xff]
    %v1966 = vld [vmem:[#allocation19 + $0x3a0] sm:$0xff]
    %v1967 = vld [vmem:[#allocation19 + $0x3a8] sm:$0xff]
    %v1968 = vld [vmem:[#allocation19 + $0x3b0] sm:$0xff]
    %v1969 = vld [vmem:[#allocation19 + $0x3b8] sm:$0xff]
    %v1970 = vld [vmem:[#allocation19 + $0x3c0] sm:$0xff]
    %v1971 = vld [vmem:[#allocation19 + $0x3c8] sm:$0xff]
    %v1972 = vld [vmem:[#allocation19 + $0x3d0] sm:$0xff]
    %v1973 = vld [vmem:[#allocation19 + $0x3d8] sm:$0xff]
    %v1974 = vld [vmem:[#allocation19 + $0x3e0] sm:$0xff]
    %v1975 = vld [vmem:[#allocation19 + $0x3e8] sm:$0xff]
    %v1976 = vld [vmem:[#allocation19 + $0x3f0] sm:$0xff]
    %v1977 = vld [vmem:[#allocation19 + $0x3f8] sm:$0xff]
    %v1978 = vpack.c.bf16 %v1848, %v1848
    %v1979 = vpack.c.bf16 %v1849, %v1849
    %v1980 = vpack.c.bf16 %v1854, %v1850
    %v1981 = vpack.c.bf16 %v1855, %v1851
    %v1982 = vpack.c.bf16 %v1856, %v1852
    %v1983 = vpack.c.bf16 %v1857, %v1853
    %v1984 = vpack.c.bf16 %v1862, %v1858
    %v1985 = vpack.c.bf16 %v1863, %v1859
    %v1986 = vpack.c.bf16 %v1864, %v1860
    %v1987 = vpack.c.bf16 %v1865, %v1861
    %v1988 = vpack.c.bf16 %v1870, %v1866
    %v1989 = vpack.c.bf16 %v1871, %v1867
    %v1990 = vpack.c.bf16 %v1872, %v1868
    %v1991 = vpack.c.bf16 %v1873, %v1869
    %v1992 = vpack.c.bf16 %v1878, %v1874
    %v1993 = vpack.c.bf16 %v1879, %v1875
    %v1994 = vpack.c.bf16 %v1880, %v1876
    %v1995 = vpack.c.bf16 %v1881, %v1877
    %v1996 = vpack.c.bf16 %v1886, %v1882
    %v1997 = vpack.c.bf16 %v1887, %v1883
    %v1998 = vpack.c.bf16 %v1888, %v1884
    %v1999 = vpack.c.bf16 %v1889, %v1885
    %v2000 = vpack.c.bf16 %v1894, %v1890
    %v2001 = vpack.c.bf16 %v1895, %v1891
    %v2002 = vpack.c.bf16 %v1896, %v1892
    %v2003 = vpack.c.bf16 %v1897, %v1893
    %v2004 = vpack.c.bf16 %v1902, %v1898
    %v2005 = vpack.c.bf16 %v1903, %v1899
    %v2006 = vpack.c.bf16 %v1904, %v1900
    %v2007 = vpack.c.bf16 %v1905, %v1901
    %v2008 = vpack.c.bf16 %v1910, %v1906
    %v2009 = vpack.c.bf16 %v1911, %v1907
    %v2010 = vpack.c.bf16 %v1912, %v1908
    %v2011 = vpack.c.bf16 %v1913, %v1909
    %v2012 = vpack.c.bf16 %v1918, %v1914
    %v2013 = vpack.c.bf16 %v1919, %v1915
    %v2014 = vpack.c.bf16 %v1920, %v1916
    %v2015 = vpack.c.bf16 %v1921, %v1917
    %v2016 = vpack.c.bf16 %v1926, %v1922
    %v2017 = vpack.c.bf16 %v1927, %v1923
    %v2018 = vpack.c.bf16 %v1928, %v1924
    %v2019 = vpack.c.bf16 %v1929, %v1925
    %v2020 = vpack.c.bf16 %v1934, %v1930
    %v2021 = vpack.c.bf16 %v1935, %v1931
    %v2022 = vpack.c.bf16 %v1936, %v1932
    %v2023 = vpack.c.bf16 %v1937, %v1933
    %v2024 = vpack.c.bf16 %v1942, %v1938
    %v2025 = vpack.c.bf16 %v1943, %v1939
    %v2026 = vpack.c.bf16 %v1944, %v1940
    %v2027 = vpack.c.bf16 %v1945, %v1941
    %v2028 = vpack.c.bf16 %v1950, %v1946
    %v2029 = vpack.c.bf16 %v1951, %v1947
    %v2030 = vpack.c.bf16 %v1952, %v1948
    %v2031 = vpack.c.bf16 %v1953, %v1949
    %v2032 = vpack.c.bf16 %v1958, %v1954
    %v2033 = vpack.c.bf16 %v1959, %v1955
    %v2034 = vpack.c.bf16 %v1960, %v1956
    %v2035 = vpack.c.bf16 %v1961, %v1957
    %v2036 = vpack.c.bf16 %v1966, %v1962
    %v2037 = vpack.c.bf16 %v1967, %v1963
    %v2038 = vpack.c.bf16 %v1968, %v1964
    %v2039 = vpack.c.bf16 %v1969, %v1965
    %v2040 = vpack.c.bf16 %v1974, %v1970
    %v2041 = vpack.c.bf16 %v1975, %v1971
    %v2042 = vpack.c.bf16 %v1976, %v1972
    %v2043 = vpack.c.bf16 %v1977, %v1973
    %v2044 = vld [vmem:[#allocation20] sm:$0xf]
    %v2046 = vlaneseq
    %v2047 = vshrl.u32 %v2046, 7
    %v2048 = vsub.s32 0, %v2047
    %v2049 = vrot.slane %v2044, %v2048
    %v2050 = vlaneseq
    %v2051 = vshrl.u32 %v2050, 7
    %v2052 = vsub.s32 1, %v2051
    %v2053 = vrot.slane %v2044, %v2052
    %v2054 = vlaneseq
    %v2055 = vshrl.u32 %v2054, 7
    %v2056 = vsub.s32 2, %v2055
    %v2057 = vrot.slane %v2044, %v2056
    %v2058 = vlaneseq
    %v2059 = vshrl.u32 %v2058, 7
    %v2060 = vsub.s32 3, %v2059
    %v2061 = vrot.slane %v2044, %v2060
    %2066 = vmatprep.subr.bf16.mxu0 %v2009
    %2067 = vmatpush1.bf16.msra.mxu0 %v2008
    %2068 = vmatprep.subr.bf16.mxu0 %v2005
    %2069 = vmatpush1.bf16.msra.mxu0 %v2004
    %2070 = vmatprep.subr.bf16.mxu0 %v2001
    %2071 = vmatpush1.bf16.msra.mxu0 %v2000
    %2072 = vmatprep.subr.bf16.mxu0 %v1997
    %2073 = vmatpush1.bf16.msra.mxu0 %v1996
    %2074 = vmatprep.subr.bf16.mxu0 %v1993
    %2075 = vmatpush1.bf16.msra.mxu0 %v1992
    %2076 = vmatprep.subr.bf16.mxu0 %v1989
    %2077 = vmatpush1.bf16.msra.mxu0 %v1988
    %2078 = vmatprep.subr.bf16.mxu0 %v1985
    %2079 = vmatpush1.bf16.msra.mxu0 %v1984
    %2080 = vmatprep.subr.bf16.mxu0 %v1981
    %2081 = vmatpush1.bf16.msra.mxu0 %v1980
    %2082 = vmatprep.subr.bf16.mxu0 %v2041
    %2083 = vmatpush2.bf16.msra.mxu0 %v2040
    %2084 = vmatprep.subr.bf16.mxu0 %v2037
    %2085 = vmatpush2.bf16.msra.mxu0 %v2036
    %2086 = vmatprep.subr.bf16.mxu0 %v2033
    %2087 = vmatpush2.bf16.msra.mxu0 %v2032
    %2088 = vmatprep.subr.bf16.mxu0 %v2029
    %2089 = vmatpush2.bf16.msra.mxu0 %v2028
    %2090 = vmatprep.subr.bf16.mxu0 %v2025
    %2091 = vmatpush2.bf16.msra.mxu0 %v2024
    %2092 = vmatprep.subr.bf16.mxu0 %v2021
    %2093 = vmatpush2.bf16.msra.mxu0 %v2020
    %2094 = vmatprep.subr.bf16.mxu0 %v2017
    %2095 = vmatpush2.bf16.msra.mxu0 %v2016
    %2096 = vmatprep.subr.bf16.mxu0 %v2013
    %2097 = vmatpush2.bf16.msra.mxu0 %v2012
    %2098 = vmatprep.mubr.bf16.mxu0 %v1979
    %2099 = vmatmul.mubr.bf16.gmra.mxu0 %v1978
    %v2100 = vpop.f32.mrf.mxu0
    %v2101 = vadd.f32 %v2049, %v2100
    %v2102 = vpop.f32.mrf.mxu0
    %v2103 = vadd.f32 %v2053, %v2102
    %v2104 = vpop.f32.mrf.mxu0
    %v2105 = vpop.f32.mrf.mxu0
    %2106 = vdwg.mxu0
    %2107 = vmatprep.subr.bf16.mxu0 %v2011
    %2108 = vmatpush1.bf16.msra.mxu0 %v2010
    %2109 = vmatprep.subr.bf16.mxu0 %v2007
    %2110 = vmatpush1.bf16.msra.mxu0 %v2006
    %2111 = vmatprep.subr.bf16.mxu0 %v2003
    %2112 = vmatpush1.bf16.msra.mxu0 %v2002
    %2113 = vmatprep.subr.bf16.mxu0 %v1999
    %2114 = vmatpush1.bf16.msra.mxu0 %v1998
    %2115 = vmatprep.subr.bf16.mxu0 %v1995
    %2116 = vmatpush1.bf16.msra.mxu0 %v1994
    %2117 = vmatprep.subr.bf16.mxu0 %v1991
    %2118 = vmatpush1.bf16.msra.mxu0 %v1990
    %2119 = vmatprep.subr.bf16.mxu0 %v1987
    %2120 = vmatpush1.bf16.msra.mxu0 %v1986
    %2121 = vmatprep.subr.bf16.mxu0 %v1983
    %2122 = vmatpush1.bf16.msra.mxu0 %v1982
    %2123 = vmatprep.subr.bf16.mxu0 %v2043
    %2124 = vmatpush2.bf16.msra.mxu0 %v2042
    %2125 = vmatprep.subr.bf16.mxu0 %v2039
    %2126 = vmatpush2.bf16.msra.mxu0 %v2038
    %2127 = vmatprep.subr.bf16.mxu0 %v2035
    %2128 = vmatpush2.bf16.msra.mxu0 %v2034
    %2129 = vmatprep.subr.bf16.mxu0 %v2031
    %2130 = vmatpush2.bf16.msra.mxu0 %v2030
    %2131 = vmatprep.subr.bf16.mxu0 %v2027
    %2132 = vmatpush2.bf16.msra.mxu0 %v2026
    %2133 = vmatprep.subr.bf16.mxu0 %v2023
    %2134 = vmatpush2.bf16.msra.mxu0 %v2022
    %2135 = vmatprep.subr.bf16.mxu0 %v2019
    %2136 = vmatpush2.bf16.msra.mxu0 %v2018
    %2137 = vmatprep.subr.bf16.mxu0 %v2015
    %2138 = vmatpush2.bf16.msra.mxu0 %v2014
    %2139 = vmatprep.mubr.bf16.mxu0 %v1979
    %2140 = vmatmul.mubr.bf16.gmra.mxu0 %v1978
    %v2141 = vpop.f32.mrf.mxu0
    %v2142 = vadd.f32 %v2057, %v2141
    %v2143 = vpop.f32.mrf.mxu0
    %v2144 = vadd.f32 %v2061, %v2143
    %v2145 = vpop.f32.mrf.mxu0
    %v2146 = vpop.f32.mrf.mxu0
    %2147 = vdwg.mxu0
    %v2148 = vmax.f32 %v2101, 0.0
    %v2149 = vmax.f32 %v2103, 0.0
    %v2150 = vmax.f32 %v2142, 0.0
    %v2151 = vmax.f32 %v2144, 0.0
    %v2152 = vld [vmem:[%s41] sm:$0xff]
    %v2153 = vld [vmem:[%s41 + $0x8] sm:$0xff]
    %v2154 = vld [vmem:[%s41 + $0x10] sm:$0xff]
    %v2155 = vld [vmem:[%s41 + $0x18] sm:$0xff]
    %v2156 = vld [vmem:[%s41 + $0x20] sm:$0xff]
    %v2157 = vld [vmem:[%s41 + $0x28] sm:$0xff]
    %v2158 = vld [vmem:[%s41 + $0x30] sm:$0xff]
    %v2159 = vld [vmem:[%s41 + $0x38] sm:$0xff]
    %v2160 = vld [vmem:[%s41 + $0x40] sm:$0xff]
    %v2161 = vld [vmem:[%s41 + $0x48] sm:$0xff]
    %v2162 = vld [vmem:[%s41 + $0x50] sm:$0xff]
    %v2163 = vld [vmem:[%s41 + $0x58] sm:$0xff]
    %v2164 = vld [vmem:[%s41 + $0x60] sm:$0xff]
    %v2165 = vld [vmem:[%s41 + $0x68] sm:$0xff]
    %v2166 = vld [vmem:[%s41 + $0x70] sm:$0xff]
    %v2167 = vld [vmem:[%s41 + $0x78] sm:$0xff]
    %v2168 = vld [vmem:[%s41 + $0x80] sm:$0xff]
    %v2169 = vld [vmem:[%s41 + $0x88] sm:$0xff]
    %v2170 = vld [vmem:[%s41 + $0x90] sm:$0xff]
    %v2171 = vld [vmem:[%s41 + $0x98] sm:$0xff]
    %v2172 = vld [vmem:[%s41 + $0xa0] sm:$0xff]
    %v2173 = vld [vmem:[%s41 + $0xa8] sm:$0xff]
    %v2174 = vld [vmem:[%s41 + $0xb0] sm:$0xff]
    %v2175 = vld [vmem:[%s41 + $0xb8] sm:$0xff]
    %v2176 = vld [vmem:[%s41 + $0xc0] sm:$0xff]
    %v2177 = vld [vmem:[%s41 + $0xc8] sm:$0xff]
    %v2178 = vld [vmem:[%s41 + $0xd0] sm:$0xff]
    %v2179 = vld [vmem:[%s41 + $0xd8] sm:$0xff]
    %v2180 = vld [vmem:[%s41 + $0xe0] sm:$0xff]
    %v2181 = vld [vmem:[%s41 + $0xe8] sm:$0xff]
    %v2182 = vld [vmem:[%s41 + $0xf0] sm:$0xff]
    %v2183 = vld [vmem:[%s41 + $0xf8] sm:$0xff]
    %v2184 = vld [vmem:[%s41 + $0x100] sm:$0xff]
    %v2185 = vld [vmem:[%s41 + $0x108] sm:$0xff]
    %v2186 = vld [vmem:[%s41 + $0x110] sm:$0xff]
    %v2187 = vld [vmem:[%s41 + $0x118] sm:$0xff]
    %v2188 = vld [vmem:[%s41 + $0x120] sm:$0xff]
    %v2189 = vld [vmem:[%s41 + $0x128] sm:$0xff]
    %v2190 = vld [vmem:[%s41 + $0x130] sm:$0xff]
    %v2191 = vld [vmem:[%s41 + $0x138] sm:$0xff]
    %v2192 = vld [vmem:[%s41 + $0x140] sm:$0xff]
    %v2193 = vld [vmem:[%s41 + $0x148] sm:$0xff]
    %v2194 = vld [vmem:[%s41 + $0x150] sm:$0xff]
    %v2195 = vld [vmem:[%s41 + $0x158] sm:$0xff]
    %v2196 = vld [vmem:[%s41 + $0x160] sm:$0xff]
    %v2197 = vld [vmem:[%s41 + $0x168] sm:$0xff]
    %v2198 = vld [vmem:[%s41 + $0x170] sm:$0xff]
    %v2199 = vld [vmem:[%s41 + $0x178] sm:$0xff]
    %v2200 = vld [vmem:[%s41 + $0x180] sm:$0xff]
    %v2201 = vld [vmem:[%s41 + $0x188] sm:$0xff]
    %v2202 = vld [vmem:[%s41 + $0x190] sm:$0xff]
    %v2203 = vld [vmem:[%s41 + $0x198] sm:$0xff]
    %v2204 = vld [vmem:[%s41 + $0x1a0] sm:$0xff]
    %v2205 = vld [vmem:[%s41 + $0x1a8] sm:$0xff]
    %v2206 = vld [vmem:[%s41 + $0x1b0] sm:$0xff]
    %v2207 = vld [vmem:[%s41 + $0x1b8] sm:$0xff]
    %v2208 = vld [vmem:[%s41 + $0x1c0] sm:$0xff]
    %v2209 = vld [vmem:[%s41 + $0x1c8] sm:$0xff]
    %v2210 = vld [vmem:[%s41 + $0x1d0] sm:$0xff]
    %v2211 = vld [vmem:[%s41 + $0x1d8] sm:$0xff]
    %v2212 = vld [vmem:[%s41 + $0x1e0] sm:$0xff]
    %v2213 = vld [vmem:[%s41 + $0x1e8] sm:$0xff]
    %v2214 = vld [vmem:[%s41 + $0x1f0] sm:$0xff]
    %v2215 = vld [vmem:[%s41 + $0x1f8] sm:$0xff]
    %v2216 = vpack.c.bf16 %v2148, %v2148
    %v2217 = vpack.c.bf16 %v2149, %v2149
    %v2218 = vpack.c.bf16 %v2150, %v2150
    %v2219 = vpack.c.bf16 %v2151, %v2151
    %v2220 = vpack.c.bf16 %v2153, %v2152
    %v2221 = vpack.c.bf16 %v2155, %v2154
    %v2222 = vpack.c.bf16 %v2157, %v2156
    %v2223 = vpack.c.bf16 %v2159, %v2158
    %v2224 = vpack.c.bf16 %v2161, %v2160
    %v2225 = vpack.c.bf16 %v2163, %v2162
    %v2226 = vpack.c.bf16 %v2165, %v2164
    %v2227 = vpack.c.bf16 %v2167, %v2166
    %v2228 = vpack.c.bf16 %v2169, %v2168
    %v2229 = vpack.c.bf16 %v2171, %v2170
    %v2230 = vpack.c.bf16 %v2173, %v2172
    %v2231 = vpack.c.bf16 %v2175, %v2174
    %v2232 = vpack.c.bf16 %v2177, %v2176
    %v2233 = vpack.c.bf16 %v2179, %v2178
    %v2234 = vpack.c.bf16 %v2181, %v2180
    %v2235 = vpack.c.bf16 %v2183, %v2182
    %v2236 = vpack.c.bf16 %v2185, %v2184
    %v2237 = vpack.c.bf16 %v2187, %v2186
    %v2238 = vpack.c.bf16 %v2189, %v2188
    %v2239 = vpack.c.bf16 %v2191, %v2190
    %v2240 = vpack.c.bf16 %v2193, %v2192
    %v2241 = vpack.c.bf16 %v2195, %v2194
    %v2242 = vpack.c.bf16 %v2197, %v2196
    %v2243 = vpack.c.bf16 %v2199, %v2198
    %v2244 = vpack.c.bf16 %v2201, %v2200
    %v2245 = vpack.c.bf16 %v2203, %v2202
    %v2246 = vpack.c.bf16 %v2205, %v2204
    %v2247 = vpack.c.bf16 %v2207, %v2206
    %v2248 = vpack.c.bf16 %v2209, %v2208
    %v2249 = vpack.c.bf16 %v2211, %v2210
    %v2250 = vpack.c.bf16 %v2213, %v2212
    %v2251 = vpack.c.bf16 %v2215, %v2214
    %v2252 = vld [vmem:[#allocation22] sm:$0x1]
    %v2254 = vlaneseq
    %v2255 = vshrl.u32 %v2254, 7
    %v2256 = vsub.s32 0, %v2255
    %v2257 = vrot.slane %v2252, %v2256
    %2259 = vmatprep.subr.bf16.mxu0 0
    %2260 = vmatpush1.bf16.msra.mxu0 %v2227
    %2261 = vmatprep.subr.bf16.mxu0 0
    %2262 = vmatpush1.bf16.msra.mxu0 %v2226
    %2263 = vmatprep.subr.bf16.mxu0 0
    %2264 = vmatpush1.bf16.msra.mxu0 %v2225
    %2265 = vmatprep.subr.bf16.mxu0 0
    %2266 = vmatpush1.bf16.msra.mxu0 %v2224
    %2267 = vmatprep.subr.bf16.mxu0 0
    %2268 = vmatpush1.bf16.msra.mxu0 %v2223
    %2269 = vmatprep.subr.bf16.mxu0 0
    %2270 = vmatpush1.bf16.msra.mxu0 %v2222
    %2271 = vmatprep.subr.bf16.mxu0 0
    %2272 = vmatpush1.bf16.msra.mxu0 %v2221
    %2273 = vmatprep.subr.bf16.mxu0 0
    %2274 = vmatpush1.bf16.msra.mxu0 %v2220
    %2275 = vmatprep.subr.bf16.mxu0 0
    %2276 = vmatpush2.bf16.msra.mxu0 %v2235
    %2277 = vmatprep.subr.bf16.mxu0 0
    %2278 = vmatpush2.bf16.msra.mxu0 %v2234
    %2279 = vmatprep.subr.bf16.mxu0 0
    %2280 = vmatpush2.bf16.msra.mxu0 %v2233
    %2281 = vmatprep.subr.bf16.mxu0 0
    %2282 = vmatpush2.bf16.msra.mxu0 %v2232
    %2283 = vmatprep.subr.bf16.mxu0 0
    %2284 = vmatpush2.bf16.msra.mxu0 %v2231
    %2285 = vmatprep.subr.bf16.mxu0 0
    %2286 = vmatpush2.bf16.msra.mxu0 %v2230
    %2287 = vmatprep.subr.bf16.mxu0 0
    %2288 = vmatpush2.bf16.msra.mxu0 %v2229
    %2289 = vmatprep.subr.bf16.mxu0 0
    %2290 = vmatpush2.bf16.msra.mxu0 %v2228
    %2291 = vmatprep.mubr.bf16.mxu0 %v2217
    %2292 = vmatmul.mubr.bf16.gmra.mxu0 %v2216
    %v2293 = vpop.f32.mrf.mxu0
    %v2294 = vadd.f32 %v2257, %v2293
    %v2295 = vpop.f32.mrf.mxu0
    %v2296 = vpop.f32.mrf.mxu0
    %v2297 = vpop.f32.mrf.mxu0
    %2298 = vdwg.mxu0
    %2299 = vmatprep.subr.bf16.mxu0 0
    %2300 = vmatpush1.bf16.msra.mxu0 %v2243
    %2301 = vmatprep.subr.bf16.mxu0 0
    %2302 = vmatpush1.bf16.msra.mxu0 %v2242
    %2303 = vmatprep.subr.bf16.mxu0 0
    %2304 = vmatpush1.bf16.msra.mxu0 %v2241
    %2305 = vmatprep.subr.bf16.mxu0 0
    %2306 = vmatpush1.bf16.msra.mxu0 %v2240
    %2307 = vmatprep.subr.bf16.mxu0 0
    %2308 = vmatpush1.bf16.msra.mxu0 %v2239
    %2309 = vmatprep.subr.bf16.mxu0 0
    %2310 = vmatpush1.bf16.msra.mxu0 %v2238
    %2311 = vmatprep.subr.bf16.mxu0 0
    %2312 = vmatpush1.bf16.msra.mxu0 %v2237
    %2313 = vmatprep.subr.bf16.mxu0 0
    %2314 = vmatpush1.bf16.msra.mxu0 %v2236
    %2315 = vmatprep.subr.bf16.mxu0 0
    %2316 = vmatpush2.bf16.msra.mxu0 %v2251
    %2317 = vmatprep.subr.bf16.mxu0 0
    %2318 = vmatpush2.bf16.msra.mxu0 %v2250
    %2319 = vmatprep.subr.bf16.mxu0 0
    %2320 = vmatpush2.bf16.msra.mxu0 %v2249
    %2321 = vmatprep.subr.bf16.mxu0 0
    %2322 = vmatpush2.bf16.msra.mxu0 %v2248
    %2323 = vmatprep.subr.bf16.mxu0 0
    %2324 = vmatpush2.bf16.msra.mxu0 %v2247
    %2325 = vmatprep.subr.bf16.mxu0 0
    %2326 = vmatpush2.bf16.msra.mxu0 %v2246
    %2327 = vmatprep.subr.bf16.mxu0 0
    %2328 = vmatpush2.bf16.msra.mxu0 %v2245
    %2329 = vmatprep.subr.bf16.mxu0 0
    %2330 = vmatpush2.bf16.msra.mxu0 %v2244
    %2331 = vmatprep.mubr.bf16.mxu0 %v2219
    %2332 = vmatmul.mubr.bf16.gmra.mxu0 %v2218
    %v2333 = vpop.f32.mrf.mxu0
    %v2334 = vadd.f32 %v2294, %v2333
    %v2335 = vpop.f32.mrf.mxu0
    %v2336 = vpop.f32.mrf.mxu0
    %v2337 = vpop.f32.mrf.mxu0
    %2338 = vdwg.mxu0
    %2339 = vst.msk [vmem:[#allocation43] sm:$0xff] %vm1253, %v2334
    %v2340 = vld [vmem:[%s45] sm:$0xff]
    %v2341 = vld [vmem:[%s45 + $0x8] sm:$0xff]
    %v2342 = vld [vmem:[%s45 + $0x10] sm:$0xff]
    %v2343 = vld [vmem:[%s45 + $0x18] sm:$0xff]
    %v2344 = vld [vmem:[%s45 + $0x20] sm:$0xff]
    %v2345 = vld [vmem:[%s45 + $0x28] sm:$0xff]
    %v2346 = vld [vmem:[%s45 + $0x30] sm:$0xff]
    %v2347 = vld [vmem:[%s45 + $0x38] sm:$0xff]
    %v2348 = vpack.c.bf16 %v2342, %v2340
    %v2349 = vpack.c.bf16 %v2343, %v2341
    %v2350 = vpack.c.bf16 %v2346, %v2344
    %v2351 = vpack.c.bf16 %v2347, %v2345
    %v2352 = vld [vmem:[#allocation23] sm:$0xff]
    %v2353 = vld [vmem:[#allocation23 + $0x8] sm:$0xff]
    %v2354 = vld [vmem:[#allocation23 + $0x10] sm:$0xff]
    %v2355 = vld [vmem:[#allocation23 + $0x18] sm:$0xff]
    %v2356 = vpack.c.bf16 %v1217, %v1217
    %v2357 = vpack.c.bf16 %v2354, %v2352
    %v2358 = vpack.c.bf16 %v2355, %v2353
    %v2360 = vsel %vm1770, %v2356, 0
    %2362 = vmatprep.subr.bf16.mxu0 0
    %2363 = vmatpush1.bf16.msra.mxu0 0
    %2364 = vmatprep.subr.bf16.mxu0 0
    %2365 = vmatpush1.bf16.msra.mxu0 0
    %2366 = vmatprep.subr.bf16.mxu0 0
    %2367 = vmatpush1.bf16.msra.mxu0 0
    %2368 = vmatprep.subr.bf16.mxu0 0
    %2369 = vmatpush1.bf16.msra.mxu0 0
    %2370 = vmatprep.subr.bf16.mxu0 0
    %2371 = vmatpush1.bf16.msra.mxu0 0
    %2372 = vmatprep.subr.bf16.mxu0 0
    %2373 = vmatpush1.bf16.msra.mxu0 0
    %2374 = vmatprep.subr.bf16.mxu0 0
    %2375 = vmatpush1.bf16.msra.mxu0 0
    %2376 = vmatprep.subr.bf16.mxu0 %v2358
    %2377 = vmatpush1.bf16.msra.mxu0 %v2357
    %2378 = vmatprep.subr.bf16.mxu0 0
    %2379 = vmatpush2.bf16.msra.mxu0 0
    %2380 = vmatprep.subr.bf16.mxu0 0
    %2381 = vmatpush2.bf16.msra.mxu0 0
    %2382 = vmatprep.subr.bf16.mxu0 0
    %2383 = vmatpush2.bf16.msra.mxu0 0
    %2384 = vmatprep.subr.bf16.mxu0 0
    %2385 = vmatpush2.bf16.msra.mxu0 0
    %2386 = vmatprep.subr.bf16.mxu0 0
    %2387 = vmatpush2.bf16.msra.mxu0 0
    %2388 = vmatprep.subr.bf16.mxu0 0
    %2389 = vmatpush2.bf16.msra.mxu0 0
    %2390 = vmatprep.subr.bf16.mxu0 0
    %2391 = vmatpush2.bf16.msra.mxu0 0
    %2392 = vmatprep.subr.bf16.mxu0 0
    %2393 = vmatpush2.bf16.msra.mxu0 0
    %2394 = vmatprep.mubr.bf16.mxu0 0
    %2395 = vmatmul.mubr.bf16.gmra.mxu0 %v2360
    %v2396 = vpop.f32.mrf.mxu0
    %v2397 = vadd.f32 0.0, %v2396
    %v2398 = vpop.f32.mrf.mxu0
    %v2399 = vadd.f32 0.0, %v2398
    %v2400 = vpop.f32.mrf.mxu0
    %v2401 = vpop.f32.mrf.mxu0
    %2402 = vdwg.mxu0
    %2403 = vmatprep.subr.bf16.mxu0 0
    %2404 = vmatpush1.bf16.msra.mxu0 0
    %2405 = vmatprep.subr.bf16.mxu0 0
    %2406 = vmatpush1.bf16.msra.mxu0 0
    %2407 = vmatprep.subr.bf16.mxu0 0
    %2408 = vmatpush1.bf16.msra.mxu0 0
    %2409 = vmatprep.subr.bf16.mxu0 0
    %2410 = vmatpush1.bf16.msra.mxu0 0
    %2411 = vmatprep.subr.bf16.mxu0 0
    %2412 = vmatpush1.bf16.msra.mxu0 0
    %2413 = vmatprep.subr.bf16.mxu0 0
    %2414 = vmatpush1.bf16.msra.mxu0 0
    %2415 = vmatprep.subr.bf16.mxu0 %v2351
    %2416 = vmatpush1.bf16.msra.mxu0 %v2350
    %2417 = vmatprep.subr.bf16.mxu0 %v2349
    %2418 = vmatpush1.bf16.msra.mxu0 %v2348
    %2419 = vmatprep.subr.bf16.mxu0 0
    %2420 = vmatpush2.bf16.msra.mxu0 0
    %2421 = vmatprep.subr.bf16.mxu0 0
    %2422 = vmatpush2.bf16.msra.mxu0 0
    %2423 = vmatprep.subr.bf16.mxu0 0
    %2424 = vmatpush2.bf16.msra.mxu0 0
    %2425 = vmatprep.subr.bf16.mxu0 0
    %2426 = vmatpush2.bf16.msra.mxu0 0
    %2427 = vmatprep.subr.bf16.mxu0 0
    %2428 = vmatpush2.bf16.msra.mxu0 0
    %2429 = vmatprep.subr.bf16.mxu0 0
    %2430 = vmatpush2.bf16.msra.mxu0 0
    %2431 = vmatprep.subr.bf16.mxu0 0
    %2432 = vmatpush2.bf16.msra.mxu0 0
    %2433 = vmatprep.subr.bf16.mxu0 0
    %2434 = vmatpush2.bf16.msra.mxu0 0
    %2435 = vmatprep.mubr.bf16.mxu0 0
    %2436 = vmatmul.mubr.bf16.gmra.mxu0 %v486
    %v2437 = vpop.f32.mrf.mxu0
    %v2438 = vadd.f32 %v2397, %v2437
    %v2439 = vpop.f32.mrf.mxu0
    %v2440 = vadd.f32 %v2399, %v2439
    %v2441 = vpop.f32.mrf.mxu0
    %v2442 = vpop.f32.mrf.mxu0
    %2443 = vdwg.mxu0
    %v2444 = vld [vmem:[#allocation25] sm:$0x3]
    %v2446 = vlaneseq
    %v2447 = vshrl.u32 %v2446, 7
    %v2448 = vsub.s32 0, %v2447
    %v2449 = vrot.slane %v2444, %v2448
    %v2450 = vlaneseq
    %v2451 = vshrl.u32 %v2450, 7
    %v2452 = vsub.s32 1, %v2451
    %v2453 = vrot.slane %v2444, %v2452
    %v2456 = vadd.f32 %v2438, %v2449
    %v2457 = vadd.f32 %v2440, %v2453
    %v2458 = vmax.f32 %v2456, 0.0
    %v2459 = vmax.f32 %v2457, 0.0
    %v2460 = vld [vmem:[%s51] sm:$0xff]
    %v2461 = vld [vmem:[%s51 + $0x8] sm:$0xff]
    %v2462 = vld [vmem:[%s51 + $0x10] sm:$0xff]
    %v2463 = vld [vmem:[%s51 + $0x18] sm:$0xff]
    %v2464 = vld [vmem:[%s51 + $0x20] sm:$0xff]
    %v2465 = vld [vmem:[%s51 + $0x28] sm:$0xff]
    %v2466 = vld [vmem:[%s51 + $0x30] sm:$0xff]
    %v2467 = vld [vmem:[%s51 + $0x38] sm:$0xff]
    %v2468 = vld [vmem:[%s51 + $0x40] sm:$0xff]
    %v2469 = vld [vmem:[%s51 + $0x48] sm:$0xff]
    %v2470 = vld [vmem:[%s51 + $0x50] sm:$0xff]
    %v2471 = vld [vmem:[%s51 + $0x58] sm:$0xff]
    %v2472 = vld [vmem:[%s51 + $0x60] sm:$0xff]
    %v2473 = vld [vmem:[%s51 + $0x68] sm:$0xff]
    %v2474 = vld [vmem:[%s51 + $0x70] sm:$0xff]
    %v2475 = vld [vmem:[%s51 + $0x78] sm:$0xff]
    %v2476 = vld [vmem:[%s51 + $0x80] sm:$0xff]
    %v2477 = vld [vmem:[%s51 + $0x88] sm:$0xff]
    %v2478 = vld [vmem:[%s51 + $0x90] sm:$0xff]
    %v2479 = vld [vmem:[%s51 + $0x98] sm:$0xff]
    %v2480 = vld [vmem:[%s51 + $0xa0] sm:$0xff]
    %v2481 = vld [vmem:[%s51 + $0xa8] sm:$0xff]
    %v2482 = vld [vmem:[%s51 + $0xb0] sm:$0xff]
    %v2483 = vld [vmem:[%s51 + $0xb8] sm:$0xff]
    %v2484 = vld [vmem:[%s51 + $0xc0] sm:$0xff]
    %v2485 = vld [vmem:[%s51 + $0xc8] sm:$0xff]
    %v2486 = vld [vmem:[%s51 + $0xd0] sm:$0xff]
    %v2487 = vld [vmem:[%s51 + $0xd8] sm:$0xff]
    %v2488 = vld [vmem:[%s51 + $0xe0] sm:$0xff]
    %v2489 = vld [vmem:[%s51 + $0xe8] sm:$0xff]
    %v2490 = vld [vmem:[%s51 + $0xf0] sm:$0xff]
    %v2491 = vld [vmem:[%s51 + $0xf8] sm:$0xff]
    %v2492 = vld [vmem:[%s51 + $0x100] sm:$0xff]
    %v2493 = vld [vmem:[%s51 + $0x108] sm:$0xff]
    %v2494 = vld [vmem:[%s51 + $0x110] sm:$0xff]
    %v2495 = vld [vmem:[%s51 + $0x118] sm:$0xff]
    %v2496 = vld [vmem:[%s51 + $0x120] sm:$0xff]
    %v2497 = vld [vmem:[%s51 + $0x128] sm:$0xff]
    %v2498 = vld [vmem:[%s51 + $0x130] sm:$0xff]
    %v2499 = vld [vmem:[%s51 + $0x138] sm:$0xff]
    %v2500 = vld [vmem:[%s51 + $0x140] sm:$0xff]
    %v2501 = vld [vmem:[%s51 + $0x148] sm:$0xff]
    %v2502 = vld [vmem:[%s51 + $0x150] sm:$0xff]
    %v2503 = vld [vmem:[%s51 + $0x158] sm:$0xff]
    %v2504 = vld [vmem:[%s51 + $0x160] sm:$0xff]
    %v2505 = vld [vmem:[%s51 + $0x168] sm:$0xff]
    %v2506 = vld [vmem:[%s51 + $0x170] sm:$0xff]
    %v2507 = vld [vmem:[%s51 + $0x178] sm:$0xff]
    %v2508 = vld [vmem:[%s51 + $0x180] sm:$0xff]
    %v2509 = vld [vmem:[%s51 + $0x188] sm:$0xff]
    %v2510 = vld [vmem:[%s51 + $0x190] sm:$0xff]
    %v2511 = vld [vmem:[%s51 + $0x198] sm:$0xff]
    %v2512 = vld [vmem:[%s51 + $0x1a0] sm:$0xff]
    %v2513 = vld [vmem:[%s51 + $0x1a8] sm:$0xff]
    %v2514 = vld [vmem:[%s51 + $0x1b0] sm:$0xff]
    %v2515 = vld [vmem:[%s51 + $0x1b8] sm:$0xff]
    %v2516 = vld [vmem:[%s51 + $0x1c0] sm:$0xff]
    %v2517 = vld [vmem:[%s51 + $0x1c8] sm:$0xff]
    %v2518 = vld [vmem:[%s51 + $0x1d0] sm:$0xff]
    %v2519 = vld [vmem:[%s51 + $0x1d8] sm:$0xff]
    %v2520 = vld [vmem:[%s51 + $0x1e0] sm:$0xff]
    %v2521 = vld [vmem:[%s51 + $0x1e8] sm:$0xff]
    %v2522 = vld [vmem:[%s51 + $0x1f0] sm:$0xff]
    %v2523 = vld [vmem:[%s51 + $0x1f8] sm:$0xff]
    %v2524 = vpack.c.bf16 %v2458, %v2458
    %v2525 = vpack.c.bf16 %v2459, %v2459
    %v2526 = vpack.c.bf16 %v2462, %v2460
    %v2527 = vpack.c.bf16 %v2463, %v2461
    %v2528 = vpack.c.bf16 %v2466, %v2464
    %v2529 = vpack.c.bf16 %v2467, %v2465
    %v2530 = vpack.c.bf16 %v2470, %v2468
    %v2531 = vpack.c.bf16 %v2471, %v2469
    %v2532 = vpack.c.bf16 %v2474, %v2472
    %v2533 = vpack.c.bf16 %v2475, %v2473
    %v2534 = vpack.c.bf16 %v2478, %v2476
    %v2535 = vpack.c.bf16 %v2479, %v2477
    %v2536 = vpack.c.bf16 %v2482, %v2480
    %v2537 = vpack.c.bf16 %v2483, %v2481
    %v2538 = vpack.c.bf16 %v2486, %v2484
    %v2539 = vpack.c.bf16 %v2487, %v2485
    %v2540 = vpack.c.bf16 %v2490, %v2488
    %v2541 = vpack.c.bf16 %v2491, %v2489
    %v2542 = vpack.c.bf16 %v2494, %v2492
    %v2543 = vpack.c.bf16 %v2495, %v2493
    %v2544 = vpack.c.bf16 %v2498, %v2496
    %v2545 = vpack.c.bf16 %v2499, %v2497
    %v2546 = vpack.c.bf16 %v2502, %v2500
    %v2547 = vpack.c.bf16 %v2503, %v2501
    %v2548 = vpack.c.bf16 %v2506, %v2504
    %v2549 = vpack.c.bf16 %v2507, %v2505
    %v2550 = vpack.c.bf16 %v2510, %v2508
    %v2551 = vpack.c.bf16 %v2511, %v2509
    %v2552 = vpack.c.bf16 %v2514, %v2512
    %v2553 = vpack.c.bf16 %v2515, %v2513
    %v2554 = vpack.c.bf16 %v2518, %v2516
    %v2555 = vpack.c.bf16 %v2519, %v2517
    %v2556 = vpack.c.bf16 %v2522, %v2520
    %v2557 = vpack.c.bf16 %v2523, %v2521
    %v2558 = vld [vmem:[#allocation26] sm:$0x3]
    %v2560 = vlaneseq
    %v2561 = vshrl.u32 %v2560, 7
    %v2562 = vsub.s32 0, %v2561
    %v2563 = vrot.slane %v2558, %v2562
    %v2564 = vlaneseq
    %v2565 = vshrl.u32 %v2564, 7
    %v2566 = vsub.s32 1, %v2565
    %v2567 = vrot.slane %v2558, %v2566
    %2570 = vmatprep.subr.bf16.mxu0 %v2541
    %2571 = vmatpush1.bf16.msra.mxu0 %v2540
    %2572 = vmatprep.subr.bf16.mxu0 %v2539
    %2573 = vmatpush1.bf16.msra.mxu0 %v2538
    %2574 = vmatprep.subr.bf16.mxu0 %v2537
    %2575 = vmatpush1.bf16.msra.mxu0 %v2536
    %2576 = vmatprep.subr.bf16.mxu0 %v2535
    %2577 = vmatpush1.bf16.msra.mxu0 %v2534
    %2578 = vmatprep.subr.bf16.mxu0 %v2533
    %2579 = vmatpush1.bf16.msra.mxu0 %v2532
    %2580 = vmatprep.subr.bf16.mxu0 %v2531
    %2581 = vmatpush1.bf16.msra.mxu0 %v2530
    %2582 = vmatprep.subr.bf16.mxu0 %v2529
    %2583 = vmatpush1.bf16.msra.mxu0 %v2528
    %2584 = vmatprep.subr.bf16.mxu0 %v2527
    %2585 = vmatpush1.bf16.msra.mxu0 %v2526
    %2586 = vmatprep.subr.bf16.mxu0 %v2557
    %2587 = vmatpush2.bf16.msra.mxu0 %v2556
    %2588 = vmatprep.subr.bf16.mxu0 %v2555
    %2589 = vmatpush2.bf16.msra.mxu0 %v2554
    %2590 = vmatprep.subr.bf16.mxu0 %v2553
    %2591 = vmatpush2.bf16.msra.mxu0 %v2552
    %2592 = vmatprep.subr.bf16.mxu0 %v2551
    %2593 = vmatpush2.bf16.msra.mxu0 %v2550
    %2594 = vmatprep.subr.bf16.mxu0 %v2549
    %2595 = vmatpush2.bf16.msra.mxu0 %v2548
    %2596 = vmatprep.subr.bf16.mxu0 %v2547
    %2597 = vmatpush2.bf16.msra.mxu0 %v2546
    %2598 = vmatprep.subr.bf16.mxu0 %v2545
    %2599 = vmatpush2.bf16.msra.mxu0 %v2544
    %2600 = vmatprep.subr.bf16.mxu0 %v2543
    %2601 = vmatpush2.bf16.msra.mxu0 %v2542
    %2602 = vmatprep.mubr.bf16.mxu0 %v2525
    %2603 = vmatmul.mubr.bf16.gmra.mxu0 %v2524
    %v2604 = vpop.f32.mrf.mxu0
    %v2605 = vadd.f32 %v2563, %v2604
    %v2606 = vpop.f32.mrf.mxu0
    %v2607 = vadd.f32 %v2567, %v2606
    %v2608 = vpop.f32.mrf.mxu0
    %v2609 = vpop.f32.mrf.mxu0
    %2610 = vdwg.mxu0
    %v2611 = vmax.f32 %v2605, 0.0
    %v2612 = vmax.f32 %v2607, 0.0
    %v2613 = vld [vmem:[%s55] sm:$0xff]
    %v2614 = vld [vmem:[%s55 + $0x8] sm:$0xff]
    %v2615 = vld [vmem:[%s55 + $0x10] sm:$0xff]
    %v2616 = vld [vmem:[%s55 + $0x18] sm:$0xff]
    %v2617 = vld [vmem:[%s55 + $0x20] sm:$0xff]
    %v2618 = vld [vmem:[%s55 + $0x28] sm:$0xff]
    %v2619 = vld [vmem:[%s55 + $0x30] sm:$0xff]
    %v2620 = vld [vmem:[%s55 + $0x38] sm:$0xff]
    %v2621 = vld [vmem:[%s55 + $0x40] sm:$0xff]
    %v2622 = vld [vmem:[%s55 + $0x48] sm:$0xff]
    %v2623 = vld [vmem:[%s55 + $0x50] sm:$0xff]
    %v2624 = vld [vmem:[%s55 + $0x58] sm:$0xff]
    %v2625 = vld [vmem:[%s55 + $0x60] sm:$0xff]
    %v2626 = vld [vmem:[%s55 + $0x68] sm:$0xff]
    %v2627 = vld [vmem:[%s55 + $0x70] sm:$0xff]
    %v2628 = vld [vmem:[%s55 + $0x78] sm:$0xff]
    %v2629 = vld [vmem:[%s55 + $0x80] sm:$0xff]
    %v2630 = vld [vmem:[%s55 + $0x88] sm:$0xff]
    %v2631 = vld [vmem:[%s55 + $0x90] sm:$0xff]
    %v2632 = vld [vmem:[%s55 + $0x98] sm:$0xff]
    %v2633 = vld [vmem:[%s55 + $0xa0] sm:$0xff]
    %v2634 = vld [vmem:[%s55 + $0xa8] sm:$0xff]
    %v2635 = vld [vmem:[%s55 + $0xb0] sm:$0xff]
    %v2636 = vld [vmem:[%s55 + $0xb8] sm:$0xff]
    %v2637 = vld [vmem:[%s55 + $0xc0] sm:$0xff]
    %v2638 = vld [vmem:[%s55 + $0xc8] sm:$0xff]
    %v2639 = vld [vmem:[%s55 + $0xd0] sm:$0xff]
    %v2640 = vld [vmem:[%s55 + $0xd8] sm:$0xff]
    %v2641 = vld [vmem:[%s55 + $0xe0] sm:$0xff]
    %v2642 = vld [vmem:[%s55 + $0xe8] sm:$0xff]
    %v2643 = vld [vmem:[%s55 + $0xf0] sm:$0xff]
    %v2644 = vld [vmem:[%s55 + $0xf8] sm:$0xff]
    %v2645 = vpack.c.bf16 %v2611, %v2611
    %v2646 = vpack.c.bf16 %v2612, %v2612
    %v2647 = vpack.c.bf16 %v2614, %v2613
    %v2648 = vpack.c.bf16 %v2616, %v2615
    %v2649 = vpack.c.bf16 %v2618, %v2617
    %v2650 = vpack.c.bf16 %v2620, %v2619
    %v2651 = vpack.c.bf16 %v2622, %v2621
    %v2652 = vpack.c.bf16 %v2624, %v2623
    %v2653 = vpack.c.bf16 %v2626, %v2625
    %v2654 = vpack.c.bf16 %v2628, %v2627
    %v2655 = vpack.c.bf16 %v2630, %v2629
    %v2656 = vpack.c.bf16 %v2632, %v2631
    %v2657 = vpack.c.bf16 %v2634, %v2633
    %v2658 = vpack.c.bf16 %v2636, %v2635
    %v2659 = vpack.c.bf16 %v2638, %v2637
    %v2660 = vpack.c.bf16 %v2640, %v2639
    %v2661 = vpack.c.bf16 %v2642, %v2641
    %v2662 = vpack.c.bf16 %v2644, %v2643
    %v2663 = vld [vmem:[#allocation28] sm:$0x1]
    %v2665 = vlaneseq
    %v2666 = vshrl.u32 %v2665, 7
    %v2667 = vsub.s32 0, %v2666
    %v2668 = vrot.slane %v2663, %v2667
    %2670 = vmatprep.subr.bf16.mxu0 0
    %2671 = vmatpush1.bf16.msra.mxu0 %v2654
    %2672 = vmatprep.subr.bf16.mxu0 0
    %2673 = vmatpush1.bf16.msra.mxu0 %v2653
    %2674 = vmatprep.subr.bf16.mxu0 0
    %2675 = vmatpush1.bf16.msra.mxu0 %v2652
    %2676 = vmatprep.subr.bf16.mxu0 0
    %2677 = vmatpush1.bf16.msra.mxu0 %v2651
    %2678 = vmatprep.subr.bf16.mxu0 0
    %2679 = vmatpush1.bf16.msra.mxu0 %v2650
    %2680 = vmatprep.subr.bf16.mxu0 0
    %2681 = vmatpush1.bf16.msra.mxu0 %v2649
    %2682 = vmatprep.subr.bf16.mxu0 0
    %2683 = vmatpush1.bf16.msra.mxu0 %v2648
    %2684 = vmatprep.subr.bf16.mxu0 0
    %2685 = vmatpush1.bf16.msra.mxu0 %v2647
    %2686 = vmatprep.subr.bf16.mxu0 0
    %2687 = vmatpush2.bf16.msra.mxu0 %v2662
    %2688 = vmatprep.subr.bf16.mxu0 0
    %2689 = vmatpush2.bf16.msra.mxu0 %v2661
    %2690 = vmatprep.subr.bf16.mxu0 0
    %2691 = vmatpush2.bf16.msra.mxu0 %v2660
    %2692 = vmatprep.subr.bf16.mxu0 0
    %2693 = vmatpush2.bf16.msra.mxu0 %v2659
    %2694 = vmatprep.subr.bf16.mxu0 0
    %2695 = vmatpush2.bf16.msra.mxu0 %v2658
    %2696 = vmatprep.subr.bf16.mxu0 0
    %2697 = vmatpush2.bf16.msra.mxu0 %v2657
    %2698 = vmatprep.subr.bf16.mxu0 0
    %2699 = vmatpush2.bf16.msra.mxu0 %v2656
    %2700 = vmatprep.subr.bf16.mxu0 0
    %2701 = vmatpush2.bf16.msra.mxu0 %v2655
    %2702 = vmatprep.mubr.bf16.mxu0 %v2646
    %2703 = vmatmul.mubr.bf16.gmra.mxu0 %v2645
    %v2704 = vpop.f32.mrf.mxu0
    %v2705 = vadd.f32 %v2668, %v2704
    %v2706 = vpop.f32.mrf.mxu0
    %v2707 = vpop.f32.mrf.mxu0
    %v2708 = vpop.f32.mrf.mxu0
    %2709 = vdwg.mxu0
    %v2710 = vld [vmem:[#allocation29] sm:$0xff]
    %v2711 = vld [vmem:[#allocation29 + $0x8] sm:$0xff]
    %v2712 = vld [vmem:[#allocation29 + $0x10] sm:$0xff]
    %v2713 = vld [vmem:[#allocation29 + $0x18] sm:$0xff]
    %v2714 = vpack.c.bf16 %v2705, %v2705
    %v2715 = vpack.c.bf16 %v2712, %v2710
    %v2716 = vpack.c.bf16 %v2713, %v2711
    %v2717 = vld [vmem:[#allocation31] sm:$0x3]
    %v2719 = vlaneseq
    %v2720 = vshrl.u32 %v2719, 7
    %v2721 = vsub.s32 0, %v2720
    %v2722 = vrot.slane %v2717, %v2721
    %v2723 = vlaneseq
    %v2724 = vshrl.u32 %v2723, 7
    %v2725 = vsub.s32 1, %v2724
    %v2726 = vrot.slane %v2717, %v2725
    %v2730 = vsel %vm1770, %v2714, 0
    %2732 = vmatprep.subr.bf16.mxu0 0
    %2733 = vmatpush1.bf16.msra.mxu0 0
    %2734 = vmatprep.subr.bf16.mxu0 0
    %2735 = vmatpush1.bf16.msra.mxu0 0
    %2736 = vmatprep.subr.bf16.mxu0 0
    %2737 = vmatpush1.bf16.msra.mxu0 0
    %2738 = vmatprep.subr.bf16.mxu0 0
    %2739 = vmatpush1.bf16.msra.mxu0 0
    %2740 = vmatprep.subr.bf16.mxu0 0
    %2741 = vmatpush1.bf16.msra.mxu0 0
    %2742 = vmatprep.subr.bf16.mxu0 0
    %2743 = vmatpush1.bf16.msra.mxu0 0
    %2744 = vmatprep.subr.bf16.mxu0 0
    %2745 = vmatpush1.bf16.msra.mxu0 0
    %2746 = vmatprep.subr.bf16.mxu0 %v2716
    %2747 = vmatpush1.bf16.msra.mxu0 %v2715
    %2748 = vmatprep.subr.bf16.mxu0 0
    %2749 = vmatpush2.bf16.msra.mxu0 0
    %2750 = vmatprep.subr.bf16.mxu0 0
    %2751 = vmatpush2.bf16.msra.mxu0 0
    %2752 = vmatprep.subr.bf16.mxu0 0
    %2753 = vmatpush2.bf16.msra.mxu0 0
    %2754 = vmatprep.subr.bf16.mxu0 0
    %2755 = vmatpush2.bf16.msra.mxu0 0
    %2756 = vmatprep.subr.bf16.mxu0 0
    %2757 = vmatpush2.bf16.msra.mxu0 0
    %2758 = vmatprep.subr.bf16.mxu0 0
    %2759 = vmatpush2.bf16.msra.mxu0 0
    %2760 = vmatprep.subr.bf16.mxu0 0
    %2761 = vmatpush2.bf16.msra.mxu0 0
    %2762 = vmatprep.subr.bf16.mxu0 0
    %2763 = vmatpush2.bf16.msra.mxu0 0
    %2764 = vmatprep.mubr.bf16.mxu0 0
    %2765 = vmatmul.mubr.bf16.gmra.mxu0 %v2730
    %v2766 = vpop.f32.mrf.mxu0
    %v2767 = vadd.f32 %v2722, %v2766
    %v2768 = vpop.f32.mrf.mxu0
    %v2769 = vadd.f32 %v2726, %v2768
    %v2770 = vpop.f32.mrf.mxu0
    %v2771 = vpop.f32.mrf.mxu0
    %2772 = vdwg.mxu0
    %v2773 = vmax.f32 %v2767, 0.0
    %v2774 = vmax.f32 %v2769, 0.0
    %v2775 = vld [vmem:[#allocation32] sm:$0xff]
    %v2776 = vld [vmem:[#allocation32 + $0x8] sm:$0xff]
    %v2777 = vld [vmem:[#allocation32 + $0x10] sm:$0xff]
    %v2778 = vld [vmem:[#allocation32 + $0x18] sm:$0xff]
    %v2779 = vld [vmem:[#allocation32 + $0x20] sm:$0xff]
    %v2780 = vld [vmem:[#allocation32 + $0x28] sm:$0xff]
    %v2781 = vld [vmem:[#allocation32 + $0x30] sm:$0xff]
    %v2782 = vld [vmem:[#allocation32 + $0x38] sm:$0xff]
    %v2783 = vld [vmem:[#allocation32 + $0x40] sm:$0xff]
    %v2784 = vld [vmem:[#allocation32 + $0x48] sm:$0xff]
    %v2785 = vld [vmem:[#allocation32 + $0x50] sm:$0xff]
    %v2786 = vld [vmem:[#allocation32 + $0x58] sm:$0xff]
    %v2787 = vld [vmem:[#allocation32 + $0x60] sm:$0xff]
    %v2788 = vld [vmem:[#allocation32 + $0x68] sm:$0xff]
    %v2789 = vld [vmem:[#allocation32 + $0x70] sm:$0xff]
    %v2790 = vld [vmem:[#allocation32 + $0x78] sm:$0xff]
    %v2791 = vld [vmem:[#allocation32 + $0x80] sm:$0xff]
    %v2792 = vld [vmem:[#allocation32 + $0x88] sm:$0xff]
    %v2793 = vld [vmem:[#allocation32 + $0x90] sm:$0xff]
    %v2794 = vld [vmem:[#allocation32 + $0x98] sm:$0xff]
    %v2795 = vld [vmem:[#allocation32 + $0xa0] sm:$0xff]
    %v2796 = vld [vmem:[#allocation32 + $0xa8] sm:$0xff]
    %v2797 = vld [vmem:[#allocation32 + $0xb0] sm:$0xff]
    %v2798 = vld [vmem:[#allocation32 + $0xb8] sm:$0xff]
    %v2799 = vld [vmem:[#allocation32 + $0xc0] sm:$0xff]
    %v2800 = vld [vmem:[#allocation32 + $0xc8] sm:$0xff]
    %v2801 = vld [vmem:[#allocation32 + $0xd0] sm:$0xff]
    %v2802 = vld [vmem:[#allocation32 + $0xd8] sm:$0xff]
    %v2803 = vld [vmem:[#allocation32 + $0xe0] sm:$0xff]
    %v2804 = vld [vmem:[#allocation32 + $0xe8] sm:$0xff]
    %v2805 = vld [vmem:[#allocation32 + $0xf0] sm:$0xff]
    %v2806 = vld [vmem:[#allocation32 + $0xf8] sm:$0xff]
    %v2807 = vld [vmem:[#allocation32 + $0x100] sm:$0xff]
    %v2808 = vld [vmem:[#allocation32 + $0x108] sm:$0xff]
    %v2809 = vld [vmem:[#allocation32 + $0x110] sm:$0xff]
    %v2810 = vld [vmem:[#allocation32 + $0x118] sm:$0xff]
    %v2811 = vld [vmem:[#allocation32 + $0x120] sm:$0xff]
    %v2812 = vld [vmem:[#allocation32 + $0x128] sm:$0xff]
    %v2813 = vld [vmem:[#allocation32 + $0x130] sm:$0xff]
    %v2814 = vld [vmem:[#allocation32 + $0x138] sm:$0xff]
    %v2815 = vld [vmem:[#allocation32 + $0x140] sm:$0xff]
    %v2816 = vld [vmem:[#allocation32 + $0x148] sm:$0xff]
    %v2817 = vld [vmem:[#allocation32 + $0x150] sm:$0xff]
    %v2818 = vld [vmem:[#allocation32 + $0x158] sm:$0xff]
    %v2819 = vld [vmem:[#allocation32 + $0x160] sm:$0xff]
    %v2820 = vld [vmem:[#allocation32 + $0x168] sm:$0xff]
    %v2821 = vld [vmem:[#allocation32 + $0x170] sm:$0xff]
    %v2822 = vld [vmem:[#allocation32 + $0x178] sm:$0xff]
    %v2823 = vld [vmem:[#allocation32 + $0x180] sm:$0xff]
    %v2824 = vld [vmem:[#allocation32 + $0x188] sm:$0xff]
    %v2825 = vld [vmem:[#allocation32 + $0x190] sm:$0xff]
    %v2826 = vld [vmem:[#allocation32 + $0x198] sm:$0xff]
    %v2827 = vld [vmem:[#allocation32 + $0x1a0] sm:$0xff]
    %v2828 = vld [vmem:[#allocation32 + $0x1a8] sm:$0xff]
    %v2829 = vld [vmem:[#allocation32 + $0x1b0] sm:$0xff]
    %v2830 = vld [vmem:[#allocation32 + $0x1b8] sm:$0xff]
    %v2831 = vld [vmem:[#allocation32 + $0x1c0] sm:$0xff]
    %v2832 = vld [vmem:[#allocation32 + $0x1c8] sm:$0xff]
    %v2833 = vld [vmem:[#allocation32 + $0x1d0] sm:$0xff]
    %v2834 = vld [vmem:[#allocation32 + $0x1d8] sm:$0xff]
    %v2835 = vld [vmem:[#allocation32 + $0x1e0] sm:$0xff]
    %v2836 = vld [vmem:[#allocation32 + $0x1e8] sm:$0xff]
    %v2837 = vld [vmem:[#allocation32 + $0x1f0] sm:$0xff]
    %v2838 = vld [vmem:[#allocation32 + $0x1f8] sm:$0xff]
    %v2839 = vld [vmem:[#allocation32 + $0x200] sm:$0xff]
    %v2840 = vld [vmem:[#allocation32 + $0x208] sm:$0xff]
    %v2841 = vld [vmem:[#allocation32 + $0x210] sm:$0xff]
    %v2842 = vld [vmem:[#allocation32 + $0x218] sm:$0xff]
    %v2843 = vld [vmem:[#allocation32 + $0x220] sm:$0xff]
    %v2844 = vld [vmem:[#allocation32 + $0x228] sm:$0xff]
    %v2845 = vld [vmem:[#allocation32 + $0x230] sm:$0xff]
    %v2846 = vld [vmem:[#allocation32 + $0x238] sm:$0xff]
    %v2847 = vld [vmem:[#allocation32 + $0x240] sm:$0xff]
    %v2848 = vld [vmem:[#allocation32 + $0x248] sm:$0xff]
    %v2849 = vld [vmem:[#allocation32 + $0x250] sm:$0xff]
    %v2850 = vld [vmem:[#allocation32 + $0x258] sm:$0xff]
    %v2851 = vld [vmem:[#allocation32 + $0x260] sm:$0xff]
    %v2852 = vld [vmem:[#allocation32 + $0x268] sm:$0xff]
    %v2853 = vld [vmem:[#allocation32 + $0x270] sm:$0xff]
    %v2854 = vld [vmem:[#allocation32 + $0x278] sm:$0xff]
    %v2855 = vld [vmem:[#allocation32 + $0x280] sm:$0xff]
    %v2856 = vld [vmem:[#allocation32 + $0x288] sm:$0xff]
    %v2857 = vld [vmem:[#allocation32 + $0x290] sm:$0xff]
    %v2858 = vld [vmem:[#allocation32 + $0x298] sm:$0xff]
    %v2859 = vld [vmem:[#allocation32 + $0x2a0] sm:$0xff]
    %v2860 = vld [vmem:[#allocation32 + $0x2a8] sm:$0xff]
    %v2861 = vld [vmem:[#allocation32 + $0x2b0] sm:$0xff]
    %v2862 = vld [vmem:[#allocation32 + $0x2b8] sm:$0xff]
    %v2863 = vld [vmem:[#allocation32 + $0x2c0] sm:$0xff]
    %v2864 = vld [vmem:[#allocation32 + $0x2c8] sm:$0xff]
    %v2865 = vld [vmem:[#allocation32 + $0x2d0] sm:$0xff]
    %v2866 = vld [vmem:[#allocation32 + $0x2d8] sm:$0xff]
    %v2867 = vld [vmem:[#allocation32 + $0x2e0] sm:$0xff]
    %v2868 = vld [vmem:[#allocation32 + $0x2e8] sm:$0xff]
    %v2869 = vld [vmem:[#allocation32 + $0x2f0] sm:$0xff]
    %v2870 = vld [vmem:[#allocation32 + $0x2f8] sm:$0xff]
    %v2871 = vld [vmem:[#allocation32 + $0x300] sm:$0xff]
    %v2872 = vld [vmem:[#allocation32 + $0x308] sm:$0xff]
    %v2873 = vld [vmem:[#allocation32 + $0x310] sm:$0xff]
    %v2874 = vld [vmem:[#allocation32 + $0x318] sm:$0xff]
    %v2875 = vld [vmem:[#allocation32 + $0x320] sm:$0xff]
    %v2876 = vld [vmem:[#allocation32 + $0x328] sm:$0xff]
    %v2877 = vld [vmem:[#allocation32 + $0x330] sm:$0xff]
    %v2878 = vld [vmem:[#allocation32 + $0x338] sm:$0xff]
    %v2879 = vld [vmem:[#allocation32 + $0x340] sm:$0xff]
    %v2880 = vld [vmem:[#allocation32 + $0x348] sm:$0xff]
    %v2881 = vld [vmem:[#allocation32 + $0x350] sm:$0xff]
    %v2882 = vld [vmem:[#allocation32 + $0x358] sm:$0xff]
    %v2883 = vld [vmem:[#allocation32 + $0x360] sm:$0xff]
    %v2884 = vld [vmem:[#allocation32 + $0x368] sm:$0xff]
    %v2885 = vld [vmem:[#allocation32 + $0x370] sm:$0xff]
    %v2886 = vld [vmem:[#allocation32 + $0x378] sm:$0xff]
    %v2887 = vld [vmem:[#allocation32 + $0x380] sm:$0xff]
    %v2888 = vld [vmem:[#allocation32 + $0x388] sm:$0xff]
    %v2889 = vld [vmem:[#allocation32 + $0x390] sm:$0xff]
    %v2890 = vld [vmem:[#allocation32 + $0x398] sm:$0xff]
    %v2891 = vld [vmem:[#allocation32 + $0x3a0] sm:$0xff]
    %v2892 = vld [vmem:[#allocation32 + $0x3a8] sm:$0xff]
    %v2893 = vld [vmem:[#allocation32 + $0x3b0] sm:$0xff]
    %v2894 = vld [vmem:[#allocation32 + $0x3b8] sm:$0xff]
    %v2895 = vld [vmem:[#allocation32 + $0x3c0] sm:$0xff]
    %v2896 = vld [vmem:[#allocation32 + $0x3c8] sm:$0xff]
    %v2897 = vld [vmem:[#allocation32 + $0x3d0] sm:$0xff]
    %v2898 = vld [vmem:[#allocation32 + $0x3d8] sm:$0xff]
    %v2899 = vld [vmem:[#allocation32 + $0x3e0] sm:$0xff]
    %v2900 = vld [vmem:[#allocation32 + $0x3e8] sm:$0xff]
    %v2901 = vld [vmem:[#allocation32 + $0x3f0] sm:$0xff]
    %v2902 = vld [vmem:[#allocation32 + $0x3f8] sm:$0xff]
    %v2903 = vpack.c.bf16 %v2773, %v2773
    %v2904 = vpack.c.bf16 %v2774, %v2774
    %v2905 = vpack.c.bf16 %v2779, %v2775
    %v2906 = vpack.c.bf16 %v2780, %v2776
    %v2907 = vpack.c.bf16 %v2781, %v2777
    %v2908 = vpack.c.bf16 %v2782, %v2778
    %v2909 = vpack.c.bf16 %v2787, %v2783
    %v2910 = vpack.c.bf16 %v2788, %v2784
    %v2911 = vpack.c.bf16 %v2789, %v2785
    %v2912 = vpack.c.bf16 %v2790, %v2786
    %v2913 = vpack.c.bf16 %v2795, %v2791
    %v2914 = vpack.c.bf16 %v2796, %v2792
    %v2915 = vpack.c.bf16 %v2797, %v2793
    %v2916 = vpack.c.bf16 %v2798, %v2794
    %v2917 = vpack.c.bf16 %v2803, %v2799
    %v2918 = vpack.c.bf16 %v2804, %v2800
    %v2919 = vpack.c.bf16 %v2805, %v2801
    %v2920 = vpack.c.bf16 %v2806, %v2802
    %v2921 = vpack.c.bf16 %v2811, %v2807
    %v2922 = vpack.c.bf16 %v2812, %v2808
    %v2923 = vpack.c.bf16 %v2813, %v2809
    %v2924 = vpack.c.bf16 %v2814, %v2810
    %v2925 = vpack.c.bf16 %v2819, %v2815
    %v2926 = vpack.c.bf16 %v2820, %v2816
    %v2927 = vpack.c.bf16 %v2821, %v2817
    %v2928 = vpack.c.bf16 %v2822, %v2818
    %v2929 = vpack.c.bf16 %v2827, %v2823
    %v2930 = vpack.c.bf16 %v2828, %v2824
    %v2931 = vpack.c.bf16 %v2829, %v2825
    %v2932 = vpack.c.bf16 %v2830, %v2826
    %v2933 = vpack.c.bf16 %v2835, %v2831
    %v2934 = vpack.c.bf16 %v2836, %v2832
    %v2935 = vpack.c.bf16 %v2837, %v2833
    %v2936 = vpack.c.bf16 %v2838, %v2834
    %v2937 = vpack.c.bf16 %v2843, %v2839
    %v2938 = vpack.c.bf16 %v2844, %v2840
    %v2939 = vpack.c.bf16 %v2845, %v2841
    %v2940 = vpack.c.bf16 %v2846, %v2842
    %v2941 = vpack.c.bf16 %v2851, %v2847
    %v2942 = vpack.c.bf16 %v2852, %v2848
    %v2943 = vpack.c.bf16 %v2853, %v2849
    %v2944 = vpack.c.bf16 %v2854, %v2850
    %v2945 = vpack.c.bf16 %v2859, %v2855
    %v2946 = vpack.c.bf16 %v2860, %v2856
    %v2947 = vpack.c.bf16 %v2861, %v2857
    %v2948 = vpack.c.bf16 %v2862, %v2858
    %v2949 = vpack.c.bf16 %v2867, %v2863
    %v2950 = vpack.c.bf16 %v2868, %v2864
    %v2951 = vpack.c.bf16 %v2869, %v2865
    %v2952 = vpack.c.bf16 %v2870, %v2866
    %v2953 = vpack.c.bf16 %v2875, %v2871
    %v2954 = vpack.c.bf16 %v2876, %v2872
    %v2955 = vpack.c.bf16 %v2877, %v2873
    %v2956 = vpack.c.bf16 %v2878, %v2874
    %v2957 = vpack.c.bf16 %v2883, %v2879
    %v2958 = vpack.c.bf16 %v2884, %v2880
    %v2959 = vpack.c.bf16 %v2885, %v2881
    %v2960 = vpack.c.bf16 %v2886, %v2882
    %v2961 = vpack.c.bf16 %v2891, %v2887
    %v2962 = vpack.c.bf16 %v2892, %v2888
    %v2963 = vpack.c.bf16 %v2893, %v2889
    %v2964 = vpack.c.bf16 %v2894, %v2890
    %v2965 = vpack.c.bf16 %v2899, %v2895
    %v2966 = vpack.c.bf16 %v2900, %v2896
    %v2967 = vpack.c.bf16 %v2901, %v2897
    %v2968 = vpack.c.bf16 %v2902, %v2898
    %v2969 = vld [vmem:[#allocation34] sm:$0xf]
    %v2971 = vlaneseq
    %v2972 = vshrl.u32 %v2971, 7
    %v2973 = vsub.s32 0, %v2972
    %v2974 = vrot.slane %v2969, %v2973
    %v2975 = vlaneseq
    %v2976 = vshrl.u32 %v2975, 7
    %v2977 = vsub.s32 1, %v2976
    %v2978 = vrot.slane %v2969, %v2977
    %v2979 = vlaneseq
    %v2980 = vshrl.u32 %v2979, 7
    %v2981 = vsub.s32 2, %v2980
    %v2982 = vrot.slane %v2969, %v2981
    %v2983 = vlaneseq
    %v2984 = vshrl.u32 %v2983, 7
    %v2985 = vsub.s32 3, %v2984
    %v2986 = vrot.slane %v2969, %v2985
    %2991 = vmatprep.subr.bf16.mxu0 %v2934
    %2992 = vmatpush1.bf16.msra.mxu0 %v2933
    %2993 = vmatprep.subr.bf16.mxu0 %v2930
    %2994 = vmatpush1.bf16.msra.mxu0 %v2929
    %2995 = vmatprep.subr.bf16.mxu0 %v2926
    %2996 = vmatpush1.bf16.msra.mxu0 %v2925
    %2997 = vmatprep.subr.bf16.mxu0 %v2922
    %2998 = vmatpush1.bf16.msra.mxu0 %v2921
    %2999 = vmatprep.subr.bf16.mxu0 %v2918
    %3000 = vmatpush1.bf16.msra.mxu0 %v2917
    %3001 = vmatprep.subr.bf16.mxu0 %v2914
    %3002 = vmatpush1.bf16.msra.mxu0 %v2913
    %3003 = vmatprep.subr.bf16.mxu0 %v2910
    %3004 = vmatpush1.bf16.msra.mxu0 %v2909
    %3005 = vmatprep.subr.bf16.mxu0 %v2906
    %3006 = vmatpush1.bf16.msra.mxu0 %v2905
    %3007 = vmatprep.subr.bf16.mxu0 %v2966
    %3008 = vmatpush2.bf16.msra.mxu0 %v2965
    %3009 = vmatprep.subr.bf16.mxu0 %v2962
    %3010 = vmatpush2.bf16.msra.mxu0 %v2961
    %3011 = vmatprep.subr.bf16.mxu0 %v2958
    %3012 = vmatpush2.bf16.msra.mxu0 %v2957
    %3013 = vmatprep.subr.bf16.mxu0 %v2954
    %3014 = vmatpush2.bf16.msra.mxu0 %v2953
    %3015 = vmatprep.subr.bf16.mxu0 %v2950
    %3016 = vmatpush2.bf16.msra.mxu0 %v2949
    %3017 = vmatprep.subr.bf16.mxu0 %v2946
    %3018 = vmatpush2.bf16.msra.mxu0 %v2945
    %3019 = vmatprep.subr.bf16.mxu0 %v2942
    %3020 = vmatpush2.bf16.msra.mxu0 %v2941
    %3021 = vmatprep.subr.bf16.mxu0 %v2938
    %3022 = vmatpush2.bf16.msra.mxu0 %v2937
    %3023 = vmatprep.mubr.bf16.mxu0 %v2904
    %3024 = vmatmul.mubr.bf16.gmra.mxu0 %v2903
    %v3025 = vpop.f32.mrf.mxu0
    %v3026 = vadd.f32 %v2974, %v3025
    %v3027 = vpop.f32.mrf.mxu0
    %v3028 = vadd.f32 %v2978, %v3027
    %v3029 = vpop.f32.mrf.mxu0
    %v3030 = vpop.f32.mrf.mxu0
    %3031 = vdwg.mxu0
    %3032 = vmatprep.subr.bf16.mxu0 %v2936
    %3033 = vmatpush1.bf16.msra.mxu0 %v2935
    %3034 = vmatprep.subr.bf16.mxu0 %v2932
    %3035 = vmatpush1.bf16.msra.mxu0 %v2931
    %3036 = vmatprep.subr.bf16.mxu0 %v2928
    %3037 = vmatpush1.bf16.msra.mxu0 %v2927
    %3038 = vmatprep.subr.bf16.mxu0 %v2924
    %3039 = vmatpush1.bf16.msra.mxu0 %v2923
    %3040 = vmatprep.subr.bf16.mxu0 %v2920
    %3041 = vmatpush1.bf16.msra.mxu0 %v2919
    %3042 = vmatprep.subr.bf16.mxu0 %v2916
    %3043 = vmatpush1.bf16.msra.mxu0 %v2915
    %3044 = vmatprep.subr.bf16.mxu0 %v2912
    %3045 = vmatpush1.bf16.msra.mxu0 %v2911
    %3046 = vmatprep.subr.bf16.mxu0 %v2908
    %3047 = vmatpush1.bf16.msra.mxu0 %v2907
    %3048 = vmatprep.subr.bf16.mxu0 %v2968
    %3049 = vmatpush2.bf16.msra.mxu0 %v2967
    %3050 = vmatprep.subr.bf16.mxu0 %v2964
    %3051 = vmatpush2.bf16.msra.mxu0 %v2963
    %3052 = vmatprep.subr.bf16.mxu0 %v2960
    %3053 = vmatpush2.bf16.msra.mxu0 %v2959
    %3054 = vmatprep.subr.bf16.mxu0 %v2956
    %3055 = vmatpush2.bf16.msra.mxu0 %v2955
    %3056 = vmatprep.subr.bf16.mxu0 %v2952
    %3057 = vmatpush2.bf16.msra.mxu0 %v2951
    %3058 = vmatprep.subr.bf16.mxu0 %v2948
    %3059 = vmatpush2.bf16.msra.mxu0 %v2947
    %3060 = vmatprep.subr.bf16.mxu0 %v2944
    %3061 = vmatpush2.bf16.msra.mxu0 %v2943
    %3062 = vmatprep.subr.bf16.mxu0 %v2940
    %3063 = vmatpush2.bf16.msra.mxu0 %v2939
    %3064 = vmatprep.mubr.bf16.mxu0 %v2904
    %3065 = vmatmul.mubr.bf16.gmra.mxu0 %v2903
    %v3066 = vpop.f32.mrf.mxu0
    %v3067 = vadd.f32 %v2982, %v3066
    %v3068 = vpop.f32.mrf.mxu0
    %v3069 = vadd.f32 %v2986, %v3068
    %v3070 = vpop.f32.mrf.mxu0
    %v3071 = vpop.f32.mrf.mxu0
    %3072 = vdwg.mxu0
    %v3073 = vmax.f32 %v3026, 0.0
    %v3074 = vmax.f32 %v3028, 0.0
    %v3075 = vmax.f32 %v3067, 0.0
    %v3076 = vmax.f32 %v3069, 0.0
    %v3077 = vld [vmem:[#allocation35] sm:$0xff]
    %v3078 = vld [vmem:[#allocation35 + $0x8] sm:$0xff]
    %v3079 = vld [vmem:[#allocation35 + $0x10] sm:$0xff]
    %v3080 = vld [vmem:[#allocation35 + $0x18] sm:$0xff]
    %v3081 = vld [vmem:[#allocation35 + $0x20] sm:$0xff]
    %v3082 = vld [vmem:[#allocation35 + $0x28] sm:$0xff]
    %v3083 = vld [vmem:[#allocation35 + $0x30] sm:$0xff]
    %v3084 = vld [vmem:[#allocation35 + $0x38] sm:$0xff]
    %v3085 = vld [vmem:[#allocation35 + $0x40] sm:$0xff]
    %v3086 = vld [vmem:[#allocation35 + $0x48] sm:$0xff]
    %v3087 = vld [vmem:[#allocation35 + $0x50] sm:$0xff]
    %v3088 = vld [vmem:[#allocation35 + $0x58] sm:$0xff]
    %v3089 = vld [vmem:[#allocation35 + $0x60] sm:$0xff]
    %v3090 = vld [vmem:[#allocation35 + $0x68] sm:$0xff]
    %v3091 = vld [vmem:[#allocation35 + $0x70] sm:$0xff]
    %v3092 = vld [vmem:[#allocation35 + $0x78] sm:$0xff]
    %v3093 = vld [vmem:[#allocation35 + $0x80] sm:$0xff]
    %v3094 = vld [vmem:[#allocation35 + $0x88] sm:$0xff]
    %v3095 = vld [vmem:[#allocation35 + $0x90] sm:$0xff]
    %v3096 = vld [vmem:[#allocation35 + $0x98] sm:$0xff]
    %v3097 = vld [vmem:[#allocation35 + $0xa0] sm:$0xff]
    %v3098 = vld [vmem:[#allocation35 + $0xa8] sm:$0xff]
    %v3099 = vld [vmem:[#allocation35 + $0xb0] sm:$0xff]
    %v3100 = vld [vmem:[#allocation35 + $0xb8] sm:$0xff]
    %v3101 = vld [vmem:[#allocation35 + $0xc0] sm:$0xff]
    %v3102 = vld [vmem:[#allocation35 + $0xc8] sm:$0xff]
    %v3103 = vld [vmem:[#allocation35 + $0xd0] sm:$0xff]
    %v3104 = vld [vmem:[#allocation35 + $0xd8] sm:$0xff]
    %v3105 = vld [vmem:[#allocation35 + $0xe0] sm:$0xff]
    %v3106 = vld [vmem:[#allocation35 + $0xe8] sm:$0xff]
    %v3107 = vld [vmem:[#allocation35 + $0xf0] sm:$0xff]
    %v3108 = vld [vmem:[#allocation35 + $0xf8] sm:$0xff]
    %v3109 = vld [vmem:[#allocation35 + $0x100] sm:$0xff]
    %v3110 = vld [vmem:[#allocation35 + $0x108] sm:$0xff]
    %v3111 = vld [vmem:[#allocation35 + $0x110] sm:$0xff]
    %v3112 = vld [vmem:[#allocation35 + $0x118] sm:$0xff]
    %v3113 = vld [vmem:[#allocation35 + $0x120] sm:$0xff]
    %v3114 = vld [vmem:[#allocation35 + $0x128] sm:$0xff]
    %v3115 = vld [vmem:[#allocation35 + $0x130] sm:$0xff]
    %v3116 = vld [vmem:[#allocation35 + $0x138] sm:$0xff]
    %v3117 = vld [vmem:[#allocation35 + $0x140] sm:$0xff]
    %v3118 = vld [vmem:[#allocation35 + $0x148] sm:$0xff]
    %v3119 = vld [vmem:[#allocation35 + $0x150] sm:$0xff]
    %v3120 = vld [vmem:[#allocation35 + $0x158] sm:$0xff]
    %v3121 = vld [vmem:[#allocation35 + $0x160] sm:$0xff]
    %v3122 = vld [vmem:[#allocation35 + $0x168] sm:$0xff]
    %v3123 = vld [vmem:[#allocation35 + $0x170] sm:$0xff]
    %v3124 = vld [vmem:[#allocation35 + $0x178] sm:$0xff]
    %v3125 = vld [vmem:[#allocation35 + $0x180] sm:$0xff]
    %v3126 = vld [vmem:[#allocation35 + $0x188] sm:$0xff]
    %v3127 = vld [vmem:[#allocation35 + $0x190] sm:$0xff]
    %v3128 = vld [vmem:[#allocation35 + $0x198] sm:$0xff]
    %v3129 = vld [vmem:[#allocation35 + $0x1a0] sm:$0xff]
    %v3130 = vld [vmem:[#allocation35 + $0x1a8] sm:$0xff]
    %v3131 = vld [vmem:[#allocation35 + $0x1b0] sm:$0xff]
    %v3132 = vld [vmem:[#allocation35 + $0x1b8] sm:$0xff]
    %v3133 = vld [vmem:[#allocation35 + $0x1c0] sm:$0xff]
    %v3134 = vld [vmem:[#allocation35 + $0x1c8] sm:$0xff]
    %v3135 = vld [vmem:[#allocation35 + $0x1d0] sm:$0xff]
    %v3136 = vld [vmem:[#allocation35 + $0x1d8] sm:$0xff]
    %v3137 = vld [vmem:[#allocation35 + $0x1e0] sm:$0xff]
    %v3138 = vld [vmem:[#allocation35 + $0x1e8] sm:$0xff]
    %v3139 = vld [vmem:[#allocation35 + $0x1f0] sm:$0xff]
    %v3140 = vld [vmem:[#allocation35 + $0x1f8] sm:$0xff]
    %v3141 = vld [vmem:[#allocation35 + $0x200] sm:$0xff]
    %v3142 = vld [vmem:[#allocation35 + $0x208] sm:$0xff]
    %v3143 = vld [vmem:[#allocation35 + $0x210] sm:$0xff]
    %v3144 = vld [vmem:[#allocation35 + $0x218] sm:$0xff]
    %v3145 = vld [vmem:[#allocation35 + $0x220] sm:$0xff]
    %v3146 = vld [vmem:[#allocation35 + $0x228] sm:$0xff]
    %v3147 = vld [vmem:[#allocation35 + $0x230] sm:$0xff]
    %v3148 = vld [vmem:[#allocation35 + $0x238] sm:$0xff]
    %v3149 = vld [vmem:[#allocation35 + $0x240] sm:$0xff]
    %v3150 = vld [vmem:[#allocation35 + $0x248] sm:$0xff]
    %v3151 = vld [vmem:[#allocation35 + $0x250] sm:$0xff]
    %v3152 = vld [vmem:[#allocation35 + $0x258] sm:$0xff]
    %v3153 = vld [vmem:[#allocation35 + $0x260] sm:$0xff]
    %v3154 = vld [vmem:[#allocation35 + $0x268] sm:$0xff]
    %v3155 = vld [vmem:[#allocation35 + $0x270] sm:$0xff]
    %v3156 = vld [vmem:[#allocation35 + $0x278] sm:$0xff]
    %v3157 = vld [vmem:[#allocation35 + $0x280] sm:$0xff]
    %v3158 = vld [vmem:[#allocation35 + $0x288] sm:$0xff]
    %v3159 = vld [vmem:[#allocation35 + $0x290] sm:$0xff]
    %v3160 = vld [vmem:[#allocation35 + $0x298] sm:$0xff]
    %v3161 = vld [vmem:[#allocation35 + $0x2a0] sm:$0xff]
    %v3162 = vld [vmem:[#allocation35 + $0x2a8] sm:$0xff]
    %v3163 = vld [vmem:[#allocation35 + $0x2b0] sm:$0xff]
    %v3164 = vld [vmem:[#allocation35 + $0x2b8] sm:$0xff]
    %v3165 = vld [vmem:[#allocation35 + $0x2c0] sm:$0xff]
    %v3166 = vld [vmem:[#allocation35 + $0x2c8] sm:$0xff]
    %v3167 = vld [vmem:[#allocation35 + $0x2d0] sm:$0xff]
    %v3168 = vld [vmem:[#allocation35 + $0x2d8] sm:$0xff]
    %v3169 = vld [vmem:[#allocation35 + $0x2e0] sm:$0xff]
    %v3170 = vld [vmem:[#allocation35 + $0x2e8] sm:$0xff]
    %v3171 = vld [vmem:[#allocation35 + $0x2f0] sm:$0xff]
    %v3172 = vld [vmem:[#allocation35 + $0x2f8] sm:$0xff]
    %v3173 = vld [vmem:[#allocation35 + $0x300] sm:$0xff]
    %v3174 = vld [vmem:[#allocation35 + $0x308] sm:$0xff]
    %v3175 = vld [vmem:[#allocation35 + $0x310] sm:$0xff]
    %v3176 = vld [vmem:[#allocation35 + $0x318] sm:$0xff]
    %v3177 = vld [vmem:[#allocation35 + $0x320] sm:$0xff]
    %v3178 = vld [vmem:[#allocation35 + $0x328] sm:$0xff]
    %v3179 = vld [vmem:[#allocation35 + $0x330] sm:$0xff]
    %v3180 = vld [vmem:[#allocation35 + $0x338] sm:$0xff]
    %v3181 = vld [vmem:[#allocation35 + $0x340] sm:$0xff]
    %v3182 = vld [vmem:[#allocation35 + $0x348] sm:$0xff]
    %v3183 = vld [vmem:[#allocation35 + $0x350] sm:$0xff]
    %v3184 = vld [vmem:[#allocation35 + $0x358] sm:$0xff]
    %v3185 = vld [vmem:[#allocation35 + $0x360] sm:$0xff]
    %v3186 = vld [vmem:[#allocation35 + $0x368] sm:$0xff]
    %v3187 = vld [vmem:[#allocation35 + $0x370] sm:$0xff]
    %v3188 = vld [vmem:[#allocation35 + $0x378] sm:$0xff]
    %v3189 = vld [vmem:[#allocation35 + $0x380] sm:$0xff]
    %v3190 = vld [vmem:[#allocation35 + $0x388] sm:$0xff]
    %v3191 = vld [vmem:[#allocation35 + $0x390] sm:$0xff]
    %v3192 = vld [vmem:[#allocation35 + $0x398] sm:$0xff]
    %v3193 = vld [vmem:[#allocation35 + $0x3a0] sm:$0xff]
    %v3194 = vld [vmem:[#allocation35 + $0x3a8] sm:$0xff]
    %v3195 = vld [vmem:[#allocation35 + $0x3b0] sm:$0xff]
    %v3196 = vld [vmem:[#allocation35 + $0x3b8] sm:$0xff]
    %v3197 = vld [vmem:[#allocation35 + $0x3c0] sm:$0xff]
    %v3198 = vld [vmem:[#allocation35 + $0x3c8] sm:$0xff]
    %v3199 = vld [vmem:[#allocation35 + $0x3d0] sm:$0xff]
    %v3200 = vld [vmem:[#allocation35 + $0x3d8] sm:$0xff]
    %v3201 = vld [vmem:[#allocation35 + $0x3e0] sm:$0xff]
    %v3202 = vld [vmem:[#allocation35 + $0x3e8] sm:$0xff]
    %v3203 = vld [vmem:[#allocation35 + $0x3f0] sm:$0xff]
    %v3204 = vld [vmem:[#allocation35 + $0x3f8] sm:$0xff]
    %v3205 = vpack.c.bf16 %v3073, %v3073
    %v3206 = vpack.c.bf16 %v3074, %v3074
    %v3207 = vpack.c.bf16 %v3075, %v3075
    %v3208 = vpack.c.bf16 %v3076, %v3076
    %v3209 = vpack.c.bf16 %v3079, %v3077
    %v3210 = vpack.c.bf16 %v3080, %v3078
    %v3211 = vpack.c.bf16 %v3083, %v3081
    %v3212 = vpack.c.bf16 %v3084, %v3082
    %v3213 = vpack.c.bf16 %v3087, %v3085
    %v3214 = vpack.c.bf16 %v3088, %v3086
    %v3215 = vpack.c.bf16 %v3091, %v3089
    %v3216 = vpack.c.bf16 %v3092, %v3090
    %v3217 = vpack.c.bf16 %v3095, %v3093
    %v3218 = vpack.c.bf16 %v3096, %v3094
    %v3219 = vpack.c.bf16 %v3099, %v3097
    %v3220 = vpack.c.bf16 %v3100, %v3098
    %v3221 = vpack.c.bf16 %v3103, %v3101
    %v3222 = vpack.c.bf16 %v3104, %v3102
    %v3223 = vpack.c.bf16 %v3107, %v3105
    %v3224 = vpack.c.bf16 %v3108, %v3106
    %v3225 = vpack.c.bf16 %v3111, %v3109
    %v3226 = vpack.c.bf16 %v3112, %v3110
    %v3227 = vpack.c.bf16 %v3115, %v3113
    %v3228 = vpack.c.bf16 %v3116, %v3114
    %v3229 = vpack.c.bf16 %v3119, %v3117
    %v3230 = vpack.c.bf16 %v3120, %v3118
    %v3231 = vpack.c.bf16 %v3123, %v3121
    %v3232 = vpack.c.bf16 %v3124, %v3122
    %v3233 = vpack.c.bf16 %v3127, %v3125
    %v3234 = vpack.c.bf16 %v3128, %v3126
    %v3235 = vpack.c.bf16 %v3131, %v3129
    %v3236 = vpack.c.bf16 %v3132, %v3130
    %v3237 = vpack.c.bf16 %v3135, %v3133
    %v3238 = vpack.c.bf16 %v3136, %v3134
    %v3239 = vpack.c.bf16 %v3139, %v3137
    %v3240 = vpack.c.bf16 %v3140, %v3138
    %v3241 = vpack.c.bf16 %v3143, %v3141
    %v3242 = vpack.c.bf16 %v3144, %v3142
    %v3243 = vpack.c.bf16 %v3147, %v3145
    %v3244 = vpack.c.bf16 %v3148, %v3146
    %v3245 = vpack.c.bf16 %v3151, %v3149
    %v3246 = vpack.c.bf16 %v3152, %v3150
    %v3247 = vpack.c.bf16 %v3155, %v3153
    %v3248 = vpack.c.bf16 %v3156, %v3154
    %v3249 = vpack.c.bf16 %v3159, %v3157
    %v3250 = vpack.c.bf16 %v3160, %v3158
    %v3251 = vpack.c.bf16 %v3163, %v3161
    %v3252 = vpack.c.bf16 %v3164, %v3162
    %v3253 = vpack.c.bf16 %v3167, %v3165
    %v3254 = vpack.c.bf16 %v3168, %v3166
    %v3255 = vpack.c.bf16 %v3171, %v3169
    %v3256 = vpack.c.bf16 %v3172, %v3170
    %v3257 = vpack.c.bf16 %v3175, %v3173
    %v3258 = vpack.c.bf16 %v3176, %v3174
    %v3259 = vpack.c.bf16 %v3179, %v3177
    %v3260 = vpack.c.bf16 %v3180, %v3178
    %v3261 = vpack.c.bf16 %v3183, %v3181
    %v3262 = vpack.c.bf16 %v3184, %v3182
    %v3263 = vpack.c.bf16 %v3187, %v3185
    %v3264 = vpack.c.bf16 %v3188, %v3186
    %v3265 = vpack.c.bf16 %v3191, %v3189
    %v3266 = vpack.c.bf16 %v3192, %v3190
    %v3267 = vpack.c.bf16 %v3195, %v3193
    %v3268 = vpack.c.bf16 %v3196, %v3194
    %v3269 = vpack.c.bf16 %v3199, %v3197
    %v3270 = vpack.c.bf16 %v3200, %v3198
    %v3271 = vpack.c.bf16 %v3203, %v3201
    %v3272 = vpack.c.bf16 %v3204, %v3202
    %v3273 = vld [vmem:[#allocation37] sm:$0x3]
    %v3275 = vlaneseq
    %v3276 = vshrl.u32 %v3275, 7
    %v3277 = vsub.s32 0, %v3276
    %v3278 = vrot.slane %v3273, %v3277
    %v3279 = vlaneseq
    %v3280 = vshrl.u32 %v3279, 7
    %v3281 = vsub.s32 1, %v3280
    %v3282 = vrot.slane %v3273, %v3281
    %3285 = vmatprep.subr.bf16.mxu0 %v3224
    %3286 = vmatpush1.bf16.msra.mxu0 %v3223
    %3287 = vmatprep.subr.bf16.mxu0 %v3222
    %3288 = vmatpush1.bf16.msra.mxu0 %v3221
    %3289 = vmatprep.subr.bf16.mxu0 %v3220
    %3290 = vmatpush1.bf16.msra.mxu0 %v3219
    %3291 = vmatprep.subr.bf16.mxu0 %v3218
    %3292 = vmatpush1.bf16.msra.mxu0 %v3217
    %3293 = vmatprep.subr.bf16.mxu0 %v3216
    %3294 = vmatpush1.bf16.msra.mxu0 %v3215
    %3295 = vmatprep.subr.bf16.mxu0 %v3214
    %3296 = vmatpush1.bf16.msra.mxu0 %v3213
    %3297 = vmatprep.subr.bf16.mxu0 %v3212
    %3298 = vmatpush1.bf16.msra.mxu0 %v3211
    %3299 = vmatprep.subr.bf16.mxu0 %v3210
    %3300 = vmatpush1.bf16.msra.mxu0 %v3209
    %3301 = vmatprep.subr.bf16.mxu0 %v3240
    %3302 = vmatpush2.bf16.msra.mxu0 %v3239
    %3303 = vmatprep.subr.bf16.mxu0 %v3238
    %3304 = vmatpush2.bf16.msra.mxu0 %v3237
    %3305 = vmatprep.subr.bf16.mxu0 %v3236
    %3306 = vmatpush2.bf16.msra.mxu0 %v3235
    %3307 = vmatprep.subr.bf16.mxu0 %v3234
    %3308 = vmatpush2.bf16.msra.mxu0 %v3233
    %3309 = vmatprep.subr.bf16.mxu0 %v3232
    %3310 = vmatpush2.bf16.msra.mxu0 %v3231
    %3311 = vmatprep.subr.bf16.mxu0 %v3230
    %3312 = vmatpush2.bf16.msra.mxu0 %v3229
    %3313 = vmatprep.subr.bf16.mxu0 %v3228
    %3314 = vmatpush2.bf16.msra.mxu0 %v3227
    %3315 = vmatprep.subr.bf16.mxu0 %v3226
    %3316 = vmatpush2.bf16.msra.mxu0 %v3225
    %3317 = vmatprep.mubr.bf16.mxu0 %v3206
    %3318 = vmatmul.mubr.bf16.gmra.mxu0 %v3205
    %v3319 = vpop.f32.mrf.mxu0
    %v3320 = vadd.f32 %v3278, %v3319
    %v3321 = vpop.f32.mrf.mxu0
    %v3322 = vadd.f32 %v3282, %v3321
    %v3323 = vpop.f32.mrf.mxu0
    %v3324 = vpop.f32.mrf.mxu0
    %3325 = vdwg.mxu0
    %3326 = vmatprep.subr.bf16.mxu0 %v3256
    %3327 = vmatpush1.bf16.msra.mxu0 %v3255
    %3328 = vmatprep.subr.bf16.mxu0 %v3254
    %3329 = vmatpush1.bf16.msra.mxu0 %v3253
    %3330 = vmatprep.subr.bf16.mxu0 %v3252
    %3331 = vmatpush1.bf16.msra.mxu0 %v3251
    %3332 = vmatprep.subr.bf16.mxu0 %v3250
    %3333 = vmatpush1.bf16.msra.mxu0 %v3249
    %3334 = vmatprep.subr.bf16.mxu0 %v3248
    %3335 = vmatpush1.bf16.msra.mxu0 %v3247
    %3336 = vmatprep.subr.bf16.mxu0 %v3246
    %3337 = vmatpush1.bf16.msra.mxu0 %v3245
    %3338 = vmatprep.subr.bf16.mxu0 %v3244
    %3339 = vmatpush1.bf16.msra.mxu0 %v3243
    %3340 = vmatprep.subr.bf16.mxu0 %v3242
    %3341 = vmatpush1.bf16.msra.mxu0 %v3241
    %3342 = vmatprep.subr.bf16.mxu0 %v3272
    %3343 = vmatpush2.bf16.msra.mxu0 %v3271
    %3344 = vmatprep.subr.bf16.mxu0 %v3270
    %3345 = vmatpush2.bf16.msra.mxu0 %v3269
    %3346 = vmatprep.subr.bf16.mxu0 %v3268
    %3347 = vmatpush2.bf16.msra.mxu0 %v3267
    %3348 = vmatprep.subr.bf16.mxu0 %v3266
    %3349 = vmatpush2.bf16.msra.mxu0 %v3265
    %3350 = vmatprep.subr.bf16.mxu0 %v3264
    %3351 = vmatpush2.bf16.msra.mxu0 %v3263
    %3352 = vmatprep.subr.bf16.mxu0 %v3262
    %3353 = vmatpush2.bf16.msra.mxu0 %v3261
    %3354 = vmatprep.subr.bf16.mxu0 %v3260
    %3355 = vmatpush2.bf16.msra.mxu0 %v3259
    %3356 = vmatprep.subr.bf16.mxu0 %v3258
    %3357 = vmatpush2.bf16.msra.mxu0 %v3257
    %3358 = vmatprep.mubr.bf16.mxu0 %v3208
    %3359 = vmatmul.mubr.bf16.gmra.mxu0 %v3207
    %v3360 = vpop.f32.mrf.mxu0
    %v3361 = vadd.f32 %v3320, %v3360
    %v3362 = vpop.f32.mrf.mxu0
    %v3363 = vadd.f32 %v3322, %v3362
    %v3364 = vpop.f32.mrf.mxu0
    %v3365 = vpop.f32.mrf.mxu0
    %3366 = vdwg.mxu0
    %v3367 = vmax.f32 %v3361, 0.0
    %v3368 = vmax.f32 %v3363, 0.0
    %v3369 = vld [vmem:[%s71] sm:$0xff]
    %v3370 = vld [vmem:[%s71 + $0x8] sm:$0xff]
    %v3371 = vld [vmem:[%s71 + $0x10] sm:$0xff]
    %v3372 = vld [vmem:[%s71 + $0x18] sm:$0xff]
    %v3373 = vld [vmem:[%s71 + $0x20] sm:$0xff]
    %v3374 = vld [vmem:[%s71 + $0x28] sm:$0xff]
    %v3375 = vld [vmem:[%s71 + $0x30] sm:$0xff]
    %v3376 = vld [vmem:[%s71 + $0x38] sm:$0xff]
    %v3377 = vld [vmem:[%s71 + $0x40] sm:$0xff]
    %v3378 = vld [vmem:[%s71 + $0x48] sm:$0xff]
    %v3379 = vld [vmem:[%s71 + $0x50] sm:$0xff]
    %v3380 = vld [vmem:[%s71 + $0x58] sm:$0xff]
    %v3381 = vld [vmem:[%s71 + $0x60] sm:$0xff]
    %v3382 = vld [vmem:[%s71 + $0x68] sm:$0xff]
    %v3383 = vld [vmem:[%s71 + $0x70] sm:$0xff]
    %v3384 = vld [vmem:[%s71 + $0x78] sm:$0xff]
    %v3385 = vld [vmem:[%s71 + $0x80] sm:$0xff]
    %v3386 = vld [vmem:[%s71 + $0x88] sm:$0xff]
    %v3387 = vld [vmem:[%s71 + $0x90] sm:$0xff]
    %v3388 = vld [vmem:[%s71 + $0x98] sm:$0xff]
    %v3389 = vld [vmem:[%s71 + $0xa0] sm:$0xff]
    %v3390 = vld [vmem:[%s71 + $0xa8] sm:$0xff]
    %v3391 = vld [vmem:[%s71 + $0xb0] sm:$0xff]
    %v3392 = vld [vmem:[%s71 + $0xb8] sm:$0xff]
    %v3393 = vld [vmem:[%s71 + $0xc0] sm:$0xff]
    %v3394 = vld [vmem:[%s71 + $0xc8] sm:$0xff]
    %v3395 = vld [vmem:[%s71 + $0xd0] sm:$0xff]
    %v3396 = vld [vmem:[%s71 + $0xd8] sm:$0xff]
    %v3397 = vld [vmem:[%s71 + $0xe0] sm:$0xff]
    %v3398 = vld [vmem:[%s71 + $0xe8] sm:$0xff]
    %v3399 = vld [vmem:[%s71 + $0xf0] sm:$0xff]
    %v3400 = vld [vmem:[%s71 + $0xf8] sm:$0xff]
    %v3401 = vpack.c.bf16 %v3367, %v3367
    %v3402 = vpack.c.bf16 %v3368, %v3368
    %v3403 = vpack.c.bf16 %v3370, %v3369
    %v3404 = vpack.c.bf16 %v3372, %v3371
    %v3405 = vpack.c.bf16 %v3374, %v3373
    %v3406 = vpack.c.bf16 %v3376, %v3375
    %v3407 = vpack.c.bf16 %v3378, %v3377
    %v3408 = vpack.c.bf16 %v3380, %v3379
    %v3409 = vpack.c.bf16 %v3382, %v3381
    %v3410 = vpack.c.bf16 %v3384, %v3383
    %v3411 = vpack.c.bf16 %v3386, %v3385
    %v3412 = vpack.c.bf16 %v3388, %v3387
    %v3413 = vpack.c.bf16 %v3390, %v3389
    %v3414 = vpack.c.bf16 %v3392, %v3391
    %v3415 = vpack.c.bf16 %v3394, %v3393
    %v3416 = vpack.c.bf16 %v3396, %v3395
    %v3417 = vpack.c.bf16 %v3398, %v3397
    %v3418 = vpack.c.bf16 %v3400, %v3399
    %v3419 = vld [vmem:[#allocation38] sm:$0x1]
    %v3421 = vlaneseq
    %v3422 = vshrl.u32 %v3421, 7
    %v3423 = vsub.s32 0, %v3422
    %v3424 = vrot.slane %v3419, %v3423
    %3426 = vmatprep.subr.bf16.mxu0 0
    %3427 = vmatpush1.bf16.msra.mxu0 %v3410
    %3428 = vmatprep.subr.bf16.mxu0 0
    %3429 = vmatpush1.bf16.msra.mxu0 %v3409
    %3430 = vmatprep.subr.bf16.mxu0 0
    %3431 = vmatpush1.bf16.msra.mxu0 %v3408
    %3432 = vmatprep.subr.bf16.mxu0 0
    %3433 = vmatpush1.bf16.msra.mxu0 %v3407
    %3434 = vmatprep.subr.bf16.mxu0 0
    %3435 = vmatpush1.bf16.msra.mxu0 %v3406
    %3436 = vmatprep.subr.bf16.mxu0 0
    %3437 = vmatpush1.bf16.msra.mxu0 %v3405
    %3438 = vmatprep.subr.bf16.mxu0 0
    %3439 = vmatpush1.bf16.msra.mxu0 %v3404
    %3440 = vmatprep.subr.bf16.mxu0 0
    %3441 = vmatpush1.bf16.msra.mxu0 %v3403
    %3442 = vmatprep.subr.bf16.mxu0 0
    %3443 = vmatpush2.bf16.msra.mxu0 %v3418
    %3444 = vmatprep.subr.bf16.mxu0 0
    %3445 = vmatpush2.bf16.msra.mxu0 %v3417
    %3446 = vmatprep.subr.bf16.mxu0 0
    %3447 = vmatpush2.bf16.msra.mxu0 %v3416
    %3448 = vmatprep.subr.bf16.mxu0 0
    %3449 = vmatpush2.bf16.msra.mxu0 %v3415
    %3450 = vmatprep.subr.bf16.mxu0 0
    %3451 = vmatpush2.bf16.msra.mxu0 %v3414
    %3452 = vmatprep.subr.bf16.mxu0 0
    %3453 = vmatpush2.bf16.msra.mxu0 %v3413
    %3454 = vmatprep.subr.bf16.mxu0 0
    %3455 = vmatpush2.bf16.msra.mxu0 %v3412
    %3456 = vmatprep.subr.bf16.mxu0 0
    %3457 = vmatpush2.bf16.msra.mxu0 %v3411
    %3458 = vmatprep.mubr.bf16.mxu0 %v3402
    %3459 = vmatmul.mubr.bf16.gmra.mxu0 %v3401
    %v3460 = vpop.f32.mrf.mxu0
    %v3461 = vadd.f32 %v3424, %v3460
    %v3462 = vpop.f32.mrf.mxu0
    %v3463 = vpop.f32.mrf.mxu0
    %v3464 = vpop.f32.mrf.mxu0
    %3465 = vdwg.mxu0
    %3466 = vst.msk [vmem:[#allocation41] sm:$0xff] %vm484, %v3461
    %v3467 = vmul.f32 %v2705, %v2705
    %v3468 = vsel %vm1770, %v3467, 0.0
    %3469 = vadd.xlane.f32.xlu0 %v3468
    %v3470 = vpop.xlane.xlu0 %3469
    %v3471 = vmul.f32 %v3470, -0.5
    %v3472 = vsub.f32 %v3471, 14.703016
    %3473 = vst.msk [vmem:[%s81] sm:$0xff] %vm1253, %v3472
    // Predicated region
    $region246: #{paca_forward.1} parent=1 // pred_check
      _
    $region247: #{paca_forward.1} parent=1 // pred_check_branch
      %3475 = sbr.rel (0) target = $region249
    $region248: #{paca_forward.1} parent=1 // pred_region
      %s3477 = ssub.s32 16, 16
      %3478 = vsyncadd [#allocation4], %s3477
      %s3480 = sshll.u32 [#allocation40], 4
      %s3481 = int_to_ptr.vmem [resolvable:$true] %s3480
      %3483 = dma.vmem_to_hbm [thread:$0]  %s3481, 16, %s75, [#allocation4]
    $region249: #{paca_forward.1} parent=1 // pred_fallthru
      _
    // Predicated region
    $region250: #{paca_forward.1} parent=1 // pred_check
      _
    $region251: #{paca_forward.1} parent=1 // pred_check_branch
      %3485 = sbr.rel (0) target = $region253
    $region252: #{paca_forward.1} parent=1 // pred_region
      %s3487 = ssub.s32 128, 128
      %3488 = vsyncadd [#allocation42], %s3487
      %s3490 = sshll.u32 [#allocation41], 4
      %s3491 = int_to_ptr.vmem [resolvable:$true] %s3490
      %3493 = dma.vmem_to_hbm [thread:$0]  %s3491, 128, %s77, [#allocation42]
    $region253: #{paca_forward.1} parent=1 // pred_fallthru
      _
    // Predicated region
    $region254: #{paca_forward.1} parent=1 // pred_check
      _
    $region255: #{paca_forward.1} parent=1 // pred_check_branch
      %3495 = sbr.rel (0) target = $region257
    $region256: #{paca_forward.1} parent=1 // pred_region
      %s3497 = ssub.s32 128, 128
      %3498 = vsyncadd [#allocation42], %s3497
      %s3500 = sshll.u32 [#allocation43], 4
      %s3501 = int_to_ptr.vmem [resolvable:$true] %s3500
      %3503 = dma.vmem_to_hbm [thread:$0]  %s3501, 128, %s79, [#allocation42]
    $region257: #{paca_forward.1} parent=1 // pred_fallthru
      _
    // Predicated region
    $region258: #{paca_forward.1} parent=1 // pred_check
      _
    $region259: #{paca_forward.1} parent=1 // pred_check_branch
      %3505 = sbr.rel (0) target = $region261
    $region260: #{paca_forward.1} parent=1 // pred_region
      _
    $region261: #{paca_forward.1} parent=1 // pred_fallthru
      _
    // Predicated region
    $region262: #{paca_forward.1} parent=1 // pred_check
      _
    $region263: #{paca_forward.1} parent=1 // pred_check_branch
      %3507 = sbr.rel (0) target = $region265
    $region264: #{paca_forward.1} parent=1 // pred_region
      %3508 = dma.done [#allocation4], 16
    $region265: #{paca_forward.1} parent=1 // pred_fallthru
      _
    // Predicated region
    $region266: #{paca_forward.1} parent=1 // pred_check
      _
    $region267: #{paca_forward.1} parent=1 // pred_check_branch
      %3510 = sbr.rel (0) target = $region269
    $region268: #{paca_forward.1} parent=1 // pred_region
      %3511 = dma.done [#allocation42], 128
    $region269: #{paca_forward.1} parent=1 // pred_fallthru
      _
    // Predicated region
    $region270: #{paca_forward.1} parent=1 // pred_check
      _
    $region271: #{paca_forward.1} parent=1 // pred_check_branch
      %3513 = sbr.rel (0) target = $region273
    $region272: #{paca_forward.1} parent=1 // pred_region
      %3514 = dma.done [#allocation42], 128
    $region273: #{paca_forward.1} parent=1 // pred_fallthru
      _
    // Predicated region
    $region274: #{paca_forward.1} parent=1 // pred_check
      _
    $region275: #{paca_forward.1} parent=1 // pred_check_branch
      %3516 = sbr.rel (0) target = $region277
    $region276: #{paca_forward.1} parent=1 // pred_region
      _
    $region277: #{paca_forward.1} parent=1 // pred_fallthru
      _
    %3517 = vsyncpa [#allocation3], 1
    %3518 = vsyncpa [#allocation6], 1
    %3519 = vsyncpa [#allocation9], 1
    %3520 = vsyncpa [#allocation12], 1
    %3521 = vsyncpa [#allocation15], 1
    %3522 = vsyncpa [#allocation18], 1
    %3523 = vsyncpa [#allocation21], 1
    %3524 = vsyncpa [#allocation24], 1
    %3525 = vsyncpa [#allocation27], 1
    %3526 = vsyncpa [#allocation30], 1
    %3527 = vsyncpa [#allocation33], 1
    %3528 = vsyncpa [#allocation36], 1
    %3529 = vsyncpa [#allocation39], 1
    %3530 = vsyncpa [#allocation4], 1
    %3531 = vsyncpa [#allocation42], 1

</llo_original>
